<compile_context>
chip_gen: v7x
topology: tpu7x:2x2x1
jax: 0.10.0
libtpu: 0.0.40
codegen_flags: <defaults>
</compile_context>

<pallas_src>
import functools
import math

import jax
import jax.numpy as jnp
from jax import lax
from jax.experimental import pallas as pl
from jax.experimental.pallas import tpu as pltpu


# ---------------------------------------------------------------------------
# config ("args")
# ---------------------------------------------------------------------------
EMB_DIMS = 32            # args.emb_dims
TRAINING_UP_RATIO = 4    # args.training_up_ratio (also local patch size)
NEIGHBOR_K = 4           # args.neighbor_k
OUT_DIM = 3              # args.dim
MLP_FITTING = [64, 32]   # convert_str_2_list("64 32")
GRAPH_K = 4              # k in get_graph_feature (hard-coded default)

# groups (patches) per block.  With Np = 4 points/patch this gives
# 4*512 = 2048 matmul rows per edge-conv grid step.  Worst-case block VMEM
# (conv4, C=256->256, bf16 in/out, double-buffered inputs+outputs+weights)
# is ~4.5 MiB, so the default scoped VMEM (16 MiB v5e / 32 MiB v6e, v7x) is
# never exceeded and no vmem_limit_bytes override is needed.
GROUP_TILE = 512


def _round_up(x, m):
    return -(-x // m) * m


def _cdiv(a, b):
    return -(-a // b)


# ---------------------------------------------------------------------------
# Pallas kernels
# ---------------------------------------------------------------------------
def _edge_conv_kernel(feat_ref, wn_ref, wc_ref, o_ref):
    """DGCNN edge conv with k == Np (neighbour set == whole patch):

        out[m, g] = relu( max_j(h[j, g] @ Wn) + h[m, g] @ Wc )

    feat_ref: (Np, tb, C)  bf16  -- point-major features of tb patches
    wn_ref / wc_ref: (C, Cout) bf16
    o_ref: (Np, tb, Cout) bf16   -- accumulate / ReLU in f32, cast at store

    The neighbour projection is computed once per point and the per-patch max
    is shared across the Np centers (k-fold fewer neighbour FLOPs than the
    gather formulation).  The (Np, tb, C) -> (Np*tb, C) flatten is a free
    leading-dim merge (tb is a multiple of 8) that turns the per-point dots
    into one large MXU matmul.
    """
    npts, tb, c = feat_ref.shape
    cout = wn_ref.shape[1]
    x2d = feat_ref[...].reshape(npts * tb, c)

    if c <= 8:
        # conv1 (Cin=3): K is far too small to feed the MXU -- do the contraction
        # as a few broadcast FMAs on the VPU and keep the MXU slot free.
        xf = x2d.astype(jnp.float32)
        wn = wn_ref[...].astype(jnp.float32)
        wc = wc_ref[...].astype(jnp.float32)
        pn = xf[:, 0:1] * wn[0:1, :]
        pc = xf[:, 0:1] * wc[0:1, :]
        for ci in range(1, c):
            pn = pn + xf[:, ci:ci + 1] * wn[ci:ci + 1, :]
            pc = pc + xf[:, ci:ci + 1] * wc[ci:ci + 1, :]
    else:
        pn = jnp.dot(x2d, wn_ref[...], preferred_element_type=jnp.float32)
        pc = jnp.dot(x2d, wc_ref[...], preferred_element_type=jnp.float32)

    pn = pn.reshape(npts, tb, cout)
    pc = pc.reshape(npts, tb, cout)
    nbr_max = pn[0]
    for j in range(1, npts):
        nbr_max = jnp.maximum(nbr_max, pn[j])
    out = jnp.maximum(pc + nbr_max[None, :, :], 0.0)   # ReLU in f32 (v5e-safe)
    o_ref[...] = out.astype(o_ref.dtype)


def _point_conv_kernel(*refs, n_feat, npts):
    """conv5 + tanh + max over the Np patch points.

    refs = (x1..x4 blocks [(Np, tb, Ci) bf16], W5 row-blocks [(Ci, emb) bf16],
            o_ref (tb, emb) bf16).
    The 512-channel concat of x1..x4 is never materialised: split weight
    row-blocks are summed instead.  Each feature contributes one big
    (Np*tb, Ci) @ (Ci, emb) matmul (free leading-dim merge); tanh is applied
    after the max (monotonic => identical to the reference ordering).
    """
    x_refs = refs[:n_feat]
    w_refs = refs[n_feat:2 * n_feat]
    o_ref = refs[-1]
    tb = x_refs[0].shape[1]
    emb = w_refs[0].shape[1]

    z = jnp.dot(x_refs[0][...].reshape(npts * tb, x_refs[0].shape[2]),
                w_refs[0][...], preferred_element_type=jnp.float32)
    for xr, wr in zip(x_refs[1:], w_refs[1:]):
        z = z + jnp.dot(xr[...].reshape(npts * tb, xr.shape[2]),
                        wr[...], preferred_element_type=jnp.float32)
    z = z.reshape(npts, tb, emb)
    m = z[0]
    for j in range(1, npts):
        m = jnp.maximum(m, z[j])
    o_ref[...] = jnp.tanh(m).astype(o_ref.dtype)       # tanh in f32 (v5e-safe)


def _mlp_head_kernel(*refs):
    """Fused fitting MLP (Conv1d + ReLU per layer) + reconstruct Conv1d.

    refs = (sparse_emb, local_emb, W1_sparse, W1_local, b1, [W_i, b_i]*,
            o_ref).  All matmuls are bf16 x bf16 with f32 accumulation; bias
    add / ReLU stay in f32; h never leaves VMEM; only the final (reconstruct)
    layer skips the ReLU.
    """
    se_ref, le_ref = refs[0], refs[1]
    o_ref = refs[-1]
    p = refs[2:-1]
    h = jnp.dot(se_ref[...], p[0][...], preferred_element_type=jnp.float32)
    h = h + jnp.dot(le_ref[...], p[1][...], preferred_element_type=jnp.float32)
    h = jnp.maximum(h + p[2][...], 0.0)
    rest = p[3:]
    n_layers = len(rest) // 2
    for l in range(n_layers):
        h = jnp.dot(h.astype(jnp.bfloat16), rest[2 * l][...],
                    preferred_element_type=jnp.float32) + rest[2 * l + 1][...]
        if l < n_layers - 1:                           # no ReLU on the out conv
            h = jnp.maximum(h, 0.0)
    o_ref[...] = h


# ---------------------------------------------------------------------------
# pallas_call wrappers
# ---------------------------------------------------------------------------
def edge_conv(h, wn, wc, tb):
    """h: [Np, Bp_pad, C] bf16 -> [Np, Bp_pad, Cout] bf16."""
    npts, bp_pad, c = h.shape
    cout = wn.shape[1]
    return pl.pallas_call(
        _edge_conv_kernel,
        out_shape=jax.ShapeDtypeStruct((npts, bp_pad, cout), jnp.bfloat16),
        grid=(bp_pad // tb,),
        in_specs=[
            pl.BlockSpec((npts, tb, c), lambda i: (0, i, 0)),
            pl.BlockSpec((c, cout), lambda i: (0, 0)),
            pl.BlockSpec((c, cout), lambda i: (0, 0)),
        ],
        out_specs=pl.BlockSpec((npts, tb, cout), lambda i: (0, i, 0)),
        compiler_params=pltpu.CompilerParams(dimension_semantics=("parallel",)),
    )(h, wn.astype(jnp.bfloat16), wc.astype(jnp.bfloat16))


def point_conv_emb(xs, ws, emb, tb):
    """xs: list of [Np, Bp_pad, Ci] bf16, ws: matching [Ci, emb] weight blocks.
    Returns [Bp_pad, emb] bf16 = max_Np tanh(sum_i x_i @ w_i)."""
    npts, bp_pad, _ = xs[0].shape
    n_feat = len(xs)
    in_specs = [pl.BlockSpec((npts, tb, x.shape[-1]), lambda i: (0, i, 0))
                for x in xs]
    in_specs += [pl.BlockSpec(w.shape, lambda i: (0, 0)) for w in ws]
    return pl.pallas_call(
        functools.partial(_point_conv_kernel, n_feat=n_feat, npts=npts),
        out_shape=jax.ShapeDtypeStruct((bp_pad, emb), jnp.bfloat16),
        grid=(bp_pad // tb,),
        in_specs=in_specs,
        out_specs=pl.BlockSpec((tb, emb), lambda i: (i, 0)),
        compiler_params=pltpu.CompilerParams(dimension_semantics=("parallel",)),
    )(*xs, *[w.astype(jnp.bfloat16) for w in ws])


def mlp_head(se, le, mlp_params, out_params, tm):
    """se/le: [M, emb] bf16 (M multiple of tm) -> [M, OUT_DIM] f32."""
    m, e = se.shape
    w1, b1 = mlp_params[0]
    args = [se, le,
            w1[:e].astype(jnp.bfloat16), w1[e:].astype(jnp.bfloat16),
            b1.reshape(1, -1)]
    for w, b in mlp_params[1:]:
        args += [w.astype(jnp.bfloat16), b.reshape(1, -1)]
    wo, bo = out_params
    args += [wo.astype(jnp.bfloat16), bo.reshape(1, -1)]
    in_specs = [pl.BlockSpec((tm, e), lambda i: (i, 0)),
                pl.BlockSpec((tm, e), lambda i: (i, 0))]
    in_specs += [pl.BlockSpec(a.shape, lambda i: (0, 0)) for a in args[2:]]
    return pl.pallas_call(
        _mlp_head_kernel,
        out_shape=jax.ShapeDtypeStruct((m, wo.shape[1]), jnp.float32),
        grid=(m // tm,),
        in_specs=in_specs,
        out_specs=pl.BlockSpec((tm, wo.shape[1]), lambda i: (i, 0)),
        compiler_params=pltpu.CompilerParams(dimension_semantics=("parallel",)),
    )(*args)


# ---------------------------------------------------------------------------
# Plain-JAX glue: FPS, outer knn query, patch construction
# ---------------------------------------------------------------------------
def furthest_point_sample(pts, npoint):
    """pts: [B, N, 3] -> indices [B, npoint] (starts at index 0)."""
    _, n, _ = pts.shape

    def fps_one(p):
        def body(i, state):
            idxs, dists, last = state
            d = jnp.sum((p - p[last]) ** 2, axis=-1)
            dists = jnp.minimum(dists, d)
            nxt = jnp.argmax(dists).astype(jnp.int32)
            return idxs.at[i].set(nxt), dists, nxt

        idxs0 = jnp.zeros((npoint,), jnp.int32)
        dists0 = jnp.full((n,), jnp.inf, jnp.float32)
        idxs, _, _ = lax.fori_loop(1, npoint, body, (idxs0, dists0, jnp.int32(0)))
        return idxs

    return jax.vmap(fps_one)(pts)


def knn_query(query, ref, k):
    """query: [B, M, C], ref: [B, N, C] -> nearest-k indices [B, M, k]."""
    d = (jnp.sum(query * query, -1)[:, :, None]
         - 2.0 * jnp.einsum("bmc,bnc->bmn", query, ref)
         + jnp.sum(ref * ref, -1)[:, None, :])
    return lax.top_k(-d, k)[1]


def batched_gather(points, idx):
    """points: [B, N, C], idx: [B, ...] -> [B, ..., C]."""
    return jax.vmap(lambda p, i: p[i])(points, idx)


def _build_patches_nmajor(src_pts, idx, centers, bp_pad):
    """src_pts: [B, Nsrc, 3], idx: [B, npoint, Np], centers: [B, npoint, 3]
    -> centered patches in point-major layout [Np, Bp_pad, 3]."""
    b, npoint, npts = idx.shape
    nbr = batched_gather(src_pts, idx)                 # [B, npoint, Np, 3]
    patch = nbr - centers[:, :, None, :]
    patch = jnp.transpose(patch, (2, 0, 1, 3)).reshape(npts, b * npoint, 3)
    if bp_pad > b * npoint:                            # padded groups are zero
        patch = jnp.pad(patch, ((0, 0), (0, bp_pad - b * npoint), (0, 0)))
    return patch


# ---------------------------------------------------------------------------
# DGCNN_multi_knn_c5 (if_bn=False, if_relu_atlast=False), fused with the
# outer max over patch points (the Encoder max-pools the DGCNN output).
# ---------------------------------------------------------------------------
def dgcnn_embed(patch, weights, tb):
    """patch: [Np, Bp_pad, 3] point-major -> [Bp_pad, EMB_DIMS] bf16."""
    npts = patch.shape[0]
    if npts > GRAPH_K:
        # TODO(synk): patches larger than the graph-feature k would need the
        # per-layer kNN + gather path; not reachable with this configuration
        # (Np == GRAPH_K == 4, so the neighbour set is the whole patch).
        raise NotImplementedError("dgcnn_embed assumes GRAPH_K >= patch size")
    h = patch.astype(jnp.bfloat16)
    feats = []
    for w in weights[:4]:                              # conv1..conv4 (no bias)
        c = h.shape[-1]
        h = edge_conv(h, w[:c], w[c:], tb)             # [Np, Bp_pad, Cout] bf16
        feats.append(h)
    w5 = weights[4]                                    # (512, emb)
    offs = [0]
    for f in feats:
        offs.append(offs[-1] + f.shape[-1])
    w_blocks = [w5[offs[i]:offs[i + 1]] for i in range(len(feats))]
    return point_conv_emb(feats, w_blocks, w5.shape[1], tb)


# ---------------------------------------------------------------------------
# parameter construction (deterministic xavier-normal, as in __init__)
# ---------------------------------------------------------------------------
def _xavier(key, cin, cout):
    std = math.sqrt(2.0 / (cin + cout))
    return jax.random.normal(key, (cin, cout), jnp.float32) * std


def make_dgcnn_params(key, emb_dims):
    shapes = [(6, 64), (128, 64), (128, 128), (256, 256), (512, emb_dims)]
    keys = jax.random.split(key, len(shapes))
    return [_xavier(k, ci, co) for k, (ci, co) in zip(keys, shapes)]


def make_params(key):
    k1, k2, k3 = jax.random.split(key, 3)
    params = {
        "dgcnn_sparse": make_dgcnn_params(k1, EMB_DIMS),
        "dgcnn_local": make_dgcnn_params(k2, EMB_DIMS),
    }
    mlp = []
    last = 2 * EMB_DIMS
    kk = jax.random.split(k3, len(MLP_FITTING) + 1)
    for i, outp in enumerate(MLP_FITTING):
        w = _xavier(kk[i], last, outp)
        bound = 1.0 / math.sqrt(last)
        b = jax.random.uniform(jax.random.fold_in(kk[i], 1), (outp,),
                               jnp.float32, -bound, bound)
        mlp.append((w, b))
        last = outp
    params["mlp"] = mlp
    w = _xavier(kk[-1], last, OUT_DIM)
    bound = 1.0 / math.sqrt(last)
    b = jax.random.uniform(jax.random.fold_in(kk[-1], 1), (OUT_DIM,),
                           jnp.float32, -bound, bound)
    params["out"] = (w, b)
    return params


# ---------------------------------------------------------------------------
# Encoder.forward
# ---------------------------------------------------------------------------
@jax.jit
def encoder_forward(xyz, params):
    """xyz: [B, 3, N] -> (points_sparse [B, 3, npoint], feat [B, dim, npoint])."""
    B, _, N = xyz.shape
    pts = jnp.transpose(xyz, (0, 2, 1))                # [B, N, 3]
    down = TRAINING_UP_RATIO
    npoint = int(round(N / down))

    # -- furthest point sampling -> sparse anchor points
    fps_idx = furthest_point_sample(pts, npoint)       # [B, npoint]
    points_sparse = batched_gather(pts, fps_idx)       # [B, npoint, 3]

    # -- group tiling: balance the tile across the grid so padding waste is
    #    tiny and the grid keeps >= 2 steps whenever bp > GROUP_TILE (v7x
    #    megacore); padded groups are zero and sliced off at the end.
    bp = B * npoint
    grid_n = _cdiv(bp, GROUP_TILE)
    tb = _round_up(_cdiv(bp, grid_n), 8)
    bp_pad = grid_n * tb

    # -- local patches from the dense cloud (drop the self match at index 0)
    idx = knn_query(points_sparse, pts, down + 1)[:, :, 1:]
    local_patch = _build_patches_nmajor(pts, idx, points_sparse, bp_pad)
    local_emb = dgcnn_embed(local_patch, params["dgcnn_local"], tb)

    # -- anchor patches among the sparse points themselves
    idx2 = knn_query(points_sparse, points_sparse,
                     NEIGHBOR_K + 1)[:, :, 1:NEIGHBOR_K + 1]
    anchor_patch = _build_patches_nmajor(points_sparse, idx2,
                                         points_sparse, bp_pad)
    sparse_emb = dgcnn_embed(anchor_patch, params["dgcnn_sparse"], tb)

    # -- fused fitting-MLP + reconstruct conv (single pallas_call, bf16 MXU)
    feat = mlp_head(sparse_emb, local_emb, params["mlp"], params["out"], tb)
    feat = feat[:bp].reshape(B, npoint, OUT_DIM).transpose(0, 2, 1)

    return points_sparse.transpose(0, 2, 1), feat      # [B,3,np], [B,dim,np]


# ---------------------------------------------------------------------------
if __name__ == "__main__":
    B, N = 2, 32
    xyz = jax.random.normal(jax.random.PRNGKey(0), (B, 3, N), jnp.float32)
    params = make_params(jax.random.PRNGKey(1))

    points_sparse, feat = encoder_forward(xyz, params)
    jax.block_until_ready((points_sparse, feat))

    npoint = int(round(N / TRAINING_UP_RATIO))
    assert points_sparse.shape == (B, 3, npoint), points_sparse.shape
    assert feat.shape == (B, OUT_DIM, npoint), feat.shape
    assert jnp.all(jnp.isfinite(points_sparse)) and jnp.all(jnp.isfinite(feat))
    print("KERNEL_OK")
</pallas_src>

<mosaic_0001>
module attributes {stable_mosaic.version = 11 : i64} {
  func.func @_edge_conv_kernel(%arg0: i32, %arg1: memref<4x16x3xbf16, #tpu.memory_space<vmem>>, %arg2: memref<3x64xbf16, #tpu.memory_space<vmem>>, %arg3: memref<3x64xbf16, #tpu.memory_space<vmem>>, %arg4: memref<4x16x64xbf16, #tpu.memory_space<vmem>>) attributes {dimension_semantics = [#tpu.dimension_semantics<parallel>], iteration_bounds = array<i64: 1>, scalar_prefetch = 0 : i64, scratch_operands = 0 : i64, tpu.core_type = #tpu.core_type<tc>, window_params = [{transform_indices = @transform_0, window_bounds = array<i64: 4, 16, 3>}, {pipeline_mode = #tpu.pipeline_mode<synchronous>, transform_indices = @transform_1, window_bounds = array<i64: 3, 64>}, {pipeline_mode = #tpu.pipeline_mode<synchronous>, transform_indices = @transform_2, window_bounds = array<i64: 3, 64>}, {transform_indices = @transform_3, window_bounds = array<i64: 4, 16, 64>}]} {
    %c0 = arith.constant 0 : index
    %c0_0 = arith.constant 0 : index
    %c0_1 = arith.constant 0 : index
    %0 = vector.load %arg1[%c0, %c0_0, %c0_1] : memref<4x16x3xbf16, #tpu.memory_space<vmem>>, vector<4x16x3xbf16>
    %1 = vector.shape_cast %0 : vector<4x16x3xbf16> to vector<64x3xbf16>
    %2 = arith.extf %1 : vector<64x3xbf16> to vector<64x3xf32>
    %c0_2 = arith.constant 0 : index
    %c0_3 = arith.constant 0 : index
    %3 = vector.load %arg2[%c0_2, %c0_3] : memref<3x64xbf16, #tpu.memory_space<vmem>>, vector<3x64xbf16>
    %4 = arith.extf %3 : vector<3x64xbf16> to vector<3x64xf32>
    %c0_4 = arith.constant 0 : index
    %c0_5 = arith.constant 0 : index
    %5 = vector.load %arg3[%c0_4, %c0_5] : memref<3x64xbf16, #tpu.memory_space<vmem>>, vector<3x64xbf16>
    %6 = arith.extf %5 : vector<3x64xbf16> to vector<3x64xf32>
    %7 = vector.extract_strided_slice %2 {offsets = [0, 0], sizes = [64, 1], strides = [1, 1]} : vector<64x3xf32> to vector<64x1xf32>
    %8 = vector.extract_strided_slice %4 {offsets = [0, 0], sizes = [1, 64], strides = [1, 1]} : vector<3x64xf32> to vector<1x64xf32>
    %9 = vector.broadcast %7 : vector<64x1xf32> to vector<64x64xf32>
    %10 = vector.broadcast %8 : vector<1x64xf32> to vector<64x64xf32>
    %11 = arith.mulf %9, %10 : vector<64x64xf32>
    %12 = vector.extract_strided_slice %2 {offsets = [0, 0], sizes = [64, 1], strides = [1, 1]} : vector<64x3xf32> to vector<64x1xf32>
    %13 = vector.extract_strided_slice %6 {offsets = [0, 0], sizes = [1, 64], strides = [1, 1]} : vector<3x64xf32> to vector<1x64xf32>
    %14 = vector.broadcast %12 : vector<64x1xf32> to vector<64x64xf32>
    %15 = vector.broadcast %13 : vector<1x64xf32> to vector<64x64xf32>
    %16 = arith.mulf %14, %15 : vector<64x64xf32>
    %17 = vector.extract_strided_slice %2 {offsets = [0, 1], sizes = [64, 1], strides = [1, 1]} : vector<64x3xf32> to vector<64x1xf32>
    %18 = vector.extract_strided_slice %4 {offsets = [1, 0], sizes = [1, 64], strides = [1, 1]} : vector<3x64xf32> to vector<1x64xf32>
    %19 = vector.broadcast %17 : vector<64x1xf32> to vector<64x64xf32>
    %20 = vector.broadcast %18 : vector<1x64xf32> to vector<64x64xf32>
    %21 = arith.mulf %19, %20 : vector<64x64xf32>
    %22 = arith.addf %11, %21 : vector<64x64xf32>
    %23 = vector.extract_strided_slice %2 {offsets = [0, 1], sizes = [64, 1], strides = [1, 1]} : vector<64x3xf32> to vector<64x1xf32>
    %24 = vector.extract_strided_slice %6 {offsets = [1, 0], sizes = [1, 64], strides = [1, 1]} : vector<3x64xf32> to vector<1x64xf32>
    %25 = vector.broadcast %23 : vector<64x1xf32> to vector<64x64xf32>
    %26 = vector.broadcast %24 : vector<1x64xf32> to vector<64x64xf32>
    %27 = arith.mulf %25, %26 : vector<64x64xf32>
    %28 = arith.addf %16, %27 : vector<64x64xf32>
    %29 = vector.extract_strided_slice %2 {offsets = [0, 2], sizes = [64, 1], strides = [1, 1]} : vector<64x3xf32> to vector<64x1xf32>
    %30 = vector.extract_strided_slice %4 {offsets = [2, 0], sizes = [1, 64], strides = [1, 1]} : vector<3x64xf32> to vector<1x64xf32>
    %31 = vector.broadcast %29 : vector<64x1xf32> to vector<64x64xf32>
    %32 = vector.broadcast %30 : vector<1x64xf32> to vector<64x64xf32>
    %33 = arith.mulf %31, %32 : vector<64x64xf32>
    %34 = arith.addf %22, %33 : vector<64x64xf32>
    %35 = vector.extract_strided_slice %2 {offsets = [0, 2], sizes = [64, 1], strides = [1, 1]} : vector<64x3xf32> to vector<64x1xf32>
    %36 = vector.extract_strided_slice %6 {offsets = [2, 0], sizes = [1, 64], strides = [1, 1]} : vector<3x64xf32> to vector<1x64xf32>
    %37 = vector.broadcast %35 : vector<64x1xf32> to vector<64x64xf32>
    %38 = vector.broadcast %36 : vector<1x64xf32> to vector<64x64xf32>
    %39 = arith.mulf %37, %38 : vector<64x64xf32>
    %40 = arith.addf %28, %39 : vector<64x64xf32>
    %41 = vector.shape_cast %34 : vector<64x64xf32> to vector<4x16x64xf32>
    %42 = vector.shape_cast %40 : vector<64x64xf32> to vector<4x16x64xf32>
    %43 = vector.extract_strided_slice %41 {offsets = [0, 0, 0], sizes = [1, 16, 64], strides = [1, 1, 1]} : vector<4x16x64xf32> to vector<1x16x64xf32>
    %44 = vector.shape_cast %43 : vector<1x16x64xf32> to vector<16x64xf32>
    %45 = vector.extract_strided_slice %41 {offsets = [1, 0, 0], sizes = [1, 16, 64], strides = [1, 1, 1]} : vector<4x16x64xf32> to vector<1x16x64xf32>
    %46 = vector.shape_cast %45 : vector<1x16x64xf32> to vector<16x64xf32>
    %47 = arith.maximumf %44, %46 : vector<16x64xf32>
    %48 = vector.extract_strided_slice %41 {offsets = [2, 0, 0], sizes = [1, 16, 64], strides = [1, 1, 1]} : vector<4x16x64xf32> to vector<1x16x64xf32>
    %49 = vector.shape_cast %48 : vector<1x16x64xf32> to vector<16x64xf32>
    %50 = arith.maximumf %47, %49 : vector<16x64xf32>
    %51 = vector.extract_strided_slice %41 {offsets = [3, 0, 0], sizes = [1, 16, 64], strides = [1, 1, 1]} : vector<4x16x64xf32> to vector<1x16x64xf32>
    %52 = vector.shape_cast %51 : vector<1x16x64xf32> to vector<16x64xf32>
    %53 = arith.maximumf %50, %52 : vector<16x64xf32>
    %54 = vector.shape_cast %53 : vector<16x64xf32> to vector<1x16x64xf32>
    %55 = vector.broadcast %54 : vector<1x16x64xf32> to vector<4x16x64xf32>
    %56 = arith.addf %42, %55 : vector<4x16x64xf32>
    %cst = arith.constant 0.000000e+00 : f32
    %57 = vector.broadcast %cst : f32 to vector<4x16x64xf32>
    %58 = arith.maximumf %56, %57 : vector<4x16x64xf32>
    %59 = arith.truncf %58 : vector<4x16x64xf32> to vector<4x16x64xbf16>
    %c0_6 = arith.constant 0 : index
    %c0_7 = arith.constant 0 : index
    %c0_8 = arith.constant 0 : index
    %60 = vector.load %arg4[%c0_6, %c0_7, %c0_8] : memref<4x16x64xbf16, #tpu.memory_space<vmem>>, vector<4x16x64xbf16>
    tpu.vector_store %arg4[%c0_6, %c0_7, %c0_8], %59 {strides = array<i32>} : memref<4x16x64xbf16, #tpu.memory_space<vmem>>, vector<4x16x64xbf16>,
    return
  }
  func.func @transform_0(%arg0: i32) -> (i32, i32, i32) {
    %c0_i32 = arith.constant 0 : i32
    %c0_i32_0 = arith.constant 0 : i32
    %c0_i32_1 = arith.constant 0 : i32
    return %c0_i32, %arg0, %c0_i32_0 : i32, i32, i32
  }
  func.func @transform_1(%arg0: i32) -> (i32, i32) {
    %c0_i32 = arith.constant 0 : i32
    %c0_i32_0 = arith.constant 0 : i32
    %c0_i32_1 = arith.constant 0 : i32
    return %c0_i32, %c0_i32_0 : i32, i32
  }
  func.func @transform_2(%arg0: i32) -> (i32, i32) {
    %c0_i32 = arith.constant 0 : i32
    %c0_i32_0 = arith.constant 0 : i32
    %c0_i32_1 = arith.constant 0 : i32
    return %c0_i32, %c0_i32_0 : i32, i32
  }
  func.func @transform_3(%arg0: i32) -> (i32, i32, i32) {
    %c0_i32 = arith.constant 0 : i32
    %c0_i32_0 = arith.constant 0 : i32
    %c0_i32_1 = arith.constant 0 : i32
    return %c0_i32, %arg0, %c0_i32_0 : i32, i32, i32
  }
}

module attributes {stable_mosaic.version = 11 : i64} {
  func.func @_edge_conv_kernel(%arg0: i32, %arg1: memref<4x16x64xbf16, #tpu.memory_space<vmem>>, %arg2: memref<64x64xbf16, #tpu.memory_space<vmem>>, %arg3: memref<64x64xbf16, #tpu.memory_space<vmem>>, %arg4: memref<4x16x64xbf16, #tpu.memory_space<vmem>>) attributes {dimension_semantics = [#tpu.dimension_semantics<parallel>], iteration_bounds = array<i64: 1>, scalar_prefetch = 0 : i64, scratch_operands = 0 : i64, tpu.core_type = #tpu.core_type<tc>, window_params = [{transform_indices = @transform_0, window_bounds = array<i64: 4, 16, 64>}, {pipeline_mode = #tpu.pipeline_mode<synchronous>, transform_indices = @transform_1, window_bounds = array<i64: 64, 64>}, {pipeline_mode = #tpu.pipeline_mode<synchronous>, transform_indices = @transform_2, window_bounds = array<i64: 64, 64>}, {transform_indices = @transform_3, window_bounds = array<i64: 4, 16, 64>}]} {
    %c0 = arith.constant 0 : index
    %c0_0 = arith.constant 0 : index
    %c0_1 = arith.constant 0 : index
    %0 = vector.load %arg1[%c0, %c0_0, %c0_1] : memref<4x16x64xbf16, #tpu.memory_space<vmem>>, vector<4x16x64xbf16>
    %1 = vector.shape_cast %0 : vector<4x16x64xbf16> to vector<64x64xbf16>
    %c0_2 = arith.constant 0 : index
    %c0_3 = arith.constant 0 : index
    %2 = vector.load %arg2[%c0_2, %c0_3] : memref<64x64xbf16, #tpu.memory_space<vmem>>, vector<64x64xbf16>
    %cst = arith.constant dense<0.000000e+00> : vector<64x64xf32>
    %3 = tpu.matmul %1, %2, %cst {dimension_numbers = #tpu.dot_dimension_numbers<[1], [0], [0], [1], [0, 0, 1, 1], [], []>} : vector<64x64xbf16>, vector<64x64xbf16>, vector<64x64xf32> -> vector<64x64xf32>
    %c0_4 = arith.constant 0 : index
    %c0_5 = arith.constant 0 : index
    %4 = vector.load %arg3[%c0_4, %c0_5] : memref<64x64xbf16, #tpu.memory_space<vmem>>, vector<64x64xbf16>
    %cst_6 = arith.constant dense<0.000000e+00> : vector<64x64xf32>
    %5 = tpu.matmul %1, %4, %cst_6 {dimension_numbers = #tpu.dot_dimension_numbers<[1], [0], [0], [1], [0, 0, 1, 1], [], []>} : vector<64x64xbf16>, vector<64x64xbf16>, vector<64x64xf32> -> vector<64x64xf32>
    %6 = vector.shape_cast %3 : vector<64x64xf32> to vector<4x16x64xf32>
    %7 = vector.shape_cast %5 : vector<64x64xf32> to vector<4x16x64xf32>
    %8 = vector.extract_strided_slice %6 {offsets = [0, 0, 0], sizes = [1, 16, 64], strides = [1, 1, 1]} : vector<4x16x64xf32> to vector<1x16x64xf32>
    %9 = vector.shape_cast %8 : vector<1x16x64xf32> to vector<16x64xf32>
    %10 = vector.extract_strided_slice %6 {offsets = [1, 0, 0], sizes = [1, 16, 64], strides = [1, 1, 1]} : vector<4x16x64xf32> to vector<1x16x64xf32>
    %11 = vector.shape_cast %10 : vector<1x16x64xf32> to vector<16x64xf32>
    %12 = arith.maximumf %9, %11 : vector<16x64xf32>
    %13 = vector.extract_strided_slice %6 {offsets = [2, 0, 0], sizes = [1, 16, 64], strides = [1, 1, 1]} : vector<4x16x64xf32> to vector<1x16x64xf32>
    %14 = vector.shape_cast %13 : vector<1x16x64xf32> to vector<16x64xf32>
    %15 = arith.maximumf %12, %14 : vector<16x64xf32>
    %16 = vector.extract_strided_slice %6 {offsets = [3, 0, 0], sizes = [1, 16, 64], strides = [1, 1, 1]} : vector<4x16x64xf32> to vector<1x16x64xf32>
    %17 = vector.shape_cast %16 : vector<1x16x64xf32> to vector<16x64xf32>
    %18 = arith.maximumf %15, %17 : vector<16x64xf32>
    %19 = vector.shape_cast %18 : vector<16x64xf32> to vector<1x16x64xf32>
    %20 = vector.broadcast %19 : vector<1x16x64xf32> to vector<4x16x64xf32>
    %21 = arith.addf %7, %20 : vector<4x16x64xf32>
    %cst_7 = arith.constant 0.000000e+00 : f32
    %22 = vector.broadcast %cst_7 : f32 to vector<4x16x64xf32>
    %23 = arith.maximumf %21, %22 : vector<4x16x64xf32>
    %24 = arith.truncf %23 : vector<4x16x64xf32> to vector<4x16x64xbf16>
    %c0_8 = arith.constant 0 : index
    %c0_9 = arith.constant 0 : index
    %c0_10 = arith.constant 0 : index
    %25 = vector.load %arg4[%c0_8, %c0_9, %c0_10] : memref<4x16x64xbf16, #tpu.memory_space<vmem>>, vector<4x16x64xbf16>
    tpu.vector_store %arg4[%c0_8, %c0_9, %c0_10], %24 {strides = array<i32>} : memref<4x16x64xbf16, #tpu.memory_space<vmem>>, vector<4x16x64xbf16>,
    return
  }
  func.func @transform_0(%arg0: i32) -> (i32, i32, i32) {
    %c0_i32 = arith.constant 0 : i32
    %c0_i32_0 = arith.constant 0 : i32
    %c0_i32_1 = arith.constant 0 : i32
    return %c0_i32, %arg0, %c0_i32_0 : i32, i32, i32
  }
  func.func @transform_1(%arg0: i32) -> (i32, i32) {
    %c0_i32 = arith.constant 0 : i32
    %c0_i32_0 = arith.constant 0 : i32
    %c0_i32_1 = arith.constant 0 : i32
    return %c0_i32, %c0_i32_0 : i32, i32
  }
  func.func @transform_2(%arg0: i32) -> (i32, i32) {
    %c0_i32 = arith.constant 0 : i32
    %c0_i32_0 = arith.constant 0 : i32
    %c0_i32_1 = arith.constant 0 : i32
    return %c0_i32, %c0_i32_0 : i32, i32
  }
  func.func @transform_3(%arg0: i32) -> (i32, i32, i32) {
    %c0_i32 = arith.constant 0 : i32
    %c0_i32_0 = arith.constant 0 : i32
    %c0_i32_1 = arith.constant 0 : i32
    return %c0_i32, %arg0, %c0_i32_0 : i32, i32, i32
  }
}

module attributes {stable_mosaic.version = 11 : i64} {
  func.func @_edge_conv_kernel(%arg0: i32, %arg1: memref<4x16x64xbf16, #tpu.memory_space<vmem>>, %arg2: memref<64x128xbf16, #tpu.memory_space<vmem>>, %arg3: memref<64x128xbf16, #tpu.memory_space<vmem>>, %arg4: memref<4x16x128xbf16, #tpu.memory_space<vmem>>) attributes {dimension_semantics = [#tpu.dimension_semantics<parallel>], iteration_bounds = array<i64: 1>, scalar_prefetch = 0 : i64, scratch_operands = 0 : i64, tpu.core_type = #tpu.core_type<tc>, window_params = [{transform_indices = @transform_0, window_bounds = array<i64: 4, 16, 64>}, {pipeline_mode = #tpu.pipeline_mode<synchronous>, transform_indices = @transform_1, window_bounds = array<i64: 64, 128>}, {pipeline_mode = #tpu.pipeline_mode<synchronous>, transform_indices = @transform_2, window_bounds = array<i64: 64, 128>}, {transform_indices = @transform_3, window_bounds = array<i64: 4, 16, 128>}]} {
    %c0 = arith.constant 0 : index
    %c0_0 = arith.constant 0 : index
    %c0_1 = arith.constant 0 : index
    %0 = vector.load %arg1[%c0, %c0_0, %c0_1] : memref<4x16x64xbf16, #tpu.memory_space<vmem>>, vector<4x16x64xbf16>
    %1 = vector.shape_cast %0 : vector<4x16x64xbf16> to vector<64x64xbf16>
    %c0_2 = arith.constant 0 : index
    %c0_3 = arith.constant 0 : index
    %2 = vector.load %arg2[%c0_2, %c0_3] : memref<64x128xbf16, #tpu.memory_space<vmem>>, vector<64x128xbf16>
    %cst = arith.constant dense<0.000000e+00> : vector<64x128xf32>
    %3 = tpu.matmul %1, %2, %cst {dimension_numbers = #tpu.dot_dimension_numbers<[1], [0], [0], [1], [0, 0, 1, 1], [], []>} : vector<64x64xbf16>, vector<64x128xbf16>, vector<64x128xf32> -> vector<64x128xf32>
    %c0_4 = arith.constant 0 : index
    %c0_5 = arith.constant 0 : index
    %4 = vector.load %arg3[%c0_4, %c0_5] : memref<64x128xbf16, #tpu.memory_space<vmem>>, vector<64x128xbf16>
    %cst_6 = arith.constant dense<0.000000e+00> : vector<64x128xf32>
    %5 = tpu.matmul %1, %4, %cst_6 {dimension_numbers = #tpu.dot_dimension_numbers<[1], [0], [0], [1], [0, 0, 1, 1], [], []>} : vector<64x64xbf16>, vector<64x128xbf16>, vector<64x128xf32> -> vector<64x128xf32>
    %6 = vector.shape_cast %3 : vector<64x128xf32> to vector<4x16x128xf32>
    %7 = vector.shape_cast %5 : vector<64x128xf32> to vector<4x16x128xf32>
    %8 = vector.extract_strided_slice %6 {offsets = [0, 0, 0], sizes = [1, 16, 128], strides = [1, 1, 1]} : vector<4x16x128xf32> to vector<1x16x128xf32>
    %9 = vector.shape_cast %8 : vector<1x16x128xf32> to vector<16x128xf32>
    %10 = vector.extract_strided_slice %6 {offsets = [1, 0, 0], sizes = [1, 16, 128], strides = [1, 1, 1]} : vector<4x16x128xf32> to vector<1x16x128xf32>
    %11 = vector.shape_cast %10 : vector<1x16x128xf32> to vector<16x128xf32>
    %12 = arith.maximumf %9, %11 : vector<16x128xf32>
    %13 = vector.extract_strided_slice %6 {offsets = [2, 0, 0], sizes = [1, 16, 128], strides = [1, 1, 1]} : vector<4x16x128xf32> to vector<1x16x128xf32>
    %14 = vector.shape_cast %13 : vector<1x16x128xf32> to vector<16x128xf32>
    %15 = arith.maximumf %12, %14 : vector<16x128xf32>
    %16 = vector.extract_strided_slice %6 {offsets = [3, 0, 0], sizes = [1, 16, 128], strides = [1, 1, 1]} : vector<4x16x128xf32> to vector<1x16x128xf32>
    %17 = vector.shape_cast %16 : vector<1x16x128xf32> to vector<16x128xf32>
    %18 = arith.maximumf %15, %17 : vector<16x128xf32>
    %19 = vector.shape_cast %18 : vector<16x128xf32> to vector<1x16x128xf32>
    %20 = vector.broadcast %19 : vector<1x16x128xf32> to vector<4x16x128xf32>
    %21 = arith.addf %7, %20 : vector<4x16x128xf32>
    %cst_7 = arith.constant 0.000000e+00 : f32
    %22 = vector.broadcast %cst_7 : f32 to vector<4x16x128xf32>
    %23 = arith.maximumf %21, %22 : vector<4x16x128xf32>
    %24 = arith.truncf %23 : vector<4x16x128xf32> to vector<4x16x128xbf16>
    %c0_8 = arith.constant 0 : index
    %c0_9 = arith.constant 0 : index
    %c0_10 = arith.constant 0 : index
    %25 = vector.load %arg4[%c0_8, %c0_9, %c0_10] : memref<4x16x128xbf16, #tpu.memory_space<vmem>>, vector<4x16x128xbf16>
    tpu.vector_store %arg4[%c0_8, %c0_9, %c0_10], %24 {strides = array<i32>} : memref<4x16x128xbf16, #tpu.memory_space<vmem>>, vector<4x16x128xbf16>,
    return
  }
  func.func @transform_0(%arg0: i32) -> (i32, i32, i32) {
    %c0_i32 = arith.constant 0 : i32
    %c0_i32_0 = arith.constant 0 : i32
    %c0_i32_1 = arith.constant 0 : i32
    return %c0_i32, %arg0, %c0_i32_0 : i32, i32, i32
  }
  func.func @transform_1(%arg0: i32) -> (i32, i32) {
    %c0_i32 = arith.constant 0 : i32
    %c0_i32_0 = arith.constant 0 : i32
    %c0_i32_1 = arith.constant 0 : i32
    return %c0_i32, %c0_i32_0 : i32, i32
  }
  func.func @transform_2(%arg0: i32) -> (i32, i32) {
    %c0_i32 = arith.constant 0 : i32
    %c0_i32_0 = arith.constant 0 : i32
    %c0_i32_1 = arith.constant 0 : i32
    return %c0_i32, %c0_i32_0 : i32, i32
  }
  func.func @transform_3(%arg0: i32) -> (i32, i32, i32) {
    %c0_i32 = arith.constant 0 : i32
    %c0_i32_0 = arith.constant 0 : i32
    %c0_i32_1 = arith.constant 0 : i32
    return %c0_i32, %arg0, %c0_i32_0 : i32, i32, i32
  }
}

module attributes {stable_mosaic.version = 11 : i64} {
  func.func @_edge_conv_kernel(%arg0: i32, %arg1: memref<4x16x128xbf16, #tpu.memory_space<vmem>>, %arg2: memref<128x256xbf16, #tpu.memory_space<vmem>>, %arg3: memref<128x256xbf16, #tpu.memory_space<vmem>>, %arg4: memref<4x16x256xbf16, #tpu.memory_space<vmem>>) attributes {dimension_semantics = [#tpu.dimension_semantics<parallel>], iteration_bounds = array<i64: 1>, scalar_prefetch = 0 : i64, scratch_operands = 0 : i64, tpu.core_type = #tpu.core_type<tc>, window_params = [{transform_indices = @transform_0, window_bounds = array<i64: 4, 16, 128>}, {pipeline_mode = #tpu.pipeline_mode<synchronous>, transform_indices = @transform_1, window_bounds = array<i64: 128, 256>}, {pipeline_mode = #tpu.pipeline_mode<synchronous>, transform_indices = @transform_2, window_bounds = array<i64: 128, 256>}, {transform_indices = @transform_3, window_bounds = array<i64: 4, 16, 256>}]} {
    %c0 = arith.constant 0 : index
    %c0_0 = arith.constant 0 : index
    %c0_1 = arith.constant 0 : index
    %0 = vector.load %arg1[%c0, %c0_0, %c0_1] : memref<4x16x128xbf16, #tpu.memory_space<vmem>>, vector<4x16x128xbf16>
    %1 = vector.shape_cast %0 : vector<4x16x128xbf16> to vector<64x128xbf16>
    %c0_2 = arith.constant 0 : index
    %c0_3 = arith.constant 0 : index
    %2 = vector.load %arg2[%c0_2, %c0_3] : memref<128x256xbf16, #tpu.memory_space<vmem>>, vector<128x256xbf16>
    %cst = arith.constant dense<0.000000e+00> : vector<64x256xf32>
    %3 = tpu.matmul %1, %2, %cst {dimension_numbers = #tpu.dot_dimension_numbers<[1], [0], [0], [1], [0, 0, 1, 1], [], []>} : vector<64x128xbf16>, vector<128x256xbf16>, vector<64x256xf32> -> vector<64x256xf32>
    %c0_4 = arith.constant 0 : index
    %c0_5 = arith.constant 0 : index
    %4 = vector.load %arg3[%c0_4, %c0_5] : memref<128x256xbf16, #tpu.memory_space<vmem>>, vector<128x256xbf16>
    %cst_6 = arith.constant dense<0.000000e+00> : vector<64x256xf32>
    %5 = tpu.matmul %1, %4, %cst_6 {dimension_numbers = #tpu.dot_dimension_numbers<[1], [0], [0], [1], [0, 0, 1, 1], [], []>} : vector<64x128xbf16>, vector<128x256xbf16>, vector<64x256xf32> -> vector<64x256xf32>
    %6 = vector.shape_cast %3 : vector<64x256xf32> to vector<4x16x256xf32>
    %7 = vector.shape_cast %5 : vector<64x256xf32> to vector<4x16x256xf32>
    %8 = vector.extract_strided_slice %6 {offsets = [0, 0, 0], sizes = [1, 16, 256], strides = [1, 1, 1]} : vector<4x16x256xf32> to vector<1x16x256xf32>
    %9 = vector.shape_cast %8 : vector<1x16x256xf32> to vector<16x256xf32>
    %10 = vector.extract_strided_slice %6 {offsets = [1, 0, 0], sizes = [1, 16, 256], strides = [1, 1, 1]} : vector<4x16x256xf32> to vector<1x16x256xf32>
    %11 = vector.shape_cast %10 : vector<1x16x256xf32> to vector<16x256xf32>
    %12 = arith.maximumf %9, %11 : vector<16x256xf32>
    %13 = vector.extract_strided_slice %6 {offsets = [2, 0, 0], sizes = [1, 16, 256], strides = [1, 1, 1]} : vector<4x16x256xf32> to vector<1x16x256xf32>
    %14 = vector.shape_cast %13 : vector<1x16x256xf32> to vector<16x256xf32>
    %15 = arith.maximumf %12, %14 : vector<16x256xf32>
    %16 = vector.extract_strided_slice %6 {offsets = [3, 0, 0], sizes = [1, 16, 256], strides = [1, 1, 1]} : vector<4x16x256xf32> to vector<1x16x256xf32>
    %17 = vector.shape_cast %16 : vector<1x16x256xf32> to vector<16x256xf32>
    %18 = arith.maximumf %15, %17 : vector<16x256xf32>
    %19 = vector.shape_cast %18 : vector<16x256xf32> to vector<1x16x256xf32>
    %20 = vector.broadcast %19 : vector<1x16x256xf32> to vector<4x16x256xf32>
    %21 = arith.addf %7, %20 : vector<4x16x256xf32>
    %cst_7 = arith.constant 0.000000e+00 : f32
    %22 = vector.broadcast %cst_7 : f32 to vector<4x16x256xf32>
    %23 = arith.maximumf %21, %22 : vector<4x16x256xf32>
    %24 = arith.truncf %23 : vector<4x16x256xf32> to vector<4x16x256xbf16>
    %c0_8 = arith.constant 0 : index
    %c0_9 = arith.constant 0 : index
    %c0_10 = arith.constant 0 : index
    %25 = vector.load %arg4[%c0_8, %c0_9, %c0_10] : memref<4x16x256xbf16, #tpu.memory_space<vmem>>, vector<4x16x256xbf16>
    tpu.vector_store %arg4[%c0_8, %c0_9, %c0_10], %24 {strides = array<i32>} : memref<4x16x256xbf16, #tpu.memory_space<vmem>>, vector<4x16x256xbf16>,
    return
  }
  func.func @transform_0(%arg0: i32) -> (i32, i32, i32) {
    %c0_i32 = arith.constant 0 : i32
    %c0_i32_0 = arith.constant 0 : i32
    %c0_i32_1 = arith.constant 0 : i32
    return %c0_i32, %arg0, %c0_i32_0 : i32, i32, i32
  }
  func.func @transform_1(%arg0: i32) -> (i32, i32) {
    %c0_i32 = arith.constant 0 : i32
    %c0_i32_0 = arith.constant 0 : i32
    %c0_i32_1 = arith.constant 0 : i32
    return %c0_i32, %c0_i32_0 : i32, i32
  }
  func.func @transform_2(%arg0: i32) -> (i32, i32) {
    %c0_i32 = arith.constant 0 : i32
    %c0_i32_0 = arith.constant 0 : i32
    %c0_i32_1 = arith.constant 0 : i32
    return %c0_i32, %c0_i32_0 : i32, i32
  }
  func.func @transform_3(%arg0: i32) -> (i32, i32, i32) {
    %c0_i32 = arith.constant 0 : i32
    %c0_i32_0 = arith.constant 0 : i32
    %c0_i32_1 = arith.constant 0 : i32
    return %c0_i32, %arg0, %c0_i32_0 : i32, i32, i32
  }
}

module attributes {stable_mosaic.version = 11 : i64} {
  func.func @_point_conv_kernel(%arg0: i32, %arg1: memref<4x16x64xbf16, #tpu.memory_space<vmem>>, %arg2: memref<4x16x64xbf16, #tpu.memory_space<vmem>>, %arg3: memref<4x16x128xbf16, #tpu.memory_space<vmem>>, %arg4: memref<4x16x256xbf16, #tpu.memory_space<vmem>>, %arg5: memref<64x32xbf16, #tpu.memory_space<vmem>>, %arg6: memref<64x32xbf16, #tpu.memory_space<vmem>>, %arg7: memref<128x32xbf16, #tpu.memory_space<vmem>>, %arg8: memref<256x32xbf16, #tpu.memory_space<vmem>>, %arg9: memref<16x32xbf16, #tpu.memory_space<vmem>>) attributes {dimension_semantics = [#tpu.dimension_semantics<parallel>], iteration_bounds = array<i64: 1>, scalar_prefetch = 0 : i64, scratch_operands = 0 : i64, tpu.core_type = #tpu.core_type<tc>, window_params = [{transform_indices = @transform_0, window_bounds = array<i64: 4, 16, 64>}, {transform_indices = @transform_1, window_bounds = array<i64: 4, 16, 64>}, {transform_indices = @transform_2, window_bounds = array<i64: 4, 16, 128>}, {transform_indices = @transform_3, window_bounds = array<i64: 4, 16, 256>}, {pipeline_mode = #tpu.pipeline_mode<synchronous>, transform_indices = @transform_4, window_bounds = array<i64: 64, 32>}, {pipeline_mode = #tpu.pipeline_mode<synchronous>, transform_indices = @transform_5, window_bounds = array<i64: 64, 32>}, {pipeline_mode = #tpu.pipeline_mode<synchronous>, transform_indices = @transform_6, window_bounds = array<i64: 128, 32>}, {pipeline_mode = #tpu.pipeline_mode<synchronous>, transform_indices = @transform_7, window_bounds = array<i64: 256, 32>}, {transform_indices = @transform_8, window_bounds = array<i64: 16, 32>}]} {
    %c0 = arith.constant 0 : index
    %c0_0 = arith.constant 0 : index
    %c0_1 = arith.constant 0 : index
    %0 = vector.load %arg1[%c0, %c0_0, %c0_1] : memref<4x16x64xbf16, #tpu.memory_space<vmem>>, vector<4x16x64xbf16>
    %1 = vector.shape_cast %0 : vector<4x16x64xbf16> to vector<64x64xbf16>
    %c0_2 = arith.constant 0 : index
    %c0_3 = arith.constant 0 : index
    %2 = vector.load %arg5[%c0_2, %c0_3] : memref<64x32xbf16, #tpu.memory_space<vmem>>, vector<64x32xbf16>
    %cst = arith.constant dense<0.000000e+00> : vector<64x32xf32>
    %3 = tpu.matmul %1, %2, %cst {dimension_numbers = #tpu.dot_dimension_numbers<[1], [0], [0], [1], [0, 0, 1, 1], [], []>} : vector<64x64xbf16>, vector<64x32xbf16>, vector<64x32xf32> -> vector<64x32xf32>
    %c0_4 = arith.constant 0 : index
    %c0_5 = arith.constant 0 : index
    %c0_6 = arith.constant 0 : index
    %4 = vector.load %arg2[%c0_4, %c0_5, %c0_6] : memref<4x16x64xbf16, #tpu.memory_space<vmem>>, vector<4x16x64xbf16>
    %5 = vector.shape_cast %4 : vector<4x16x64xbf16> to vector<64x64xbf16>
    %c0_7 = arith.constant 0 : index
    %c0_8 = arith.constant 0 : index
    %6 = vector.load %arg6[%c0_7, %c0_8] : memref<64x32xbf16, #tpu.memory_space<vmem>>, vector<64x32xbf16>
    %cst_9 = arith.constant dense<0.000000e+00> : vector<64x32xf32>
    %7 = tpu.matmul %5, %6, %cst_9 {dimension_numbers = #tpu.dot_dimension_numbers<[1], [0], [0], [1], [0, 0, 1, 1], [], []>} : vector<64x64xbf16>, vector<64x32xbf16>, vector<64x32xf32> -> vector<64x32xf32>
    %8 = arith.addf %3, %7 : vector<64x32xf32>
    %c0_10 = arith.constant 0 : index
    %c0_11 = arith.constant 0 : index
    %c0_12 = arith.constant 0 : index
    %9 = vector.load %arg3[%c0_10, %c0_11, %c0_12] : memref<4x16x128xbf16, #tpu.memory_space<vmem>>, vector<4x16x128xbf16>
    %10 = vector.shape_cast %9 : vector<4x16x128xbf16> to vector<64x128xbf16>
    %c0_13 = arith.constant 0 : index
    %c0_14 = arith.constant 0 : index
    %11 = vector.load %arg7[%c0_13, %c0_14] : memref<128x32xbf16, #tpu.memory_space<vmem>>, vector<128x32xbf16>
    %cst_15 = arith.constant dense<0.000000e+00> : vector<64x32xf32>
    %12 = tpu.matmul %10, %11, %cst_15 {dimension_numbers = #tpu.dot_dimension_numbers<[1], [0], [0], [1], [0, 0, 1, 1], [], []>} : vector<64x128xbf16>, vector<128x32xbf16>, vector<64x32xf32> -> vector<64x32xf32>
    %13 = arith.addf %8, %12 : vector<64x32xf32>
    %c0_16 = arith.constant 0 : index
    %c0_17 = arith.constant 0 : index
    %c0_18 = arith.constant 0 : index
    %14 = vector.load %arg4[%c0_16, %c0_17, %c0_18] : memref<4x16x256xbf16, #tpu.memory_space<vmem>>, vector<4x16x256xbf16>
    %15 = vector.shape_cast %14 : vector<4x16x256xbf16> to vector<64x256xbf16>
    %c0_19 = arith.constant 0 : index
    %c0_20 = arith.constant 0 : index
    %16 = vector.load %arg8[%c0_19, %c0_20] : memref<256x32xbf16, #tpu.memory_space<vmem>>, vector<256x32xbf16>
    %cst_21 = arith.constant dense<0.000000e+00> : vector<64x32xf32>
    %17 = tpu.matmul %15, %16, %cst_21 {dimension_numbers = #tpu.dot_dimension_numbers<[1], [0], [0], [1], [0, 0, 1, 1], [], []>} : vector<64x256xbf16>, vector<256x32xbf16>, vector<64x32xf32> -> vector<64x32xf32>
    %18 = arith.addf %13, %17 : vector<64x32xf32>
    %19 = vector.shape_cast %18 : vector<64x32xf32> to vector<4x16x32xf32>
    %20 = vector.extract_strided_slice %19 {offsets = [0, 0, 0], sizes = [1, 16, 32], strides = [1, 1, 1]} : vector<4x16x32xf32> to vector<1x16x32xf32>
    %21 = vector.shape_cast %20 : vector<1x16x32xf32> to vector<16x32xf32>
    %22 = vector.extract_strided_slice %19 {offsets = [1, 0, 0], sizes = [1, 16, 32], strides = [1, 1, 1]} : vector<4x16x32xf32> to vector<1x16x32xf32>
    %23 = vector.shape_cast %22 : vector<1x16x32xf32> to vector<16x32xf32>
    %24 = arith.maximumf %21, %23 : vector<16x32xf32>
    %25 = vector.extract_strided_slice %19 {offsets = [2, 0, 0], sizes = [1, 16, 32], strides = [1, 1, 1]} : vector<4x16x32xf32> to vector<1x16x32xf32>
    %26 = vector.shape_cast %25 : vector<1x16x32xf32> to vector<16x32xf32>
    %27 = arith.maximumf %24, %26 : vector<16x32xf32>
    %28 = vector.extract_strided_slice %19 {offsets = [3, 0, 0], sizes = [1, 16, 32], strides = [1, 1, 1]} : vector<4x16x32xf32> to vector<1x16x32xf32>
    %29 = vector.shape_cast %28 : vector<1x16x32xf32> to vector<16x32xf32>
    %30 = arith.maximumf %27, %29 : vector<16x32xf32>
    %31 = math.tanh %30 : vector<16x32xf32>
    %32 = arith.truncf %31 : vector<16x32xf32> to vector<16x32xbf16>
    %c0_22 = arith.constant 0 : index
    %c0_23 = arith.constant 0 : index
    %33 = vector.load %arg9[%c0_22, %c0_23] : memref<16x32xbf16, #tpu.memory_space<vmem>>, vector<16x32xbf16>
    tpu.vector_store %arg9[%c0_22, %c0_23], %32 {strides = array<i32>} : memref<16x32xbf16, #tpu.memory_space<vmem>>, vector<16x32xbf16>,
    return
  }
  func.func @transform_0(%arg0: i32) -> (i32, i32, i32) {
    %c0_i32 = arith.constant 0 : i32
    %c0_i32_0 = arith.constant 0 : i32
    %c0_i32_1 = arith.constant 0 : i32
    return %c0_i32, %arg0, %c0_i32_0 : i32, i32, i32
  }
  func.func @transform_1(%arg0: i32) -> (i32, i32, i32) {
    %c0_i32 = arith.constant 0 : i32
    %c0_i32_0 = arith.constant 0 : i32
    %c0_i32_1 = arith.constant 0 : i32
    return %c0_i32, %arg0, %c0_i32_0 : i32, i32, i32
  }
  func.func @transform_2(%arg0: i32) -> (i32, i32, i32) {
    %c0_i32 = arith.constant 0 : i32
    %c0_i32_0 = arith.constant 0 : i32
    %c0_i32_1 = arith.constant 0 : i32
    return %c0_i32, %arg0, %c0_i32_0 : i32, i32, i32
  }
  func.func @transform_3(%arg0: i32) -> (i32, i32, i32) {
    %c0_i32 = arith.constant 0 : i32
    %c0_i32_0 = arith.constant 0 : i32
    %c0_i32_1 = arith.constant 0 : i32
    return %c0_i32, %arg0, %c0_i32_0 : i32, i32, i32
  }
  func.func @transform_4(%arg0: i32) -> (i32, i32) {
    %c0_i32 = arith.constant 0 : i32
    %c0_i32_0 = arith.constant 0 : i32
    %c0_i32_1 = arith.constant 0 : i32
    return %c0_i32, %c0_i32_0 : i32, i32
  }
  func.func @transform_5(%arg0: i32) -> (i32, i32) {
    %c0_i32 = arith.constant 0 : i32
    %c0_i32_0 = arith.constant 0 : i32
    %c0_i32_1 = arith.constant 0 : i32
    return %c0_i32, %c0_i32_0 : i32, i32
  }
  func.func @transform_6(%arg0: i32) -> (i32, i32) {
    %c0_i32 = arith.constant 0 : i32
    %c0_i32_0 = arith.constant 0 : i32
    %c0_i32_1 = arith.constant 0 : i32
    return %c0_i32, %c0_i32_0 : i32, i32
  }
  func.func @transform_7(%arg0: i32) -> (i32, i32) {
    %c0_i32 = arith.constant 0 : i32
    %c0_i32_0 = arith.constant 0 : i32
    %c0_i32_1 = arith.constant 0 : i32
    return %c0_i32, %c0_i32_0 : i32, i32
  }
  func.func @transform_8(%arg0: i32) -> (i32, i32) {
    %c0_i32 = arith.constant 0 : i32
    %c0_i32_0 = arith.constant 0 : i32
    return %arg0, %c0_i32 : i32, i32
  }
}

module attributes {stable_mosaic.version = 11 : i64} {
  func.func @_mlp_head_kernel(%arg0: i32, %arg1: memref<16x32xbf16, #tpu.memory_space<vmem>>, %arg2: memref<16x32xbf16, #tpu.memory_space<vmem>>, %arg3: memref<32x64xbf16, #tpu.memory_space<vmem>>, %arg4: memref<32x64xbf16, #tpu.memory_space<vmem>>, %arg5: memref<1x64xf32, #tpu.memory_space<vmem>>, %arg6: memref<64x32xbf16, #tpu.memory_space<vmem>>, %arg7: memref<1x32xf32, #tpu.memory_space<vmem>>, %arg8: memref<32x3xbf16, #tpu.memory_space<vmem>>, %arg9: memref<1x3xf32, #tpu.memory_space<vmem>>, %arg10: memref<16x3xf32, #tpu.memory_space<vmem>>) attributes {dimension_semantics = [#tpu.dimension_semantics<parallel>], iteration_bounds = array<i64: 1>, scalar_prefetch = 0 : i64, scratch_operands = 0 : i64, tpu.core_type = #tpu.core_type<tc>, window_params = [{transform_indices = @transform_0, window_bounds = array<i64: 16, 32>}, {transform_indices = @transform_1, window_bounds = array<i64: 16, 32>}, {pipeline_mode = #tpu.pipeline_mode<synchronous>, transform_indices = @transform_2, window_bounds = array<i64: 32, 64>}, {pipeline_mode = #tpu.pipeline_mode<synchronous>, transform_indices = @transform_3, window_bounds = array<i64: 32, 64>}, {pipeline_mode = #tpu.pipeline_mode<synchronous>, transform_indices = @transform_4, window_bounds = array<i64: 1, 64>}, {pipeline_mode = #tpu.pipeline_mode<synchronous>, transform_indices = @transform_5, window_bounds = array<i64: 64, 32>}, {pipeline_mode = #tpu.pipeline_mode<synchronous>, transform_indices = @transform_6, window_bounds = array<i64: 1, 32>}, {pipeline_mode = #tpu.pipeline_mode<synchronous>, transform_indices = @transform_7, window_bounds = array<i64: 32, 3>}, {pipeline_mode = #tpu.pipeline_mode<synchronous>, transform_indices = @transform_8, window_bounds = array<i64: 1, 3>}, {transform_indices = @transform_9, window_bounds = array<i64: 16, 3>}]} {
    %c0 = arith.constant 0 : index
    %c0_0 = arith.constant 0 : index
    %0 = vector.load %arg1[%c0, %c0_0] : memref<16x32xbf16, #tpu.memory_space<vmem>>, vector<16x32xbf16>
    %c0_1 = arith.constant 0 : index
    %c0_2 = arith.constant 0 : index
    %1 = vector.load %arg3[%c0_1, %c0_2] : memref<32x64xbf16, #tpu.memory_space<vmem>>, vector<32x64xbf16>
    %cst = arith.constant dense<0.000000e+00> : vector<16x64xf32>
    %2 = tpu.matmul %0, %1, %cst {dimension_numbers = #tpu.dot_dimension_numbers<[1], [0], [0], [1], [0, 0, 1, 1], [], []>} : vector<16x32xbf16>, vector<32x64xbf16>, vector<16x64xf32> -> vector<16x64xf32>
    %c0_3 = arith.constant 0 : index
    %c0_4 = arith.constant 0 : index
    %3 = vector.load %arg2[%c0_3, %c0_4] : memref<16x32xbf16, #tpu.memory_space<vmem>>, vector<16x32xbf16>
    %c0_5 = arith.constant 0 : index
    %c0_6 = arith.constant 0 : index
    %4 = vector.load %arg4[%c0_5, %c0_6] : memref<32x64xbf16, #tpu.memory_space<vmem>>, vector<32x64xbf16>
    %cst_7 = arith.constant dense<0.000000e+00> : vector<16x64xf32>
    %5 = tpu.matmul %3, %4, %cst_7 {dimension_numbers = #tpu.dot_dimension_numbers<[1], [0], [0], [1], [0, 0, 1, 1], [], []>} : vector<16x32xbf16>, vector<32x64xbf16>, vector<16x64xf32> -> vector<16x64xf32>
    %6 = arith.addf %2, %5 : vector<16x64xf32>
    %c0_8 = arith.constant 0 : index
    %c0_9 = arith.constant 0 : index
    %7 = vector.load %arg5[%c0_8, %c0_9] : memref<1x64xf32, #tpu.memory_space<vmem>>, vector<1x64xf32>
    %8 = vector.broadcast %7 : vector<1x64xf32> to vector<16x64xf32>
    %9 = arith.addf %6, %8 : vector<16x64xf32>
    %cst_10 = arith.constant 0.000000e+00 : f32
    %10 = vector.broadcast %cst_10 : f32 to vector<16x64xf32>
    %11 = arith.maximumf %9, %10 : vector<16x64xf32>
    %12 = arith.truncf %11 : vector<16x64xf32> to vector<16x64xbf16>
    %c0_11 = arith.constant 0 : index
    %c0_12 = arith.constant 0 : index
    %13 = vector.load %arg6[%c0_11, %c0_12] : memref<64x32xbf16, #tpu.memory_space<vmem>>, vector<64x32xbf16>
    %cst_13 = arith.constant dense<0.000000e+00> : vector<16x32xf32>
    %14 = tpu.matmul %12, %13, %cst_13 {dimension_numbers = #tpu.dot_dimension_numbers<[1], [0], [0], [1], [0, 0, 1, 1], [], []>} : vector<16x64xbf16>, vector<64x32xbf16>, vector<16x32xf32> -> vector<16x32xf32>
    %c0_14 = arith.constant 0 : index
    %c0_15 = arith.constant 0 : index
    %15 = vector.load %arg7[%c0_14, %c0_15] : memref<1x32xf32, #tpu.memory_space<vmem>>, vector<1x32xf32>
    %16 = vector.broadcast %15 : vector<1x32xf32> to vector<16x32xf32>
    %17 = arith.addf %14, %16 : vector<16x32xf32>
    %cst_16 = arith.constant 0.000000e+00 : f32
    %18 = vector.broadcast %cst_16 : f32 to vector<16x32xf32>
    %19 = arith.maximumf %17, %18 : vector<16x32xf32>
    %20 = arith.truncf %19 : vector<16x32xf32> to vector<16x32xbf16>
    %c0_17 = arith.constant 0 : index
    %c0_18 = arith.constant 0 : index
    %21 = vector.load %arg8[%c0_17, %c0_18] : memref<32x3xbf16, #tpu.memory_space<vmem>>, vector<32x3xbf16>
    %cst_19 = arith.constant dense<0.000000e+00> : vector<16x3xf32>
    %22 = tpu.matmul %20, %21, %cst_19 {dimension_numbers = #tpu.dot_dimension_numbers<[1], [0], [0], [1], [0, 0, 1, 1], [], []>} : vector<16x32xbf16>, vector<32x3xbf16>, vector<16x3xf32> -> vector<16x3xf32>
    %c0_20 = arith.constant 0 : index
    %c0_21 = arith.constant 0 : index
    %23 = vector.load %arg9[%c0_20, %c0_21] : memref<1x3xf32, #tpu.memory_space<vmem>>, vector<1x3xf32>
    %24 = vector.broadcast %23 : vector<1x3xf32> to vector<16x3xf32>
    %25 = arith.addf %22, %24 : vector<16x3xf32>
    %c0_22 = arith.constant 0 : index
    %c0_23 = arith.constant 0 : index
    %26 = vector.load %arg10[%c0_22, %c0_23] : memref<16x3xf32, #tpu.memory_space<vmem>>, vector<16x3xf32>
    tpu.vector_store %arg10[%c0_22, %c0_23], %25 {strides = array<i32>} : memref<16x3xf32, #tpu.memory_space<vmem>>, vector<16x3xf32>,
    return
  }
  func.func @transform_0(%arg0: i32) -> (i32, i32) {
    %c0_i32 = arith.constant 0 : i32
    %c0_i32_0 = arith.constant 0 : i32
    return %arg0, %c0_i32 : i32, i32
  }
  func.func @transform_1(%arg0: i32) -> (i32, i32) {
    %c0_i32 = arith.constant 0 : i32
    %c0_i32_0 = arith.constant 0 : i32
    return %arg0, %c0_i32 : i32, i32
  }
  func.func @transform_2(%arg0: i32) -> (i32, i32) {
    %c0_i32 = arith.constant 0 : i32
    %c0_i32_0 = arith.constant 0 : i32
    %c0_i32_1 = arith.constant 0 : i32
    return %c0_i32, %c0_i32_0 : i32, i32
  }
  func.func @transform_3(%arg0: i32) -> (i32, i32) {
    %c0_i32 = arith.constant 0 : i32
    %c0_i32_0 = arith.constant 0 : i32
    %c0_i32_1 = arith.constant 0 : i32
    return %c0_i32, %c0_i32_0 : i32, i32
  }
  func.func @transform_4(%arg0: i32) -> (i32, i32) {
    %c0_i32 = arith.constant 0 : i32
    %c0_i32_0 = arith.constant 0 : i32
    %c0_i32_1 = arith.constant 0 : i32
    return %c0_i32, %c0_i32_0 : i32, i32
  }
  func.func @transform_5(%arg0: i32) -> (i32, i32) {
    %c0_i32 = arith.constant 0 : i32
    %c0_i32_0 = arith.constant 0 : i32
    %c0_i32_1 = arith.constant 0 : i32
    return %c0_i32, %c0_i32_0 : i32, i32
  }
  func.func @transform_6(%arg0: i32) -> (i32, i32) {
    %c0_i32 = arith.constant 0 : i32
    %c0_i32_0 = arith.constant 0 : i32
    %c0_i32_1 = arith.constant 0 : i32
    return %c0_i32, %c0_i32_0 : i32, i32
  }
  func.func @transform_7(%arg0: i32) -> (i32, i32) {
    %c0_i32 = arith.constant 0 : i32
    %c0_i32_0 = arith.constant 0 : i32
    %c0_i32_1 = arith.constant 0 : i32
    return %c0_i32, %c0_i32_0 : i32, i32
  }
  func.func @transform_8(%arg0: i32) -> (i32, i32) {
    %c0_i32 = arith.constant 0 : i32
    %c0_i32_0 = arith.constant 0 : i32
    %c0_i32_1 = arith.constant 0 : i32
    return %c0_i32, %c0_i32_0 : i32, i32
  }
  func.func @transform_9(%arg0: i32) -> (i32, i32) {
    %c0_i32 = arith.constant 0 : i32
    %c0_i32_0 = arith.constant 0 : i32
    return %arg0, %c0_i32 : i32, i32
  }
}

</mosaic_0001>

<llo_original>
// kernel: custom-call.8
$region0: #{custom-call.8}
  %s0 = inlined_call_operand.vmem [shape: f32[2,32], index: 0, kind: output, shape index: {}]

// kernel: encoder_forward.11
$region0: #{encoder_forward.11}
  #allocation0 [shape = 'u32[]', space=smem, size = 0x4, offset = 0x4, fixed_abs, tag = 'smem constant byte address 0x4 - core index']
  #allocation1 [shape = 'u32[144,128]{1,0:T(1,128)}', space=vmem, size = 0x12000, scoped, tag = 'internal scratch']
  %s0 = inlined_call_operand.vmem [shape: bf16[4,16,3], index: 0, kind: input, shape index: {}]
  %s1 = inlined_call_operand.vmem [shape: bf16[3,64], index: 1, kind: input, shape index: {}]
  %s2 = inlined_call_operand.vmem [shape: bf16[3,64], index: 2, kind: input, shape index: {}]
  %s3 = inlined_call_operand.vmem [shape: bf16[4,16,64], index: 3, kind: output, shape index: {}]
  %s4 = sld [smem:[#allocation0]]
  $region22: #{encoder_forward.11} parent=0
    _
  %s6 = ssub.s32 1, %s4
  %s7 = scalar_select 0, %s6, %s4
  // Predicated region
  $region2: #{encoder_forward.11} parent=0 // pred_check
    _
  $region3: #{encoder_forward.11} parent=0 // pred_check_branch
    %9 = sbr.rel (0) target = $region5
  $region4: #{encoder_forward.11} parent=0 // pred_region
    _
  $region5: #{encoder_forward.11} parent=0 // pred_fallthru
    _
  // Predicated region
  $region6: #{encoder_forward.11} parent=0 // pred_check
    _
  $region7: #{encoder_forward.11} parent=0 // pred_check_branch
    %11 = sbr.rel (0) target = $region9
  $region8: #{encoder_forward.11} parent=0 // pred_region
    _
  $region9: #{encoder_forward.11} parent=0 // pred_fallthru
    _
  // Predicated region
  $region10: #{encoder_forward.11} parent=0 // pred_check
    _
  $region11: #{encoder_forward.11} parent=0 // pred_check_branch
    %13 = sbr.rel (0) target = $region13
  $region12: #{encoder_forward.11} parent=0 // pred_region
    _
  $region13: #{encoder_forward.11} parent=0 // pred_fallthru
    _
  %v14 = vld [vmem:[%s0] sm:$0xf]
  %v15 = vld [vmem:[%s0 + $0x4] sm:$0xf]
  %v16 = vld [vmem:[%s0 + $0x8] sm:$0xf]
  %v17 = vld [vmem:[%s0 + $0xc] sm:$0xf]
  %v18 = vld [vmem:[%s0 + $0x10] sm:$0xf]
  %v19 = vld [vmem:[%s0 + $0x14] sm:$0xf]
  %v20 = vld [vmem:[%s0 + $0x18] sm:$0xf]
  %v21 = vld [vmem:[%s0 + $0x1c] sm:$0xf]
  %v22 = vunpack.c.l.bf16 %v14
  %v23 = vunpack.c.l.bf16 %v15
  %v24 = vunpack.c.l.bf16 %v16
  %v25 = vunpack.c.l.bf16 %v17
  %v26 = vunpack.c.l.bf16 %v18
  %v27 = vunpack.c.l.bf16 %v19
  %v28 = vunpack.c.l.bf16 %v20
  %v29 = vunpack.c.l.bf16 %v21
  %v30 = vld [vmem:[%s1] sm:$0x3]
  %v31 = vunpack.c.l.bf16 %v30
  %v32 = vld [vmem:[%s2] sm:$0x3]
  %v33 = vunpack.c.l.bf16 %v32
  %35 = vset.pattern.permute.xlu0 0
  %36 = vperm.xlu0 %35, %v22
  %v37 = vpop.permute.xlu0 %36
  %40 = vset.pattern.permute.xlu0 0
  %41 = vperm.xlu0 %40, %v23
  %v42 = vpop.permute.xlu0 %41
  %45 = vset.pattern.permute.xlu0 0
  %46 = vperm.xlu0 %45, %v24
  %v47 = vpop.permute.xlu0 %46
  %50 = vset.pattern.permute.xlu0 0
  %51 = vperm.xlu0 %50, %v25
  %v52 = vpop.permute.xlu0 %51
  %55 = vset.pattern.permute.xlu0 0
  %56 = vperm.xlu0 %55, %v26
  %v57 = vpop.permute.xlu0 %56
  %60 = vset.pattern.permute.xlu0 0
  %61 = vperm.xlu0 %60, %v27
  %v62 = vpop.permute.xlu0 %61
  %65 = vset.pattern.permute.xlu0 0
  %66 = vperm.xlu0 %65, %v28
  %v67 = vpop.permute.xlu0 %66
  %70 = vset.pattern.permute.xlu0 0
  %71 = vperm.xlu0 %70, %v29
  %v72 = vpop.permute.xlu0 %71
  %v74 = vlaneseq
  %v75 = vshrl.u32 %v74, 7
  %v76 = vsub.s32 0, %v75
  %v77 = vrot.slane %v31, %v76
  %v78 = vmul.f32 %v37, %v77
  %v79 = vmul.f32 %v42, %v77
  %v80 = vmul.f32 %v47, %v77
  %v81 = vmul.f32 %v52, %v77
  %v82 = vmul.f32 %v57, %v77
  %v83 = vmul.f32 %v62, %v77
  %v84 = vmul.f32 %v67, %v77
  %v85 = vmul.f32 %v72, %v77
  %v86 = vlaneseq
  %v87 = vshrl.u32 %v86, 7
  %v88 = vsub.s32 0, %v87
  %v89 = vrot.slane %v33, %v88
  %v90 = vmul.f32 %v37, %v89
  %v91 = vmul.f32 %v42, %v89
  %v92 = vmul.f32 %v47, %v89
  %v93 = vmul.f32 %v52, %v89
  %v94 = vmul.f32 %v57, %v89
  %v95 = vmul.f32 %v62, %v89
  %v96 = vmul.f32 %v67, %v89
  %v97 = vmul.f32 %v72, %v89
  %98 = vset.pattern.permute.xlu0 1
  %99 = vperm.xlu0 %98, %v22
  %v100 = vpop.permute.xlu0 %99
  %102 = vset.pattern.permute.xlu0 1
  %103 = vperm.xlu0 %102, %v23
  %v104 = vpop.permute.xlu0 %103
  %106 = vset.pattern.permute.xlu0 1
  %107 = vperm.xlu0 %106, %v24
  %v108 = vpop.permute.xlu0 %107
  %110 = vset.pattern.permute.xlu0 1
  %111 = vperm.xlu0 %110, %v25
  %v112 = vpop.permute.xlu0 %111
  %114 = vset.pattern.permute.xlu0 1
  %115 = vperm.xlu0 %114, %v26
  %v116 = vpop.permute.xlu0 %115
  %118 = vset.pattern.permute.xlu0 1
  %119 = vperm.xlu0 %118, %v27
  %v120 = vpop.permute.xlu0 %119
  %122 = vset.pattern.permute.xlu0 1
  %123 = vperm.xlu0 %122, %v28
  %v124 = vpop.permute.xlu0 %123
  %126 = vset.pattern.permute.xlu0 1
  %127 = vperm.xlu0 %126, %v29
  %v128 = vpop.permute.xlu0 %127
  %v130 = vlaneseq
  %v131 = vshrl.u32 %v130, 7
  %v132 = vsub.s32 1, %v131
  %v133 = vrot.slane %v31, %v132
  %v134 = vmul.f32 %v100, %v133
  %v135 = vmul.f32 %v104, %v133
  %v136 = vmul.f32 %v108, %v133
  %v137 = vmul.f32 %v112, %v133
  %v138 = vmul.f32 %v116, %v133
  %v139 = vmul.f32 %v120, %v133
  %v140 = vmul.f32 %v124, %v133
  %v141 = vmul.f32 %v128, %v133
  %v142 = vadd.f32 %v78, %v134
  %v143 = vadd.f32 %v79, %v135
  %v144 = vadd.f32 %v80, %v136
  %v145 = vadd.f32 %v81, %v137
  %v146 = vadd.f32 %v82, %v138
  %v147 = vadd.f32 %v83, %v139
  %v148 = vadd.f32 %v84, %v140
  %v149 = vadd.f32 %v85, %v141
  %v150 = vlaneseq
  %v151 = vshrl.u32 %v150, 7
  %v152 = vsub.s32 1, %v151
  %v153 = vrot.slane %v33, %v152
  %v154 = vmul.f32 %v100, %v153
  %v155 = vmul.f32 %v104, %v153
  %v156 = vmul.f32 %v108, %v153
  %v157 = vmul.f32 %v112, %v153
  %v158 = vmul.f32 %v116, %v153
  %v159 = vmul.f32 %v120, %v153
  %v160 = vmul.f32 %v124, %v153
  %v161 = vmul.f32 %v128, %v153
  %v162 = vadd.f32 %v90, %v154
  %v163 = vadd.f32 %v91, %v155
  %v164 = vadd.f32 %v92, %v156
  %v165 = vadd.f32 %v93, %v157
  %v166 = vadd.f32 %v94, %v158
  %v167 = vadd.f32 %v95, %v159
  %v168 = vadd.f32 %v96, %v160
  %v169 = vadd.f32 %v97, %v161
  %170 = vset.pattern.permute.xlu0 2
  %171 = vperm.xlu0 %170, %v22
  %v172 = vpop.permute.xlu0 %171
  %174 = vset.pattern.permute.xlu0 2
  %175 = vperm.xlu0 %174, %v23
  %v176 = vpop.permute.xlu0 %175
  %178 = vset.pattern.permute.xlu0 2
  %179 = vperm.xlu0 %178, %v24
  %v180 = vpop.permute.xlu0 %179
  %182 = vset.pattern.permute.xlu0 2
  %183 = vperm.xlu0 %182, %v25
  %v184 = vpop.permute.xlu0 %183
  %186 = vset.pattern.permute.xlu0 2
  %187 = vperm.xlu0 %186, %v26
  %v188 = vpop.permute.xlu0 %187
  %190 = vset.pattern.permute.xlu0 2
  %191 = vperm.xlu0 %190, %v27
  %v192 = vpop.permute.xlu0 %191
  %194 = vset.pattern.permute.xlu0 2
  %195 = vperm.xlu0 %194, %v28
  %v196 = vpop.permute.xlu0 %195
  %198 = vset.pattern.permute.xlu0 2
  %199 = vperm.xlu0 %198, %v29
  %v200 = vpop.permute.xlu0 %199
  %v202 = vlaneseq
  %v203 = vshrl.u32 %v202, 7
  %v204 = vsub.s32 2, %v203
  %v205 = vrot.slane %v31, %v204
  %v206 = vmul.f32 %v172, %v205
  %v207 = vmul.f32 %v176, %v205
  %v208 = vmul.f32 %v180, %v205
  %v209 = vmul.f32 %v184, %v205
  %v210 = vmul.f32 %v188, %v205
  %v211 = vmul.f32 %v192, %v205
  %v212 = vmul.f32 %v196, %v205
  %v213 = vmul.f32 %v200, %v205
  %v214 = vadd.f32 %v142, %v206
  %v215 = vadd.f32 %v143, %v207
  %v216 = vadd.f32 %v144, %v208
  %v217 = vadd.f32 %v145, %v209
  %v218 = vadd.f32 %v146, %v210
  %v219 = vadd.f32 %v147, %v211
  %v220 = vadd.f32 %v148, %v212
  %v221 = vadd.f32 %v149, %v213
  %v222 = vlaneseq
  %v223 = vshrl.u32 %v222, 7
  %v224 = vsub.s32 2, %v223
  %v225 = vrot.slane %v33, %v224
  %v226 = vmul.f32 %v172, %v225
  %v227 = vmul.f32 %v176, %v225
  %v228 = vmul.f32 %v180, %v225
  %v229 = vmul.f32 %v184, %v225
  %v230 = vmul.f32 %v188, %v225
  %v231 = vmul.f32 %v192, %v225
  %v232 = vmul.f32 %v196, %v225
  %v233 = vmul.f32 %v200, %v225
  %v234 = vadd.f32 %v162, %v226
  %v235 = vadd.f32 %v163, %v227
  %v236 = vadd.f32 %v164, %v228
  %v237 = vadd.f32 %v165, %v229
  %v238 = vadd.f32 %v166, %v230
  %v239 = vadd.f32 %v167, %v231
  %v240 = vadd.f32 %v168, %v232
  %v241 = vadd.f32 %v169, %v233
  %v242 = vmax.f32 %v214, %v216
  %v243 = vmax.f32 %v215, %v217
  %v244 = vmax.f32 %v242, %v218
  %v245 = vmax.f32 %v243, %v219
  %v246 = vmax.f32 %v244, %v220
  %v247 = vmax.f32 %v245, %v221
  %v248 = vadd.f32 %v234, %v246
  %v249 = vadd.f32 %v235, %v247
  %v250 = vadd.f32 %v236, %v246
  %v251 = vadd.f32 %v237, %v247
  %v252 = vadd.f32 %v238, %v246
  %v253 = vadd.f32 %v239, %v247
  %v254 = vadd.f32 %v240, %v246
  %v255 = vadd.f32 %v241, %v247
  %v256 = vmax.f32 %v248, 0.0
  %v257 = vmax.f32 %v249, 0.0
  %v258 = vmax.f32 %v250, 0.0
  %v259 = vmax.f32 %v251, 0.0
  %v260 = vmax.f32 %v252, 0.0
  %v261 = vmax.f32 %v253, 0.0
  %v262 = vmax.f32 %v254, 0.0
  %v263 = vmax.f32 %v255, 0.0
  %v264 = vpack.c.bf16 %v257, %v256
  %v265 = vpack.c.bf16 %v259, %v258
  %v266 = vpack.c.bf16 %v261, %v260
  %v267 = vpack.c.bf16 %v263, %v262
  %v272 = vunpack.c.l.b16 %v264
  %v273 = vunpack.c.h.b16 %v264
  %v274 = vunpack.c.l.b16 %v265
  %v275 = vunpack.c.h.b16 %v265
  %v276 = vunpack.c.l.b16 %v266
  %v277 = vunpack.c.h.b16 %v266
  %v278 = vunpack.c.l.b16 %v267
  %v279 = vunpack.c.h.b16 %v267
  %v280 = vpack.c.b16 %v272, %v272
  %v281 = vpack.c.b16 %v273, %v273
  %v282 = vpack.c.b16 %v274, %v274
  %v283 = vpack.c.b16 %v275, %v275
  %v284 = vpack.c.b16 %v276, %v276
  %v285 = vpack.c.b16 %v277, %v277
  %v286 = vpack.c.b16 %v278, %v278
  %v287 = vpack.c.b16 %v279, %v279
  %vm296 = vcmask 519168
  %297 = vst.msk [vmem:[%s3] sm:$0xf] %vm296, %v280
  %298 = vst.msk [vmem:[%s3 + $0x4] sm:$0xf] %vm296, %v281
  %299 = vst.msk [vmem:[%s3 + $0x8] sm:$0xf] %vm296, %v282
  %300 = vst.msk [vmem:[%s3 + $0xc] sm:$0xf] %vm296, %v283
  %301 = vst.msk [vmem:[%s3 + $0x10] sm:$0xf] %vm296, %v284
  %302 = vst.msk [vmem:[%s3 + $0x14] sm:$0xf] %vm296, %v285
  %303 = vst.msk [vmem:[%s3 + $0x18] sm:$0xf] %vm296, %v286
  %304 = vst.msk [vmem:[%s3 + $0x1c] sm:$0xf] %vm296, %v287
  // Predicated region
  $region14: #{encoder_forward.11} parent=0 // pred_check
    _
  $region15: #{encoder_forward.11} parent=0 // pred_check_branch
    %306 = sbr.rel (0) target = $region17
  $region16: #{encoder_forward.11} parent=0 // pred_region
    _
  $region17: #{encoder_forward.11} parent=0 // pred_fallthru
    _
  // Predicated region
  $region18: #{encoder_forward.11} parent=0 // pred_check
    _
  $region19: #{encoder_forward.11} parent=0 // pred_check_branch
    %308 = sbr.rel (0) target = $region21
  $region20: #{encoder_forward.11} parent=0 // pred_region
    _
  $region21: #{encoder_forward.11} parent=0 // pred_fallthru
    _

// kernel: encoder_forward.12
$region0: #{encoder_forward.12}
  #allocation0 [shape = 'u32[]', space=smem, size = 0x4, offset = 0x4, fixed_abs, tag = 'smem constant byte address 0x4 - core index']
  #allocation1 [shape = 'u32[144,128]{1,0:T(1,128)}', space=vmem, size = 0x12000, scoped, tag = 'internal scratch']
  %s0 = inlined_call_operand.vmem [shape: bf16[4,16,64], index: 0, kind: input, shape index: {}]
  %s1 = inlined_call_operand.vmem [shape: bf16[64,64], index: 1, kind: input, shape index: {}]
  %s2 = inlined_call_operand.vmem [shape: bf16[64,64], index: 2, kind: input, shape index: {}]
  %s3 = inlined_call_operand.vmem [shape: bf16[4,16,64], index: 3, kind: output, shape index: {}]
  %s4 = sld [smem:[#allocation0]]
  $region22: #{encoder_forward.12} parent=0
    _
  %s6 = ssub.s32 1, %s4
  %s7 = scalar_select 0, %s6, %s4
  // Predicated region
  $region2: #{encoder_forward.12} parent=0 // pred_check
    _
  $region3: #{encoder_forward.12} parent=0 // pred_check_branch
    %9 = sbr.rel (0) target = $region5
  $region4: #{encoder_forward.12} parent=0 // pred_region
    _
  $region5: #{encoder_forward.12} parent=0 // pred_fallthru
    _
  // Predicated region
  $region6: #{encoder_forward.12} parent=0 // pred_check
    _
  $region7: #{encoder_forward.12} parent=0 // pred_check_branch
    %11 = sbr.rel (0) target = $region9
  $region8: #{encoder_forward.12} parent=0 // pred_region
    _
  $region9: #{encoder_forward.12} parent=0 // pred_fallthru
    _
  // Predicated region
  $region10: #{encoder_forward.12} parent=0 // pred_check
    _
  $region11: #{encoder_forward.12} parent=0 // pred_check_branch
    %13 = sbr.rel (0) target = $region13
  $region12: #{encoder_forward.12} parent=0 // pred_region
    _
  $region13: #{encoder_forward.12} parent=0 // pred_fallthru
    _
  %v15 = vld [vmem:[%s0] sm:$0xf]
  %v16 = vld [vmem:[%s0 + $0x4] sm:$0xf]
  %v17 = vld [vmem:[%s0 + $0x8] sm:$0xf]
  %v18 = vld [vmem:[%s0 + $0xc] sm:$0xf]
  %v19 = vld [vmem:[%s0 + $0x10] sm:$0xf]
  %v20 = vld [vmem:[%s0 + $0x14] sm:$0xf]
  %v21 = vld [vmem:[%s0 + $0x18] sm:$0xf]
  %v22 = vld [vmem:[%s0 + $0x1c] sm:$0xf]
  %v23 = vld [vmem:[%s1] sm:$0xf]
  %v24 = vld [vmem:[%s1 + $0x4] sm:$0xf]
  %v25 = vld [vmem:[%s1 + $0x8] sm:$0xf]
  %v26 = vld [vmem:[%s1 + $0xc] sm:$0xf]
  %v27 = vld [vmem:[%s1 + $0x10] sm:$0xf]
  %v28 = vld [vmem:[%s1 + $0x14] sm:$0xf]
  %v29 = vld [vmem:[%s1 + $0x18] sm:$0xf]
  %v30 = vld [vmem:[%s1 + $0x1c] sm:$0xf]
  %v39 = vunpack.c.l.b16 %v15
  %v40 = vunpack.c.l.b16 %v16
  %v41 = vunpack.c.l.b16 %v17
  %v42 = vunpack.c.l.b16 %v18
  %v43 = vunpack.c.l.b16 %v19
  %v44 = vunpack.c.l.b16 %v20
  %v45 = vunpack.c.l.b16 %v21
  %v46 = vunpack.c.l.b16 %v22
  %v47 = vpack.c.b16 %v40, %v39
  %v48 = vpack.c.b16 %v42, %v41
  %v49 = vpack.c.b16 %v44, %v43
  %v50 = vpack.c.b16 %v46, %v45
  %v59 = vunpack.c.l.b16 %v23
  %v60 = vunpack.c.l.b16 %v24
  %v61 = vunpack.c.l.b16 %v25
  %v62 = vunpack.c.l.b16 %v26
  %v63 = vunpack.c.l.b16 %v27
  %v64 = vunpack.c.l.b16 %v28
  %v65 = vunpack.c.l.b16 %v29
  %v66 = vunpack.c.l.b16 %v30
  %v67 = vpack.c.b16 %v60, %v59
  %v68 = vpack.c.b16 %v62, %v61
  %v69 = vpack.c.b16 %v64, %v63
  %v70 = vpack.c.b16 %v66, %v65
  %vm75 = vcmask 523264
  %v77 = vsel %vm75, %v47, 0
  %v80 = vsel %vm75, %v48, 0
  %v83 = vsel %vm75, %v49, 0
  %v86 = vsel %vm75, %v50, 0
  %88 = vmatprep.subr.bf16.mxu0 0
  %89 = vmatpush1.bf16.msra.mxu0 %v67
  %90 = vmatprep.subr.bf16.mxu0 0
  %91 = vmatpush1.bf16.msra.mxu0 %v68
  %92 = vmatprep.subr.bf16.mxu0 0
  %93 = vmatpush1.bf16.msra.mxu0 %v69
  %94 = vmatprep.subr.bf16.mxu0 0
  %95 = vmatpush1.bf16.msra.mxu0 %v70
  %96 = vmatprep.subr.bf16.mxu0 0
  %97 = vmatpush1.bf16.msra.mxu0 0
  %98 = vmatprep.subr.bf16.mxu0 0
  %99 = vmatpush1.bf16.msra.mxu0 0
  %100 = vmatprep.subr.bf16.mxu0 0
  %101 = vmatpush1.bf16.msra.mxu0 0
  %102 = vmatprep.subr.bf16.mxu0 0
  %103 = vmatpush1.bf16.msra.mxu0 0
  %104 = vmatprep.subr.bf16.mxu0 0
  %105 = vmatpush1.bf16.msra.mxu0 0
  %106 = vmatprep.subr.bf16.mxu0 0
  %107 = vmatpush1.bf16.msra.mxu0 0
  %108 = vmatprep.subr.bf16.mxu0 0
  %109 = vmatpush1.bf16.msra.mxu0 0
  %110 = vmatprep.subr.bf16.mxu0 0
  %111 = vmatpush1.bf16.msra.mxu0 0
  %112 = vmatprep.subr.bf16.mxu0 0
  %113 = vmatpush1.bf16.msra.mxu0 0
  %114 = vmatprep.subr.bf16.mxu0 0
  %115 = vmatpush1.bf16.msra.mxu0 0
  %116 = vmatprep.subr.bf16.mxu0 0
  %117 = vmatpush1.bf16.msra.mxu0 0
  %118 = vmatprep.subr.bf16.mxu0 0
  %119 = vmatpush1.bf16.msra.mxu0 0
  %120 = vmatprep.mubr.bf16.mxu0 0
  %121 = vmatmul.mubr.bf16.gmra.mrb[0].mxu0 %v77
  %v122 = vpop.f32.mrb[0].mxu0
  %v123 = vadd.f32 0.0, %v122
  %v124 = vpop.f32.mrb[0].mxu0
  %v125 = vpop.f32.mrb[0].mxu0
  %v126 = vadd.f32 0.0, %v125
  %v127 = vpop.f32.mrb[0].mxu0
  %128 = vmatprep.mubr.bf16.mxu0 0
  %129 = vmatmul.mubr.bf16.gmra.mrb[0].mxu0 %v80
  %v130 = vpop.f32.mrb[0].mxu0
  %v131 = vadd.f32 0.0, %v130
  %v132 = vpop.f32.mrb[0].mxu0
  %v133 = vpop.f32.mrb[0].mxu0
  %v134 = vadd.f32 0.0, %v133
  %v135 = vpop.f32.mrb[0].mxu0
  %136 = vmatprep.mubr.bf16.mxu0 0
  %137 = vmatmul.mubr.bf16.gmra.mrb[0].mxu0 %v83
  %v138 = vpop.f32.mrb[0].mxu0
  %v139 = vadd.f32 0.0, %v138
  %v140 = vpop.f32.mrb[0].mxu0
  %v141 = vpop.f32.mrb[0].mxu0
  %v142 = vadd.f32 0.0, %v141
  %v143 = vpop.f32.mrb[0].mxu0
  %144 = vmatprep.mubr.bf16.mxu0 0
  %145 = vmatmul.mubr.bf16.gmra.mrb[0].mxu0 %v86
  %v146 = vpop.f32.mrb[0].mxu0
  %v147 = vadd.f32 0.0, %v146
  %v148 = vpop.f32.mrb[0].mxu0
  %v149 = vpop.f32.mrb[0].mxu0
  %v150 = vadd.f32 0.0, %v149
  %v151 = vpop.f32.mrb[0].mxu0
  %152 = vdwg.mxu0
  %v153 = vld [vmem:[%s2] sm:$0xf]
  %v154 = vld [vmem:[%s2 + $0x4] sm:$0xf]
  %v155 = vld [vmem:[%s2 + $0x8] sm:$0xf]
  %v156 = vld [vmem:[%s2 + $0xc] sm:$0xf]
  %v157 = vld [vmem:[%s2 + $0x10] sm:$0xf]
  %v158 = vld [vmem:[%s2 + $0x14] sm:$0xf]
  %v159 = vld [vmem:[%s2 + $0x18] sm:$0xf]
  %v160 = vld [vmem:[%s2 + $0x1c] sm:$0xf]
  %v169 = vunpack.c.l.b16 %v153
  %v170 = vunpack.c.l.b16 %v154
  %v171 = vunpack.c.l.b16 %v155
  %v172 = vunpack.c.l.b16 %v156
  %v173 = vunpack.c.l.b16 %v157
  %v174 = vunpack.c.l.b16 %v158
  %v175 = vunpack.c.l.b16 %v159
  %v176 = vunpack.c.l.b16 %v160
  %v177 = vpack.c.b16 %v170, %v169
  %v178 = vpack.c.b16 %v172, %v171
  %v179 = vpack.c.b16 %v174, %v173
  %v180 = vpack.c.b16 %v176, %v175
  %185 = vmatprep.subr.bf16.mxu0 0
  %186 = vmatpush1.bf16.msra.mxu0 %v177
  %187 = vmatprep.subr.bf16.mxu0 0
  %188 = vmatpush1.bf16.msra.mxu0 %v178
  %189 = vmatprep.subr.bf16.mxu0 0
  %190 = vmatpush1.bf16.msra.mxu0 %v179
  %191 = vmatprep.subr.bf16.mxu0 0
  %192 = vmatpush1.bf16.msra.mxu0 %v180
  %193 = vmatprep.subr.bf16.mxu0 0
  %194 = vmatpush1.bf16.msra.mxu0 0
  %195 = vmatprep.subr.bf16.mxu0 0
  %196 = vmatpush1.bf16.msra.mxu0 0
  %197 = vmatprep.subr.bf16.mxu0 0
  %198 = vmatpush1.bf16.msra.mxu0 0
  %199 = vmatprep.subr.bf16.mxu0 0
  %200 = vmatpush1.bf16.msra.mxu0 0
  %201 = vmatprep.subr.bf16.mxu0 0
  %202 = vmatpush1.bf16.msra.mxu0 0
  %203 = vmatprep.subr.bf16.mxu0 0
  %204 = vmatpush1.bf16.msra.mxu0 0
  %205 = vmatprep.subr.bf16.mxu0 0
  %206 = vmatpush1.bf16.msra.mxu0 0
  %207 = vmatprep.subr.bf16.mxu0 0
  %208 = vmatpush1.bf16.msra.mxu0 0
  %209 = vmatprep.subr.bf16.mxu0 0
  %210 = vmatpush1.bf16.msra.mxu0 0
  %211 = vmatprep.subr.bf16.mxu0 0
  %212 = vmatpush1.bf16.msra.mxu0 0
  %213 = vmatprep.subr.bf16.mxu0 0
  %214 = vmatpush1.bf16.msra.mxu0 0
  %215 = vmatprep.subr.bf16.mxu0 0
  %216 = vmatpush1.bf16.msra.mxu0 0
  %217 = vmatprep.mubr.bf16.mxu0 0
  %218 = vmatmul.mubr.bf16.gmra.mrb[0].mxu0 %v77
  %v219 = vpop.f32.mrb[0].mxu0
  %v220 = vadd.f32 0.0, %v219
  %v221 = vpop.f32.mrb[0].mxu0
  %v222 = vpop.f32.mrb[0].mxu0
  %v223 = vadd.f32 0.0, %v222
  %v224 = vpop.f32.mrb[0].mxu0
  %225 = vmatprep.mubr.bf16.mxu0 0
  %226 = vmatmul.mubr.bf16.gmra.mrb[0].mxu0 %v80
  %v227 = vpop.f32.mrb[0].mxu0
  %v228 = vadd.f32 0.0, %v227
  %v229 = vpop.f32.mrb[0].mxu0
  %v230 = vpop.f32.mrb[0].mxu0
  %v231 = vadd.f32 0.0, %v230
  %v232 = vpop.f32.mrb[0].mxu0
  %233 = vmatprep.mubr.bf16.mxu0 0
  %234 = vmatmul.mubr.bf16.gmra.mrb[0].mxu0 %v83
  %v235 = vpop.f32.mrb[0].mxu0
  %v236 = vadd.f32 0.0, %v235
  %v237 = vpop.f32.mrb[0].mxu0
  %v238 = vpop.f32.mrb[0].mxu0
  %v239 = vadd.f32 0.0, %v238
  %v240 = vpop.f32.mrb[0].mxu0
  %241 = vmatprep.mubr.bf16.mxu0 0
  %242 = vmatmul.mubr.bf16.gmra.mrb[0].mxu0 %v86
  %v243 = vpop.f32.mrb[0].mxu0
  %v244 = vadd.f32 0.0, %v243
  %v245 = vpop.f32.mrb[0].mxu0
  %v246 = vpop.f32.mrb[0].mxu0
  %v247 = vadd.f32 0.0, %v246
  %v248 = vpop.f32.mrb[0].mxu0
  %249 = vdwg.mxu0
  %v250 = vmax.f32 %v123, %v131
  %v251 = vmax.f32 %v126, %v134
  %v252 = vmax.f32 %v250, %v139
  %v253 = vmax.f32 %v251, %v142
  %v254 = vmax.f32 %v252, %v147
  %v255 = vmax.f32 %v253, %v150
  %v256 = vadd.f32 %v220, %v254
  %v257 = vadd.f32 %v223, %v255
  %v258 = vadd.f32 %v228, %v254
  %v259 = vadd.f32 %v231, %v255
  %v260 = vadd.f32 %v236, %v254
  %v261 = vadd.f32 %v239, %v255
  %v262 = vadd.f32 %v244, %v254
  %v263 = vadd.f32 %v247, %v255
  %v264 = vmax.f32 %v256, 0.0
  %v265 = vmax.f32 %v257, 0.0
  %v266 = vmax.f32 %v258, 0.0
  %v267 = vmax.f32 %v259, 0.0
  %v268 = vmax.f32 %v260, 0.0
  %v269 = vmax.f32 %v261, 0.0
  %v270 = vmax.f32 %v262, 0.0
  %v271 = vmax.f32 %v263, 0.0
  %v272 = vpack.c.bf16 %v265, %v264
  %v273 = vpack.c.bf16 %v267, %v266
  %v274 = vpack.c.bf16 %v269, %v268
  %v275 = vpack.c.bf16 %v271, %v270
  %v280 = vunpack.c.l.b16 %v272
  %v281 = vunpack.c.h.b16 %v272
  %v282 = vunpack.c.l.b16 %v273
  %v283 = vunpack.c.h.b16 %v273
  %v284 = vunpack.c.l.b16 %v274
  %v285 = vunpack.c.h.b16 %v274
  %v286 = vunpack.c.l.b16 %v275
  %v287 = vunpack.c.h.b16 %v275
  %v288 = vpack.c.b16 %v280, %v280
  %v289 = vpack.c.b16 %v281, %v281
  %v290 = vpack.c.b16 %v282, %v282
  %v291 = vpack.c.b16 %v283, %v283
  %v292 = vpack.c.b16 %v284, %v284
  %v293 = vpack.c.b16 %v285, %v285
  %v294 = vpack.c.b16 %v286, %v286
  %v295 = vpack.c.b16 %v287, %v287
  %vm304 = vcmask 519168
  %305 = vst.msk [vmem:[%s3] sm:$0xf] %vm304, %v288
  %306 = vst.msk [vmem:[%s3 + $0x4] sm:$0xf] %vm304, %v289
  %307 = vst.msk [vmem:[%s3 + $0x8] sm:$0xf] %vm304, %v290
  %308 = vst.msk [vmem:[%s3 + $0xc] sm:$0xf] %vm304, %v291
  %309 = vst.msk [vmem:[%s3 + $0x10] sm:$0xf] %vm304, %v292
  %310 = vst.msk [vmem:[%s3 + $0x14] sm:$0xf] %vm304, %v293
  %311 = vst.msk [vmem:[%s3 + $0x18] sm:$0xf] %vm304, %v294
  %312 = vst.msk [vmem:[%s3 + $0x1c] sm:$0xf] %vm304, %v295
  // Predicated region
  $region14: #{encoder_forward.12} parent=0 // pred_check
    _
  $region15: #{encoder_forward.12} parent=0 // pred_check_branch
    %314 = sbr.rel (0) target = $region17
  $region16: #{encoder_forward.12} parent=0 // pred_region
    _
  $region17: #{encoder_forward.12} parent=0 // pred_fallthru
    _
  // Predicated region
  $region18: #{encoder_forward.12} parent=0 // pred_check
    _
  $region19: #{encoder_forward.12} parent=0 // pred_check_branch
    %316 = sbr.rel (0) target = $region21
  $region20: #{encoder_forward.12} parent=0 // pred_region
    _
  $region21: #{encoder_forward.12} parent=0 // pred_fallthru
    _

// kernel: encoder_forward.13
$region0: #{encoder_forward.13}
  #allocation0 [shape = 'u32[]', space=smem, size = 0x4, offset = 0x4, fixed_abs, tag = 'smem constant byte address 0x4 - core index']
  #allocation1 [shape = 'u32[144,128]{1,0:T(1,128)}', space=vmem, size = 0x12000, scoped, tag = 'internal scratch']
  %s0 = inlined_call_operand.vmem [shape: bf16[4,16,64], index: 0, kind: input, shape index: {}]
  %s1 = inlined_call_operand.vmem [shape: bf16[64,128], index: 1, kind: input, shape index: {}]
  %s2 = inlined_call_operand.vmem [shape: bf16[64,128], index: 2, kind: input, shape index: {}]
  %s3 = inlined_call_operand.vmem [shape: bf16[4,16,128], index: 3, kind: output, shape index: {}]
  %s4 = sld [smem:[#allocation0]]
  $region22: #{encoder_forward.13} parent=0
    _
  %s6 = ssub.s32 1, %s4
  %s7 = scalar_select 0, %s6, %s4
  // Predicated region
  $region2: #{encoder_forward.13} parent=0 // pred_check
    _
  $region3: #{encoder_forward.13} parent=0 // pred_check_branch
    %9 = sbr.rel (0) target = $region5
  $region4: #{encoder_forward.13} parent=0 // pred_region
    _
  $region5: #{encoder_forward.13} parent=0 // pred_fallthru
    _
  // Predicated region
  $region6: #{encoder_forward.13} parent=0 // pred_check
    _
  $region7: #{encoder_forward.13} parent=0 // pred_check_branch
    %11 = sbr.rel (0) target = $region9
  $region8: #{encoder_forward.13} parent=0 // pred_region
    _
  $region9: #{encoder_forward.13} parent=0 // pred_fallthru
    _
  // Predicated region
  $region10: #{encoder_forward.13} parent=0 // pred_check
    _
  $region11: #{encoder_forward.13} parent=0 // pred_check_branch
    %13 = sbr.rel (0) target = $region13
  $region12: #{encoder_forward.13} parent=0 // pred_region
    _
  $region13: #{encoder_forward.13} parent=0 // pred_fallthru
    _
  %v15 = vld [vmem:[%s0] sm:$0xf]
  %v16 = vld [vmem:[%s0 + $0x4] sm:$0xf]
  %v17 = vld [vmem:[%s0 + $0x8] sm:$0xf]
  %v18 = vld [vmem:[%s0 + $0xc] sm:$0xf]
  %v19 = vld [vmem:[%s0 + $0x10] sm:$0xf]
  %v20 = vld [vmem:[%s0 + $0x14] sm:$0xf]
  %v21 = vld [vmem:[%s0 + $0x18] sm:$0xf]
  %v22 = vld [vmem:[%s0 + $0x1c] sm:$0xf]
  %v23 = vld [vmem:[%s1] sm:$0xf]
  %v24 = vld [vmem:[%s1 + $0x4] sm:$0xf]
  %v25 = vld [vmem:[%s1 + $0x8] sm:$0xf]
  %v26 = vld [vmem:[%s1 + $0xc] sm:$0xf]
  %v27 = vld [vmem:[%s1 + $0x10] sm:$0xf]
  %v28 = vld [vmem:[%s1 + $0x14] sm:$0xf]
  %v29 = vld [vmem:[%s1 + $0x18] sm:$0xf]
  %v30 = vld [vmem:[%s1 + $0x1c] sm:$0xf]
  %v39 = vunpack.c.l.b16 %v15
  %v40 = vunpack.c.l.b16 %v16
  %v41 = vunpack.c.l.b16 %v17
  %v42 = vunpack.c.l.b16 %v18
  %v43 = vunpack.c.l.b16 %v19
  %v44 = vunpack.c.l.b16 %v20
  %v45 = vunpack.c.l.b16 %v21
  %v46 = vunpack.c.l.b16 %v22
  %v47 = vpack.c.b16 %v40, %v39
  %v48 = vpack.c.b16 %v42, %v41
  %v49 = vpack.c.b16 %v44, %v43
  %v50 = vpack.c.b16 %v46, %v45
  %v59 = vunpack.c.l.b16 %v23
  %v60 = vunpack.c.l.b16 %v24
  %v61 = vunpack.c.l.b16 %v25
  %v62 = vunpack.c.l.b16 %v26
  %v63 = vunpack.c.l.b16 %v27
  %v64 = vunpack.c.l.b16 %v28
  %v65 = vunpack.c.l.b16 %v29
  %v66 = vunpack.c.l.b16 %v30
  %v67 = vpack.c.b16 %v60, %v59
  %v68 = vpack.c.b16 %v62, %v61
  %v69 = vpack.c.b16 %v64, %v63
  %v70 = vpack.c.b16 %v66, %v65
  %vm75 = vcmask 523264
  %v77 = vsel %vm75, %v47, 0
  %v80 = vsel %vm75, %v48, 0
  %v83 = vsel %vm75, %v49, 0
  %v86 = vsel %vm75, %v50, 0
  %88 = vmatprep.subr.bf16.mxu0 0
  %89 = vmatpush1.bf16.msra.mxu0 %v67
  %90 = vmatprep.subr.bf16.mxu0 0
  %91 = vmatpush1.bf16.msra.mxu0 %v68
  %92 = vmatprep.subr.bf16.mxu0 0
  %93 = vmatpush1.bf16.msra.mxu0 %v69
  %94 = vmatprep.subr.bf16.mxu0 0
  %95 = vmatpush1.bf16.msra.mxu0 %v70
  %96 = vmatprep.subr.bf16.mxu0 0
  %97 = vmatpush1.bf16.msra.mxu0 0
  %98 = vmatprep.subr.bf16.mxu0 0
  %99 = vmatpush1.bf16.msra.mxu0 0
  %100 = vmatprep.subr.bf16.mxu0 0
  %101 = vmatpush1.bf16.msra.mxu0 0
  %102 = vmatprep.subr.bf16.mxu0 0
  %103 = vmatpush1.bf16.msra.mxu0 0
  %104 = vmatprep.subr.bf16.mxu0 0
  %105 = vmatpush1.bf16.msra.mxu0 0
  %106 = vmatprep.subr.bf16.mxu0 0
  %107 = vmatpush1.bf16.msra.mxu0 0
  %108 = vmatprep.subr.bf16.mxu0 0
  %109 = vmatpush1.bf16.msra.mxu0 0
  %110 = vmatprep.subr.bf16.mxu0 0
  %111 = vmatpush1.bf16.msra.mxu0 0
  %112 = vmatprep.subr.bf16.mxu0 0
  %113 = vmatpush1.bf16.msra.mxu0 0
  %114 = vmatprep.subr.bf16.mxu0 0
  %115 = vmatpush1.bf16.msra.mxu0 0
  %116 = vmatprep.subr.bf16.mxu0 0
  %117 = vmatpush1.bf16.msra.mxu0 0
  %118 = vmatprep.subr.bf16.mxu0 0
  %119 = vmatpush1.bf16.msra.mxu0 0
  %120 = vmatprep.mubr.bf16.mxu0 0
  %121 = vmatmul.mubr.bf16.gmra.mrb[0].mxu0 %v77
  %v122 = vpop.f32.mrb[0].mxu0
  %v123 = vadd.f32 0.0, %v122
  %v124 = vpop.f32.mrb[0].mxu0
  %v125 = vpop.f32.mrb[0].mxu0
  %v126 = vadd.f32 0.0, %v125
  %v127 = vpop.f32.mrb[0].mxu0
  %128 = vmatprep.mubr.bf16.mxu0 0
  %129 = vmatmul.mubr.bf16.gmra.mrb[0].mxu0 %v80
  %v130 = vpop.f32.mrb[0].mxu0
  %v131 = vadd.f32 0.0, %v130
  %v132 = vpop.f32.mrb[0].mxu0
  %v133 = vpop.f32.mrb[0].mxu0
  %v134 = vadd.f32 0.0, %v133
  %v135 = vpop.f32.mrb[0].mxu0
  %136 = vmatprep.mubr.bf16.mxu0 0
  %137 = vmatmul.mubr.bf16.gmra.mrb[0].mxu0 %v83
  %v138 = vpop.f32.mrb[0].mxu0
  %v139 = vadd.f32 0.0, %v138
  %v140 = vpop.f32.mrb[0].mxu0
  %v141 = vpop.f32.mrb[0].mxu0
  %v142 = vadd.f32 0.0, %v141
  %v143 = vpop.f32.mrb[0].mxu0
  %144 = vmatprep.mubr.bf16.mxu0 0
  %145 = vmatmul.mubr.bf16.gmra.mrb[0].mxu0 %v86
  %v146 = vpop.f32.mrb[0].mxu0
  %v147 = vadd.f32 0.0, %v146
  %v148 = vpop.f32.mrb[0].mxu0
  %v149 = vpop.f32.mrb[0].mxu0
  %v150 = vadd.f32 0.0, %v149
  %v151 = vpop.f32.mrb[0].mxu0
  %152 = vdwg.mxu0
  %v153 = vld [vmem:[%s2] sm:$0xf]
  %v154 = vld [vmem:[%s2 + $0x4] sm:$0xf]
  %v155 = vld [vmem:[%s2 + $0x8] sm:$0xf]
  %v156 = vld [vmem:[%s2 + $0xc] sm:$0xf]
  %v157 = vld [vmem:[%s2 + $0x10] sm:$0xf]
  %v158 = vld [vmem:[%s2 + $0x14] sm:$0xf]
  %v159 = vld [vmem:[%s2 + $0x18] sm:$0xf]
  %v160 = vld [vmem:[%s2 + $0x1c] sm:$0xf]
  %v169 = vunpack.c.l.b16 %v153
  %v170 = vunpack.c.l.b16 %v154
  %v171 = vunpack.c.l.b16 %v155
  %v172 = vunpack.c.l.b16 %v156
  %v173 = vunpack.c.l.b16 %v157
  %v174 = vunpack.c.l.b16 %v158
  %v175 = vunpack.c.l.b16 %v159
  %v176 = vunpack.c.l.b16 %v160
  %v177 = vpack.c.b16 %v170, %v169
  %v178 = vpack.c.b16 %v172, %v171
  %v179 = vpack.c.b16 %v174, %v173
  %v180 = vpack.c.b16 %v176, %v175
  %185 = vmatprep.subr.bf16.mxu0 0
  %186 = vmatpush1.bf16.msra.mxu0 %v177
  %187 = vmatprep.subr.bf16.mxu0 0
  %188 = vmatpush1.bf16.msra.mxu0 %v178
  %189 = vmatprep.subr.bf16.mxu0 0
  %190 = vmatpush1.bf16.msra.mxu0 %v179
  %191 = vmatprep.subr.bf16.mxu0 0
  %192 = vmatpush1.bf16.msra.mxu0 %v180
  %193 = vmatprep.subr.bf16.mxu0 0
  %194 = vmatpush1.bf16.msra.mxu0 0
  %195 = vmatprep.subr.bf16.mxu0 0
  %196 = vmatpush1.bf16.msra.mxu0 0
  %197 = vmatprep.subr.bf16.mxu0 0
  %198 = vmatpush1.bf16.msra.mxu0 0
  %199 = vmatprep.subr.bf16.mxu0 0
  %200 = vmatpush1.bf16.msra.mxu0 0
  %201 = vmatprep.subr.bf16.mxu0 0
  %202 = vmatpush1.bf16.msra.mxu0 0
  %203 = vmatprep.subr.bf16.mxu0 0
  %204 = vmatpush1.bf16.msra.mxu0 0
  %205 = vmatprep.subr.bf16.mxu0 0
  %206 = vmatpush1.bf16.msra.mxu0 0
  %207 = vmatprep.subr.bf16.mxu0 0
  %208 = vmatpush1.bf16.msra.mxu0 0
  %209 = vmatprep.subr.bf16.mxu0 0
  %210 = vmatpush1.bf16.msra.mxu0 0
  %211 = vmatprep.subr.bf16.mxu0 0
  %212 = vmatpush1.bf16.msra.mxu0 0
  %213 = vmatprep.subr.bf16.mxu0 0
  %214 = vmatpush1.bf16.msra.mxu0 0
  %215 = vmatprep.subr.bf16.mxu0 0
  %216 = vmatpush1.bf16.msra.mxu0 0
  %217 = vmatprep.mubr.bf16.mxu0 0
  %218 = vmatmul.mubr.bf16.gmra.mrb[0].mxu0 %v77
  %v219 = vpop.f32.mrb[0].mxu0
  %v220 = vadd.f32 0.0, %v219
  %v221 = vpop.f32.mrb[0].mxu0
  %v222 = vpop.f32.mrb[0].mxu0
  %v223 = vadd.f32 0.0, %v222
  %v224 = vpop.f32.mrb[0].mxu0
  %225 = vmatprep.mubr.bf16.mxu0 0
  %226 = vmatmul.mubr.bf16.gmra.mrb[0].mxu0 %v80
  %v227 = vpop.f32.mrb[0].mxu0
  %v228 = vadd.f32 0.0, %v227
  %v229 = vpop.f32.mrb[0].mxu0
  %v230 = vpop.f32.mrb[0].mxu0
  %v231 = vadd.f32 0.0, %v230
  %v232 = vpop.f32.mrb[0].mxu0
  %233 = vmatprep.mubr.bf16.mxu0 0
  %234 = vmatmul.mubr.bf16.gmra.mrb[0].mxu0 %v83
  %v235 = vpop.f32.mrb[0].mxu0
  %v236 = vadd.f32 0.0, %v235
  %v237 = vpop.f32.mrb[0].mxu0
  %v238 = vpop.f32.mrb[0].mxu0
  %v239 = vadd.f32 0.0, %v238
  %v240 = vpop.f32.mrb[0].mxu0
  %241 = vmatprep.mubr.bf16.mxu0 0
  %242 = vmatmul.mubr.bf16.gmra.mrb[0].mxu0 %v86
  %v243 = vpop.f32.mrb[0].mxu0
  %v244 = vadd.f32 0.0, %v243
  %v245 = vpop.f32.mrb[0].mxu0
  %v246 = vpop.f32.mrb[0].mxu0
  %v247 = vadd.f32 0.0, %v246
  %v248 = vpop.f32.mrb[0].mxu0
  %249 = vdwg.mxu0
  %v250 = vmax.f32 %v123, %v131
  %v251 = vmax.f32 %v126, %v134
  %v252 = vmax.f32 %v250, %v139
  %v253 = vmax.f32 %v251, %v142
  %v254 = vmax.f32 %v252, %v147
  %v255 = vmax.f32 %v253, %v150
  %v256 = vadd.f32 %v220, %v254
  %v257 = vadd.f32 %v223, %v255
  %v258 = vadd.f32 %v228, %v254
  %v259 = vadd.f32 %v231, %v255
  %v260 = vadd.f32 %v236, %v254
  %v261 = vadd.f32 %v239, %v255
  %v262 = vadd.f32 %v244, %v254
  %v263 = vadd.f32 %v247, %v255
  %v264 = vmax.f32 %v256, 0.0
  %v265 = vmax.f32 %v257, 0.0
  %v266 = vmax.f32 %v258, 0.0
  %v267 = vmax.f32 %v259, 0.0
  %v268 = vmax.f32 %v260, 0.0
  %v269 = vmax.f32 %v261, 0.0
  %v270 = vmax.f32 %v262, 0.0
  %v271 = vmax.f32 %v263, 0.0
  %v272 = vpack.c.bf16 %v265, %v264
  %v273 = vpack.c.bf16 %v267, %v266
  %v274 = vpack.c.bf16 %v269, %v268
  %v275 = vpack.c.bf16 %v271, %v270
  %v280 = vunpack.c.l.b16 %v272
  %v281 = vunpack.c.h.b16 %v272
  %v282 = vunpack.c.l.b16 %v273
  %v283 = vunpack.c.h.b16 %v273
  %v284 = vunpack.c.l.b16 %v274
  %v285 = vunpack.c.h.b16 %v274
  %v286 = vunpack.c.l.b16 %v275
  %v287 = vunpack.c.h.b16 %v275
  %v288 = vpack.c.b16 %v280, %v280
  %v289 = vpack.c.b16 %v281, %v281
  %v290 = vpack.c.b16 %v282, %v282
  %v291 = vpack.c.b16 %v283, %v283
  %v292 = vpack.c.b16 %v284, %v284
  %v293 = vpack.c.b16 %v285, %v285
  %v294 = vpack.c.b16 %v286, %v286
  %v295 = vpack.c.b16 %v287, %v287
  %304 = vst [vmem:[%s3] sm:$0xf] %v288
  %305 = vst [vmem:[%s3 + $0x4] sm:$0xf] %v289
  %306 = vst [vmem:[%s3 + $0x8] sm:$0xf] %v290
  %307 = vst [vmem:[%s3 + $0xc] sm:$0xf] %v291
  %308 = vst [vmem:[%s3 + $0x10] sm:$0xf] %v292
  %309 = vst [vmem:[%s3 + $0x14] sm:$0xf] %v293
  %310 = vst [vmem:[%s3 + $0x18] sm:$0xf] %v294
  %311 = vst [vmem:[%s3 + $0x1c] sm:$0xf] %v295
  // Predicated region
  $region14: #{encoder_forward.13} parent=0 // pred_check
    _
  $region15: #{encoder_forward.13} parent=0 // pred_check_branch
    %313 = sbr.rel (0) target = $region17
  $region16: #{encoder_forward.13} parent=0 // pred_region
    _
  $region17: #{encoder_forward.13} parent=0 // pred_fallthru
    _
  // Predicated region
  $region18: #{encoder_forward.13} parent=0 // pred_check
    _
  $region19: #{encoder_forward.13} parent=0 // pred_check_branch
    %315 = sbr.rel (0) target = $region21
  $region20: #{encoder_forward.13} parent=0 // pred_region
    _
  $region21: #{encoder_forward.13} parent=0 // pred_fallthru
    _

// kernel: encoder_forward.14
$region0: #{encoder_forward.14}
  #allocation0 [shape = 'u32[]', space=smem, size = 0x4, offset = 0x4, fixed_abs, tag = 'smem constant byte address 0x4 - core index']
  #allocation1 [shape = 'u32[144,128]{1,0:T(1,128)}', space=vmem, size = 0x12000, scoped, tag = 'internal scratch']
  %s0 = inlined_call_operand.vmem [shape: bf16[4,16,128], index: 0, kind: input, shape index: {}]
  %s1 = inlined_call_operand.vmem [shape: bf16[128,256], index: 1, kind: input, shape index: {}]
  %s2 = inlined_call_operand.vmem [shape: bf16[128,256], index: 2, kind: input, shape index: {}]
  %s3 = inlined_call_operand.vmem [shape: bf16[4,16,256], index: 3, kind: output, shape index: {}]
  %s4 = sld [smem:[#allocation0]]
  $region22: #{encoder_forward.14} parent=0
    _
  %s6 = ssub.s32 1, %s4
  %s7 = scalar_select 0, %s6, %s4
  // Predicated region
  $region2: #{encoder_forward.14} parent=0 // pred_check
    _
  $region3: #{encoder_forward.14} parent=0 // pred_check_branch
    %9 = sbr.rel (0) target = $region5
  $region4: #{encoder_forward.14} parent=0 // pred_region
    _
  $region5: #{encoder_forward.14} parent=0 // pred_fallthru
    _
  // Predicated region
  $region6: #{encoder_forward.14} parent=0 // pred_check
    _
  $region7: #{encoder_forward.14} parent=0 // pred_check_branch
    %11 = sbr.rel (0) target = $region9
  $region8: #{encoder_forward.14} parent=0 // pred_region
    _
  $region9: #{encoder_forward.14} parent=0 // pred_fallthru
    _
  // Predicated region
  $region10: #{encoder_forward.14} parent=0 // pred_check
    _
  $region11: #{encoder_forward.14} parent=0 // pred_check_branch
    %13 = sbr.rel (0) target = $region13
  $region12: #{encoder_forward.14} parent=0 // pred_region
    _
  $region13: #{encoder_forward.14} parent=0 // pred_fallthru
    _
  %v15 = vld [vmem:[%s0] sm:$0xf]
  %v16 = vld [vmem:[%s0 + $0x4] sm:$0xf]
  %v17 = vld [vmem:[%s0 + $0x8] sm:$0xf]
  %v18 = vld [vmem:[%s0 + $0xc] sm:$0xf]
  %v19 = vld [vmem:[%s0 + $0x10] sm:$0xf]
  %v20 = vld [vmem:[%s0 + $0x14] sm:$0xf]
  %v21 = vld [vmem:[%s0 + $0x18] sm:$0xf]
  %v22 = vld [vmem:[%s0 + $0x1c] sm:$0xf]
  %v23 = vld [vmem:[%s1] sm:$0xff]
  %v24 = vld [vmem:[%s1 + $0x8] sm:$0xff]
  %v25 = vld [vmem:[%s1 + $0x10] sm:$0xff]
  %v26 = vld [vmem:[%s1 + $0x18] sm:$0xff]
  %v27 = vld [vmem:[%s1 + $0x20] sm:$0xff]
  %v28 = vld [vmem:[%s1 + $0x28] sm:$0xff]
  %v29 = vld [vmem:[%s1 + $0x30] sm:$0xff]
  %v30 = vld [vmem:[%s1 + $0x38] sm:$0xff]
  %v31 = vld [vmem:[%s1 + $0x40] sm:$0xff]
  %v32 = vld [vmem:[%s1 + $0x48] sm:$0xff]
  %v33 = vld [vmem:[%s1 + $0x50] sm:$0xff]
  %v34 = vld [vmem:[%s1 + $0x58] sm:$0xff]
  %v35 = vld [vmem:[%s1 + $0x60] sm:$0xff]
  %v36 = vld [vmem:[%s1 + $0x68] sm:$0xff]
  %v37 = vld [vmem:[%s1 + $0x70] sm:$0xff]
  %v38 = vld [vmem:[%s1 + $0x78] sm:$0xff]
  %v47 = vunpack.c.l.b16 %v15
  %v48 = vunpack.c.l.b16 %v16
  %v49 = vunpack.c.l.b16 %v17
  %v50 = vunpack.c.l.b16 %v18
  %v51 = vunpack.c.l.b16 %v19
  %v52 = vunpack.c.l.b16 %v20
  %v53 = vunpack.c.l.b16 %v21
  %v54 = vunpack.c.l.b16 %v22
  %v55 = vpack.c.b16 %v48, %v47
  %v56 = vpack.c.b16 %v50, %v49
  %v57 = vpack.c.b16 %v52, %v51
  %v58 = vpack.c.b16 %v54, %v53
  %v79 = vunpack.c.l.b16 %v23
  %v80 = vunpack.c.h.b16 %v23
  %v81 = vunpack.c.l.b16 %v24
  %v82 = vunpack.c.h.b16 %v24
  %v83 = vunpack.c.l.b16 %v25
  %v84 = vunpack.c.h.b16 %v25
  %v85 = vunpack.c.l.b16 %v26
  %v86 = vunpack.c.h.b16 %v26
  %v87 = vunpack.c.l.b16 %v27
  %v88 = vunpack.c.h.b16 %v27
  %v89 = vunpack.c.l.b16 %v28
  %v90 = vunpack.c.h.b16 %v28
  %v91 = vunpack.c.l.b16 %v29
  %v92 = vunpack.c.h.b16 %v29
  %v93 = vunpack.c.l.b16 %v30
  %v94 = vunpack.c.h.b16 %v30
  %v95 = vunpack.c.l.b16 %v31
  %v96 = vunpack.c.h.b16 %v31
  %v97 = vunpack.c.l.b16 %v32
  %v98 = vunpack.c.h.b16 %v32
  %v99 = vunpack.c.l.b16 %v33
  %v100 = vunpack.c.h.b16 %v33
  %v101 = vunpack.c.l.b16 %v34
  %v102 = vunpack.c.h.b16 %v34
  %v103 = vunpack.c.l.b16 %v35
  %v104 = vunpack.c.h.b16 %v35
  %v105 = vunpack.c.l.b16 %v36
  %v106 = vunpack.c.h.b16 %v36
  %v107 = vunpack.c.l.b16 %v37
  %v108 = vunpack.c.h.b16 %v37
  %v109 = vunpack.c.l.b16 %v38
  %v110 = vunpack.c.h.b16 %v38
  %v111 = vpack.c.b16 %v81, %v79
  %v112 = vpack.c.b16 %v82, %v80
  %v113 = vpack.c.b16 %v85, %v83
  %v114 = vpack.c.b16 %v86, %v84
  %v115 = vpack.c.b16 %v89, %v87
  %v116 = vpack.c.b16 %v90, %v88
  %v117 = vpack.c.b16 %v93, %v91
  %v118 = vpack.c.b16 %v94, %v92
  %v119 = vpack.c.b16 %v97, %v95
  %v120 = vpack.c.b16 %v98, %v96
  %v121 = vpack.c.b16 %v101, %v99
  %v122 = vpack.c.b16 %v102, %v100
  %v123 = vpack.c.b16 %v105, %v103
  %v124 = vpack.c.b16 %v106, %v104
  %v125 = vpack.c.b16 %v109, %v107
  %v126 = vpack.c.b16 %v110, %v108
  %143 = vmatprep.subr.bf16.mxu0 %v112
  %144 = vmatpush1.bf16.msra.mxu0 %v111
  %145 = vmatprep.subr.bf16.mxu0 %v114
  %146 = vmatpush1.bf16.msra.mxu0 %v113
  %147 = vmatprep.subr.bf16.mxu0 %v116
  %148 = vmatpush1.bf16.msra.mxu0 %v115
  %149 = vmatprep.subr.bf16.mxu0 %v118
  %150 = vmatpush1.bf16.msra.mxu0 %v117
  %151 = vmatprep.subr.bf16.mxu0 %v120
  %152 = vmatpush1.bf16.msra.mxu0 %v119
  %153 = vmatprep.subr.bf16.mxu0 %v122
  %154 = vmatpush1.bf16.msra.mxu0 %v121
  %155 = vmatprep.subr.bf16.mxu0 %v124
  %156 = vmatpush1.bf16.msra.mxu0 %v123
  %157 = vmatprep.subr.bf16.mxu0 %v126
  %158 = vmatpush1.bf16.msra.mxu0 %v125
  %159 = vmatprep.subr.bf16.mxu0 0
  %160 = vmatpush1.bf16.msra.mxu0 0
  %161 = vmatprep.subr.bf16.mxu0 0
  %162 = vmatpush1.bf16.msra.mxu0 0
  %163 = vmatprep.subr.bf16.mxu0 0
  %164 = vmatpush1.bf16.msra.mxu0 0
  %165 = vmatprep.subr.bf16.mxu0 0
  %166 = vmatpush1.bf16.msra.mxu0 0
  %167 = vmatprep.subr.bf16.mxu0 0
  %168 = vmatpush1.bf16.msra.mxu0 0
  %169 = vmatprep.subr.bf16.mxu0 0
  %170 = vmatpush1.bf16.msra.mxu0 0
  %171 = vmatprep.subr.bf16.mxu0 0
  %172 = vmatpush1.bf16.msra.mxu0 0
  %173 = vmatprep.subr.bf16.mxu0 0
  %174 = vmatpush1.bf16.msra.mxu0 0
  %175 = vmatprep.mubr.bf16.mxu0 0
  %176 = vmatmul.mubr.bf16.gmra.mrb[0].mxu0 %v55
  %v177 = vpop.f32.mrb[0].mxu0
  %v178 = vadd.f32 0.0, %v177
  %v179 = vpop.f32.mrb[0].mxu0
  %v180 = vadd.f32 0.0, %v179
  %v181 = vpop.f32.mrb[0].mxu0
  %v182 = vadd.f32 0.0, %v181
  %v183 = vpop.f32.mrb[0].mxu0
  %v184 = vadd.f32 0.0, %v183
  %185 = vmatprep.mubr.bf16.mxu0 0
  %186 = vmatmul.mubr.bf16.gmra.mrb[0].mxu0 %v56
  %v187 = vpop.f32.mrb[0].mxu0
  %v188 = vadd.f32 0.0, %v187
  %v189 = vpop.f32.mrb[0].mxu0
  %v190 = vadd.f32 0.0, %v189
  %v191 = vpop.f32.mrb[0].mxu0
  %v192 = vadd.f32 0.0, %v191
  %v193 = vpop.f32.mrb[0].mxu0
  %v194 = vadd.f32 0.0, %v193
  %195 = vmatprep.mubr.bf16.mxu0 0
  %196 = vmatmul.mubr.bf16.gmra.mrb[0].mxu0 %v57
  %v197 = vpop.f32.mrb[0].mxu0
  %v198 = vadd.f32 0.0, %v197
  %v199 = vpop.f32.mrb[0].mxu0
  %v200 = vadd.f32 0.0, %v199
  %v201 = vpop.f32.mrb[0].mxu0
  %v202 = vadd.f32 0.0, %v201
  %v203 = vpop.f32.mrb[0].mxu0
  %v204 = vadd.f32 0.0, %v203
  %205 = vmatprep.mubr.bf16.mxu0 0
  %206 = vmatmul.mubr.bf16.gmra.mrb[0].mxu0 %v58
  %v207 = vpop.f32.mrb[0].mxu0
  %v208 = vadd.f32 0.0, %v207
  %v209 = vpop.f32.mrb[0].mxu0
  %v210 = vadd.f32 0.0, %v209
  %v211 = vpop.f32.mrb[0].mxu0
  %v212 = vadd.f32 0.0, %v211
  %v213 = vpop.f32.mrb[0].mxu0
  %v214 = vadd.f32 0.0, %v213
  %215 = vdwg.mxu0
  %v216 = vld [vmem:[%s2] sm:$0xff]
  %v217 = vld [vmem:[%s2 + $0x8] sm:$0xff]
  %v218 = vld [vmem:[%s2 + $0x10] sm:$0xff]
  %v219 = vld [vmem:[%s2 + $0x18] sm:$0xff]
  %v220 = vld [vmem:[%s2 + $0x20] sm:$0xff]
  %v221 = vld [vmem:[%s2 + $0x28] sm:$0xff]
  %v222 = vld [vmem:[%s2 + $0x30] sm:$0xff]
  %v223 = vld [vmem:[%s2 + $0x38] sm:$0xff]
  %v224 = vld [vmem:[%s2 + $0x40] sm:$0xff]
  %v225 = vld [vmem:[%s2 + $0x48] sm:$0xff]
  %v226 = vld [vmem:[%s2 + $0x50] sm:$0xff]
  %v227 = vld [vmem:[%s2 + $0x58] sm:$0xff]
  %v228 = vld [vmem:[%s2 + $0x60] sm:$0xff]
  %v229 = vld [vmem:[%s2 + $0x68] sm:$0xff]
  %v230 = vld [vmem:[%s2 + $0x70] sm:$0xff]
  %v231 = vld [vmem:[%s2 + $0x78] sm:$0xff]
  %v248 = vunpack.c.l.b16 %v216
  %v249 = vunpack.c.h.b16 %v216
  %v250 = vunpack.c.l.b16 %v217
  %v251 = vunpack.c.h.b16 %v217
  %v252 = vunpack.c.l.b16 %v218
  %v253 = vunpack.c.h.b16 %v218
  %v254 = vunpack.c.l.b16 %v219
  %v255 = vunpack.c.h.b16 %v219
  %v256 = vunpack.c.l.b16 %v220
  %v257 = vunpack.c.h.b16 %v220
  %v258 = vunpack.c.l.b16 %v221
  %v259 = vunpack.c.h.b16 %v221
  %v260 = vunpack.c.l.b16 %v222
  %v261 = vunpack.c.h.b16 %v222
  %v262 = vunpack.c.l.b16 %v223
  %v263 = vunpack.c.h.b16 %v223
  %v264 = vunpack.c.l.b16 %v224
  %v265 = vunpack.c.h.b16 %v224
  %v266 = vunpack.c.l.b16 %v225
  %v267 = vunpack.c.h.b16 %v225
  %v268 = vunpack.c.l.b16 %v226
  %v269 = vunpack.c.h.b16 %v226
  %v270 = vunpack.c.l.b16 %v227
  %v271 = vunpack.c.h.b16 %v227
  %v272 = vunpack.c.l.b16 %v228
  %v273 = vunpack.c.h.b16 %v228
  %v274 = vunpack.c.l.b16 %v229
  %v275 = vunpack.c.h.b16 %v229
  %v276 = vunpack.c.l.b16 %v230
  %v277 = vunpack.c.h.b16 %v230
  %v278 = vunpack.c.l.b16 %v231
  %v279 = vunpack.c.h.b16 %v231
  %v280 = vpack.c.b16 %v250, %v248
  %v281 = vpack.c.b16 %v251, %v249
  %v282 = vpack.c.b16 %v254, %v252
  %v283 = vpack.c.b16 %v255, %v253
  %v284 = vpack.c.b16 %v258, %v256
  %v285 = vpack.c.b16 %v259, %v257
  %v286 = vpack.c.b16 %v262, %v260
  %v287 = vpack.c.b16 %v263, %v261
  %v288 = vpack.c.b16 %v266, %v264
  %v289 = vpack.c.b16 %v267, %v265
  %v290 = vpack.c.b16 %v270, %v268
  %v291 = vpack.c.b16 %v271, %v269
  %v292 = vpack.c.b16 %v274, %v272
  %v293 = vpack.c.b16 %v275, %v273
  %v294 = vpack.c.b16 %v278, %v276
  %v295 = vpack.c.b16 %v279, %v277
  %312 = vmatprep.subr.bf16.mxu0 %v281
  %313 = vmatpush1.bf16.msra.mxu0 %v280
  %314 = vmatprep.subr.bf16.mxu0 %v283
  %315 = vmatpush1.bf16.msra.mxu0 %v282
  %316 = vmatprep.subr.bf16.mxu0 %v285
  %317 = vmatpush1.bf16.msra.mxu0 %v284
  %318 = vmatprep.subr.bf16.mxu0 %v287
  %319 = vmatpush1.bf16.msra.mxu0 %v286
  %320 = vmatprep.subr.bf16.mxu0 %v289
  %321 = vmatpush1.bf16.msra.mxu0 %v288
  %322 = vmatprep.subr.bf16.mxu0 %v291
  %323 = vmatpush1.bf16.msra.mxu0 %v290
  %324 = vmatprep.subr.bf16.mxu0 %v293
  %325 = vmatpush1.bf16.msra.mxu0 %v292
  %326 = vmatprep.subr.bf16.mxu0 %v295
  %327 = vmatpush1.bf16.msra.mxu0 %v294
  %328 = vmatprep.subr.bf16.mxu0 0
  %329 = vmatpush1.bf16.msra.mxu0 0
  %330 = vmatprep.subr.bf16.mxu0 0
  %331 = vmatpush1.bf16.msra.mxu0 0
  %332 = vmatprep.subr.bf16.mxu0 0
  %333 = vmatpush1.bf16.msra.mxu0 0
  %334 = vmatprep.subr.bf16.mxu0 0
  %335 = vmatpush1.bf16.msra.mxu0 0
  %336 = vmatprep.subr.bf16.mxu0 0
  %337 = vmatpush1.bf16.msra.mxu0 0
  %338 = vmatprep.subr.bf16.mxu0 0
  %339 = vmatpush1.bf16.msra.mxu0 0
  %340 = vmatprep.subr.bf16.mxu0 0
  %341 = vmatpush1.bf16.msra.mxu0 0
  %342 = vmatprep.subr.bf16.mxu0 0
  %343 = vmatpush1.bf16.msra.mxu0 0
  %344 = vmatprep.mubr.bf16.mxu0 0
  %345 = vmatmul.mubr.bf16.gmra.mrb[0].mxu0 %v55
  %v346 = vpop.f32.mrb[0].mxu0
  %v347 = vadd.f32 0.0, %v346
  %v348 = vpop.f32.mrb[0].mxu0
  %v349 = vadd.f32 0.0, %v348
  %v350 = vpop.f32.mrb[0].mxu0
  %v351 = vadd.f32 0.0, %v350
  %v352 = vpop.f32.mrb[0].mxu0
  %v353 = vadd.f32 0.0, %v352
  %354 = vmatprep.mubr.bf16.mxu0 0
  %355 = vmatmul.mubr.bf16.gmra.mrb[0].mxu0 %v56
  %v356 = vpop.f32.mrb[0].mxu0
  %v357 = vadd.f32 0.0, %v356
  %v358 = vpop.f32.mrb[0].mxu0
  %v359 = vadd.f32 0.0, %v358
  %v360 = vpop.f32.mrb[0].mxu0
  %v361 = vadd.f32 0.0, %v360
  %v362 = vpop.f32.mrb[0].mxu0
  %v363 = vadd.f32 0.0, %v362
  %364 = vmatprep.mubr.bf16.mxu0 0
  %365 = vmatmul.mubr.bf16.gmra.mrb[0].mxu0 %v57
  %v366 = vpop.f32.mrb[0].mxu0
  %v367 = vadd.f32 0.0, %v366
  %v368 = vpop.f32.mrb[0].mxu0
  %v369 = vadd.f32 0.0, %v368
  %v370 = vpop.f32.mrb[0].mxu0
  %v371 = vadd.f32 0.0, %v370
  %v372 = vpop.f32.mrb[0].mxu0
  %v373 = vadd.f32 0.0, %v372
  %374 = vmatprep.mubr.bf16.mxu0 0
  %375 = vmatmul.mubr.bf16.gmra.mrb[0].mxu0 %v58
  %v376 = vpop.f32.mrb[0].mxu0
  %v377 = vadd.f32 0.0, %v376
  %v378 = vpop.f32.mrb[0].mxu0
  %v379 = vadd.f32 0.0, %v378
  %v380 = vpop.f32.mrb[0].mxu0
  %v381 = vadd.f32 0.0, %v380
  %v382 = vpop.f32.mrb[0].mxu0
  %v383 = vadd.f32 0.0, %v382
  %384 = vdwg.mxu0
  %v385 = vmax.f32 %v178, %v188
  %v386 = vmax.f32 %v180, %v190
  %v387 = vmax.f32 %v182, %v192
  %v388 = vmax.f32 %v184, %v194
  %v389 = vmax.f32 %v385, %v198
  %v390 = vmax.f32 %v386, %v200
  %v391 = vmax.f32 %v387, %v202
  %v392 = vmax.f32 %v388, %v204
  %v393 = vmax.f32 %v389, %v208
  %v394 = vmax.f32 %v390, %v210
  %v395 = vmax.f32 %v391, %v212
  %v396 = vmax.f32 %v392, %v214
  %v397 = vadd.f32 %v347, %v393
  %v398 = vadd.f32 %v349, %v394
  %v399 = vadd.f32 %v351, %v395
  %v400 = vadd.f32 %v353, %v396
  %v401 = vadd.f32 %v357, %v393
  %v402 = vadd.f32 %v359, %v394
  %v403 = vadd.f32 %v361, %v395
  %v404 = vadd.f32 %v363, %v396
  %v405 = vadd.f32 %v367, %v393
  %v406 = vadd.f32 %v369, %v394
  %v407 = vadd.f32 %v371, %v395
  %v408 = vadd.f32 %v373, %v396
  %v409 = vadd.f32 %v377, %v393
  %v410 = vadd.f32 %v379, %v394
  %v411 = vadd.f32 %v381, %v395
  %v412 = vadd.f32 %v383, %v396
  %v413 = vmax.f32 %v397, 0.0
  %v414 = vmax.f32 %v398, 0.0
  %v415 = vmax.f32 %v399, 0.0
  %v416 = vmax.f32 %v400, 0.0
  %v417 = vmax.f32 %v401, 0.0
  %v418 = vmax.f32 %v402, 0.0
  %v419 = vmax.f32 %v403, 0.0
  %v420 = vmax.f32 %v404, 0.0
  %v421 = vmax.f32 %v405, 0.0
  %v422 = vmax.f32 %v406, 0.0
  %v423 = vmax.f32 %v407, 0.0
  %v424 = vmax.f32 %v408, 0.0
  %v425 = vmax.f32 %v409, 0.0
  %v426 = vmax.f32 %v410, 0.0
  %v427 = vmax.f32 %v411, 0.0
  %v428 = vmax.f32 %v412, 0.0
  %v429 = vpack.c.bf16 %v415, %v413
  %v430 = vpack.c.bf16 %v416, %v414
  %v431 = vpack.c.bf16 %v419, %v417
  %v432 = vpack.c.bf16 %v420, %v418
  %v433 = vpack.c.bf16 %v423, %v421
  %v434 = vpack.c.bf16 %v424, %v422
  %v435 = vpack.c.bf16 %v427, %v425
  %v436 = vpack.c.bf16 %v428, %v426
  %v445 = vunpack.c.l.b16 %v429
  %v446 = vunpack.c.l.b16 %v430
  %v447 = vunpack.c.h.b16 %v429
  %v448 = vunpack.c.h.b16 %v430
  %v449 = vunpack.c.l.b16 %v431
  %v450 = vunpack.c.l.b16 %v432
  %v451 = vunpack.c.h.b16 %v431
  %v452 = vunpack.c.h.b16 %v432
  %v453 = vunpack.c.l.b16 %v433
  %v454 = vunpack.c.l.b16 %v434
  %v455 = vunpack.c.h.b16 %v433
  %v456 = vunpack.c.h.b16 %v434
  %v457 = vunpack.c.l.b16 %v435
  %v458 = vunpack.c.l.b16 %v436
  %v459 = vunpack.c.h.b16 %v435
  %v460 = vunpack.c.h.b16 %v436
  %v461 = vpack.c.b16 %v446, %v445
  %v462 = vpack.c.b16 %v448, %v447
  %v463 = vpack.c.b16 %v450, %v449
  %v464 = vpack.c.b16 %v452, %v451
  %v465 = vpack.c.b16 %v454, %v453
  %v466 = vpack.c.b16 %v456, %v455
  %v467 = vpack.c.b16 %v458, %v457
  %v468 = vpack.c.b16 %v460, %v459
  %477 = vst [vmem:[%s3] sm:$0xff] %v461
  %478 = vst [vmem:[%s3 + $0x8] sm:$0xff] %v462
  %479 = vst [vmem:[%s3 + $0x10] sm:$0xff] %v463
  %480 = vst [vmem:[%s3 + $0x18] sm:$0xff] %v464
  %481 = vst [vmem:[%s3 + $0x20] sm:$0xff] %v465
  %482 = vst [vmem:[%s3 + $0x28] sm:$0xff] %v466
  %483 = vst [vmem:[%s3 + $0x30] sm:$0xff] %v467
  %484 = vst [vmem:[%s3 + $0x38] sm:$0xff] %v468
  // Predicated region
  $region14: #{encoder_forward.14} parent=0 // pred_check
    _
  $region15: #{encoder_forward.14} parent=0 // pred_check_branch
    %486 = sbr.rel (0) target = $region17
  $region16: #{encoder_forward.14} parent=0 // pred_region
    _
  $region17: #{encoder_forward.14} parent=0 // pred_fallthru
    _
  // Predicated region
  $region18: #{encoder_forward.14} parent=0 // pred_check
    _
  $region19: #{encoder_forward.14} parent=0 // pred_check_branch
    %488 = sbr.rel (0) target = $region21
  $region20: #{encoder_forward.14} parent=0 // pred_region
    _
  $region21: #{encoder_forward.14} parent=0 // pred_fallthru
    _

// kernel: encoder_forward.21
$region0: #{encoder_forward.21}
  #allocation0 [shape = 'u32[]', space=smem, size = 0x4, offset = 0x4, fixed_abs, tag = 'smem constant byte address 0x4 - core index']
  #allocation1 [shape = 'u32[144,128]{1,0:T(1,128)}', space=vmem, size = 0x12000, scoped, tag = 'internal scratch']
  %s0 = inlined_call_operand.vmem [shape: bf16[16,32], index: 0, kind: input, shape index: {}]
  %s1 = inlined_call_operand.vmem [shape: bf16[16,32], index: 1, kind: input, shape index: {}]
  %s2 = inlined_call_operand.vmem [shape: bf16[32,64], index: 2, kind: input, shape index: {}]
  %s3 = inlined_call_operand.vmem [shape: bf16[32,64], index: 3, kind: input, shape index: {}]
  %s4 = inlined_call_operand.vmem [shape: f32[1,64], index: 4, kind: input, shape index: {}]
  %s5 = inlined_call_operand.vmem [shape: bf16[64,32], index: 5, kind: input, shape index: {}]
  %s6 = inlined_call_operand.vmem [shape: f32[1,32], index: 6, kind: input, shape index: {}]
  %s7 = inlined_call_operand.vmem [shape: bf16[32,3], index: 7, kind: input, shape index: {}]
  %s8 = inlined_call_operand.vmem [shape: f32[1,3], index: 8, kind: input, shape index: {}]
  %s9 = inlined_call_operand.vmem [shape: f32[16,3], index: 9, kind: output, shape index: {}]
  %s10 = sld [smem:[#allocation0]]
  $region46: #{encoder_forward.21} parent=0
    _
  %s12 = ssub.s32 1, %s10
  %s13 = scalar_select 0, %s12, %s10
  // Predicated region
  $region2: #{encoder_forward.21} parent=0 // pred_check
    _
  $region3: #{encoder_forward.21} parent=0 // pred_check_branch
    %15 = sbr.rel (0) target = $region5
  $region4: #{encoder_forward.21} parent=0 // pred_region
    _
  $region5: #{encoder_forward.21} parent=0 // pred_fallthru
    _
  // Predicated region
  $region6: #{encoder_forward.21} parent=0 // pred_check
    _
  $region7: #{encoder_forward.21} parent=0 // pred_check_branch
    %17 = sbr.rel (0) target = $region9
  $region8: #{encoder_forward.21} parent=0 // pred_region
    _
  $region9: #{encoder_forward.21} parent=0 // pred_fallthru
    _
  // Predicated region
  $region10: #{encoder_forward.21} parent=0 // pred_check
    _
  $region11: #{encoder_forward.21} parent=0 // pred_check_branch
    %19 = sbr.rel (0) target = $region13
  $region12: #{encoder_forward.21} parent=0 // pred_region
    _
  $region13: #{encoder_forward.21} parent=0 // pred_fallthru
    _
  // Predicated region
  $region14: #{encoder_forward.21} parent=0 // pred_check
    _
  $region15: #{encoder_forward.21} parent=0 // pred_check_branch
    %21 = sbr.rel (0) target = $region17
  $region16: #{encoder_forward.21} parent=0 // pred_region
    _
  $region17: #{encoder_forward.21} parent=0 // pred_fallthru
    _
  // Predicated region
  $region18: #{encoder_forward.21} parent=0 // pred_check
    _
  $region19: #{encoder_forward.21} parent=0 // pred_check_branch
    %23 = sbr.rel (0) target = $region21
  $region20: #{encoder_forward.21} parent=0 // pred_region
    _
  $region21: #{encoder_forward.21} parent=0 // pred_fallthru
    _
  // Predicated region
  $region22: #{encoder_forward.21} parent=0 // pred_check
    _
  $region23: #{encoder_forward.21} parent=0 // pred_check_branch
    %25 = sbr.rel (0) target = $region25
  $region24: #{encoder_forward.21} parent=0 // pred_region
    _
  $region25: #{encoder_forward.21} parent=0 // pred_fallthru
    _
  // Predicated region
  $region26: #{encoder_forward.21} parent=0 // pred_check
    _
  $region27: #{encoder_forward.21} parent=0 // pred_check_branch
    %27 = sbr.rel (0) target = $region29
  $region28: #{encoder_forward.21} parent=0 // pred_region
    _
  $region29: #{encoder_forward.21} parent=0 // pred_fallthru
    _
  // Predicated region
  $region30: #{encoder_forward.21} parent=0 // pred_check
    _
  $region31: #{encoder_forward.21} parent=0 // pred_check_branch
    %29 = sbr.rel (0) target = $region33
  $region32: #{encoder_forward.21} parent=0 // pred_region
    _
  $region33: #{encoder_forward.21} parent=0 // pred_fallthru
    _
  // Predicated region
  $region34: #{encoder_forward.21} parent=0 // pred_check
    _
  $region35: #{encoder_forward.21} parent=0 // pred_check_branch
    %31 = sbr.rel (0) target = $region37
  $region36: #{encoder_forward.21} parent=0 // pred_region
    _
  $region37: #{encoder_forward.21} parent=0 // pred_fallthru
    _
  %v33 = vld [vmem:[%s0] sm:$0xf]
  %v34 = vld [vmem:[%s0 + $0x4] sm:$0xf]
  %v35 = vld [vmem:[%s2] sm:$0xf]
  %v36 = vld [vmem:[%s2 + $0x4] sm:$0xf]
  %v37 = vld [vmem:[%s2 + $0x8] sm:$0xf]
  %v38 = vld [vmem:[%s2 + $0xc] sm:$0xf]
  %v39 = vld [vmem:[%s1] sm:$0xf]
  %v40 = vld [vmem:[%s1 + $0x4] sm:$0xf]
  %v41 = vld [vmem:[%s3] sm:$0xf]
  %v42 = vld [vmem:[%s3 + $0x4] sm:$0xf]
  %v43 = vld [vmem:[%s3 + $0x8] sm:$0xf]
  %v44 = vld [vmem:[%s3 + $0xc] sm:$0xf]
  %v47 = vunpack.c.l.b16 %v39
  %v48 = vunpack.c.l.b16 %v40
  %v49 = vpack.c.b16 %v48, %v47
  %v54 = vunpack.c.l.b16 %v41
  %v55 = vunpack.c.l.b16 %v42
  %v56 = vunpack.c.l.b16 %v43
  %v57 = vunpack.c.l.b16 %v44
  %v58 = vpack.c.b16 %v55, %v54
  %v59 = vpack.c.b16 %v57, %v56
  %vm62 = vcmask 261120
  %v64 = vsel %vm62, %v49, 0
  %66 = vmatprep.subr.bf16.mxu0 0
  %67 = vmatpush1.bf16.msra.mxu0 %v58
  %68 = vmatprep.subr.bf16.mxu0 0
  %69 = vmatpush1.bf16.msra.mxu0 %v59
  %70 = vmatprep.subr.bf16.mxu0 0
  %71 = vmatpush1.bf16.msra.mxu0 0
  %72 = vmatprep.subr.bf16.mxu0 0
  %73 = vmatpush1.bf16.msra.mxu0 0
  %74 = vmatprep.subr.bf16.mxu0 0
  %75 = vmatpush1.bf16.msra.mxu0 0
  %76 = vmatprep.subr.bf16.mxu0 0
  %77 = vmatpush1.bf16.msra.mxu0 0
  %78 = vmatprep.subr.bf16.mxu0 0
  %79 = vmatpush1.bf16.msra.mxu0 0
  %80 = vmatprep.subr.bf16.mxu0 0
  %81 = vmatpush1.bf16.msra.mxu0 0
  %82 = vmatprep.subr.bf16.mxu0 0
  %83 = vmatpush1.bf16.msra.mxu0 0
  %84 = vmatprep.subr.bf16.mxu0 0
  %85 = vmatpush1.bf16.msra.mxu0 0
  %86 = vmatprep.subr.bf16.mxu0 0
  %87 = vmatpush1.bf16.msra.mxu0 0
  %88 = vmatprep.subr.bf16.mxu0 0
  %89 = vmatpush1.bf16.msra.mxu0 0
  %90 = vmatprep.subr.bf16.mxu0 0
  %91 = vmatpush1.bf16.msra.mxu0 0
  %92 = vmatprep.subr.bf16.mxu0 0
  %93 = vmatpush1.bf16.msra.mxu0 0
  %94 = vmatprep.subr.bf16.mxu0 0
  %95 = vmatpush1.bf16.msra.mxu0 0
  %96 = vmatprep.subr.bf16.mxu0 0
  %97 = vmatpush1.bf16.msra.mxu0 0
  %98 = vmatprep.mubr.bf16.mxu0 0
  %99 = vmatmul.mubr.bf16.gmra.mrb[0].mxu0 %v64
  %v100 = vpop.f32.mrb[0].mxu0
  %v101 = vadd.f32 0.0, %v100
  %v102 = vpop.f32.mrb[0].mxu0
  %v103 = vpop.f32.mrb[0].mxu0
  %v104 = vadd.f32 0.0, %v103
  %v105 = vpop.f32.mrb[0].mxu0
  %106 = vdwg.mxu0
  %v109 = vunpack.c.l.b16 %v33
  %v110 = vunpack.c.l.b16 %v34
  %v111 = vpack.c.b16 %v110, %v109
  %v116 = vunpack.c.l.b16 %v35
  %v117 = vunpack.c.l.b16 %v36
  %v118 = vunpack.c.l.b16 %v37
  %v119 = vunpack.c.l.b16 %v38
  %v120 = vpack.c.b16 %v117, %v116
  %v121 = vpack.c.b16 %v119, %v118
  %v125 = vsel %vm62, %v111, 0
  %127 = vmatprep.subr.bf16.mxu0 0
  %128 = vmatpush1.bf16.msra.mxu0 %v120
  %129 = vmatprep.subr.bf16.mxu0 0
  %130 = vmatpush1.bf16.msra.mxu0 %v121
  %131 = vmatprep.subr.bf16.mxu0 0
  %132 = vmatpush1.bf16.msra.mxu0 0
  %133 = vmatprep.subr.bf16.mxu0 0
  %134 = vmatpush1.bf16.msra.mxu0 0
  %135 = vmatprep.subr.bf16.mxu0 0
  %136 = vmatpush1.bf16.msra.mxu0 0
  %137 = vmatprep.subr.bf16.mxu0 0
  %138 = vmatpush1.bf16.msra.mxu0 0
  %139 = vmatprep.subr.bf16.mxu0 0
  %140 = vmatpush1.bf16.msra.mxu0 0
  %141 = vmatprep.subr.bf16.mxu0 0
  %142 = vmatpush1.bf16.msra.mxu0 0
  %143 = vmatprep.subr.bf16.mxu0 0
  %144 = vmatpush1.bf16.msra.mxu0 0
  %145 = vmatprep.subr.bf16.mxu0 0
  %146 = vmatpush1.bf16.msra.mxu0 0
  %147 = vmatprep.subr.bf16.mxu0 0
  %148 = vmatpush1.bf16.msra.mxu0 0
  %149 = vmatprep.subr.bf16.mxu0 0
  %150 = vmatpush1.bf16.msra.mxu0 0
  %151 = vmatprep.subr.bf16.mxu0 0
  %152 = vmatpush1.bf16.msra.mxu0 0
  %153 = vmatprep.subr.bf16.mxu0 0
  %154 = vmatpush1.bf16.msra.mxu0 0
  %155 = vmatprep.subr.bf16.mxu0 0
  %156 = vmatpush1.bf16.msra.mxu0 0
  %157 = vmatprep.subr.bf16.mxu0 0
  %158 = vmatpush1.bf16.msra.mxu0 0
  %159 = vmatprep.mubr.bf16.mxu0 0
  %160 = vmatmul.mubr.bf16.gmra.mrb[0].mxu0 %v125
  %v161 = vpop.f32.mrb[0].mxu0
  %v162 = vadd.f32 %v101, %v161
  %v163 = vpop.f32.mrb[0].mxu0
  %v164 = vpop.f32.mrb[0].mxu0
  %v165 = vadd.f32 %v104, %v164
  %v166 = vpop.f32.mrb[0].mxu0
  %167 = vdwg.mxu0
  %v168 = vld [vmem:[%s4] sm:$0x1]
  %v170 = vlaneseq
  %v171 = vshrl.u32 %v170, 7
  %v172 = vsub.s32 0, %v171
  %v173 = vrot.slane %v168, %v172
  %v175 = vadd.f32 %v162, %v173
  %v176 = vadd.f32 %v165, %v173
  %v177 = vmax.f32 %v175, 0.0
  %v178 = vmax.f32 %v176, 0.0
  %v179 = vpack.c.bf16 %v178, %v177
  %v180 = vld [vmem:[%s5] sm:$0xf]
  %v181 = vld [vmem:[%s5 + $0x4] sm:$0xf]
  %v182 = vld [vmem:[%s5 + $0x8] sm:$0xf]
  %v183 = vld [vmem:[%s5 + $0xc] sm:$0xf]
  %v184 = vld [vmem:[%s5 + $0x10] sm:$0xf]
  %v185 = vld [vmem:[%s5 + $0x14] sm:$0xf]
  %v186 = vld [vmem:[%s5 + $0x18] sm:$0xf]
  %v187 = vld [vmem:[%s5 + $0x1c] sm:$0xf]
  %v188 = vld [vmem:[%s6] sm:$0x1]
  %v190 = vlaneseq
  %v191 = vshrl.u32 %v190, 7
  %v192 = vsub.s32 0, %v191
  %v193 = vrot.slane %v188, %v192
  %v203 = vunpack.c.l.b16 %v180
  %v204 = vunpack.c.l.b16 %v181
  %v205 = vunpack.c.l.b16 %v182
  %v206 = vunpack.c.l.b16 %v183
  %v207 = vunpack.c.l.b16 %v184
  %v208 = vunpack.c.l.b16 %v185
  %v209 = vunpack.c.l.b16 %v186
  %v210 = vunpack.c.l.b16 %v187
  %v211 = vpack.c.b16 %v204, %v203
  %v212 = vpack.c.b16 %v206, %v205
  %v213 = vpack.c.b16 %v208, %v207
  %v214 = vpack.c.b16 %v210, %v209
  %vm219 = vcmask 523264
  %v221 = vsel %vm219, %v179, 0
  %223 = vmatprep.subr.bf16.mxu0 0
  %224 = vmatpush1.bf16.msra.mxu0 %v211
  %225 = vmatprep.subr.bf16.mxu0 0
  %226 = vmatpush1.bf16.msra.mxu0 %v212
  %227 = vmatprep.subr.bf16.mxu0 0
  %228 = vmatpush1.bf16.msra.mxu0 %v213
  %229 = vmatprep.subr.bf16.mxu0 0
  %230 = vmatpush1.bf16.msra.mxu0 %v214
  %231 = vmatprep.subr.bf16.mxu0 0
  %232 = vmatpush1.bf16.msra.mxu0 0
  %233 = vmatprep.subr.bf16.mxu0 0
  %234 = vmatpush1.bf16.msra.mxu0 0
  %235 = vmatprep.subr.bf16.mxu0 0
  %236 = vmatpush1.bf16.msra.mxu0 0
  %237 = vmatprep.subr.bf16.mxu0 0
  %238 = vmatpush1.bf16.msra.mxu0 0
  %239 = vmatprep.subr.bf16.mxu0 0
  %240 = vmatpush1.bf16.msra.mxu0 0
  %241 = vmatprep.subr.bf16.mxu0 0
  %242 = vmatpush1.bf16.msra.mxu0 0
  %243 = vmatprep.subr.bf16.mxu0 0
  %244 = vmatpush1.bf16.msra.mxu0 0
  %245 = vmatprep.subr.bf16.mxu0 0
  %246 = vmatpush1.bf16.msra.mxu0 0
  %247 = vmatprep.subr.bf16.mxu0 0
  %248 = vmatpush1.bf16.msra.mxu0 0
  %249 = vmatprep.subr.bf16.mxu0 0
  %250 = vmatpush1.bf16.msra.mxu0 0
  %251 = vmatprep.subr.bf16.mxu0 0
  %252 = vmatpush1.bf16.msra.mxu0 0
  %253 = vmatprep.subr.bf16.mxu0 0
  %254 = vmatpush1.bf16.msra.mxu0 0
  %255 = vmatprep.mubr.bf16.mxu0 0
  %256 = vmatmul.mubr.bf16.gmra.mrb[0].mxu0 %v221
  %v257 = vpop.f32.mrb[0].mxu0
  %v258 = vadd.f32 %v193, %v257
  %v259 = vpop.f32.mrb[0].mxu0
  %v260 = vpop.f32.mrb[0].mxu0
  %v261 = vadd.f32 %v193, %v260
  %v262 = vpop.f32.mrb[0].mxu0
  %263 = vdwg.mxu0
  %v264 = vmax.f32 %v258, 0.0
  %v265 = vmax.f32 %v261, 0.0
  %v266 = vpack.c.bf16 %v265, %v264
  %v267 = vld [vmem:[%s7] sm:$0xf]
  %v268 = vld [vmem:[%s7 + $0x4] sm:$0xf]
  %v269 = vld [vmem:[%s7 + $0x8] sm:$0xf]
  %v270 = vld [vmem:[%s7 + $0xc] sm:$0xf]
  %v271 = vld [vmem:[%s8] sm:$0x1]
  %v273 = vlaneseq
  %v274 = vshrl.u32 %v273, 7
  %v275 = vsub.s32 0, %v274
  %v276 = vrot.slane %v271, %v275
  %v282 = vunpack.c.l.b16 %v267
  %v283 = vunpack.c.l.b16 %v268
  %v284 = vunpack.c.l.b16 %v269
  %v285 = vunpack.c.l.b16 %v270
  %v286 = vpack.c.b16 %v283, %v282
  %v287 = vpack.c.b16 %v285, %v284
  %v291 = vsel %vm62, %v266, 0
  %293 = vmatprep.subr.bf16.mxu0 0
  %294 = vmatpush1.bf16.msra.mxu0 %v286
  %295 = vmatprep.subr.bf16.mxu0 0
  %296 = vmatpush1.bf16.msra.mxu0 %v287
  %297 = vmatprep.subr.bf16.mxu0 0
  %298 = vmatpush1.bf16.msra.mxu0 0
  %299 = vmatprep.subr.bf16.mxu0 0
  %300 = vmatpush1.bf16.msra.mxu0 0
  %301 = vmatprep.subr.bf16.mxu0 0
  %302 = vmatpush1.bf16.msra.mxu0 0
  %303 = vmatprep.subr.bf16.mxu0 0
  %304 = vmatpush1.bf16.msra.mxu0 0
  %305 = vmatprep.subr.bf16.mxu0 0
  %306 = vmatpush1.bf16.msra.mxu0 0
  %307 = vmatprep.subr.bf16.mxu0 0
  %308 = vmatpush1.bf16.msra.mxu0 0
  %309 = vmatprep.subr.bf16.mxu0 0
  %310 = vmatpush1.bf16.msra.mxu0 0
  %311 = vmatprep.subr.bf16.mxu0 0
  %312 = vmatpush1.bf16.msra.mxu0 0
  %313 = vmatprep.subr.bf16.mxu0 0
  %314 = vmatpush1.bf16.msra.mxu0 0
  %315 = vmatprep.subr.bf16.mxu0 0
  %316 = vmatpush1.bf16.msra.mxu0 0
  %317 = vmatprep.subr.bf16.mxu0 0
  %318 = vmatpush1.bf16.msra.mxu0 0
  %319 = vmatprep.subr.bf16.mxu0 0
  %320 = vmatpush1.bf16.msra.mxu0 0
  %321 = vmatprep.subr.bf16.mxu0 0
  %322 = vmatpush1.bf16.msra.mxu0 0
  %323 = vmatprep.subr.bf16.mxu0 0
  %324 = vmatpush1.bf16.msra.mxu0 0
  %325 = vmatprep.mubr.bf16.mxu0 0
  %326 = vmatmul.mubr.bf16.gmra.mrb[0].mxu0 %v291
  %v327 = vpop.f32.mrb[0].mxu0
  %v328 = vadd.f32 %v276, %v327
  %v329 = vpop.f32.mrb[0].mxu0
  %v330 = vpop.f32.mrb[0].mxu0
  %v331 = vadd.f32 %v276, %v330
  %v332 = vpop.f32.mrb[0].mxu0
  %333 = vdwg.mxu0
  %vm334 = vcmask 23552
  %335 = vst.msk [vmem:[%s9] sm:$0xff] %vm334, %v328
  %336 = vst.msk [vmem:[%s9 + $0x8] sm:$0xff] %vm334, %v331
  // Predicated region
  $region38: #{encoder_forward.21} parent=0 // pred_check
    _
  $region39: #{encoder_forward.21} parent=0 // pred_check_branch
    %338 = sbr.rel (0) target = $region41
  $region40: #{encoder_forward.21} parent=0 // pred_region
    _
  $region41: #{encoder_forward.21} parent=0 // pred_fallthru
    _
  // Predicated region
  $region42: #{encoder_forward.21} parent=0 // pred_check
    _
  $region43: #{encoder_forward.21} parent=0 // pred_check_branch
    %340 = sbr.rel (0) target = $region45
  $region44: #{encoder_forward.21} parent=0 // pred_region
    _
  $region45: #{encoder_forward.21} parent=0 // pred_fallthru
    _

// kernel: encoder_forward.15
$region0: #{encoder_forward.15}
  #allocation0 [shape = 'u32[]', space=smem, size = 0x4, offset = 0x4, fixed_abs, tag = 'smem constant byte address 0x4 - core index']
  #allocation1 [shape = 'u32[144,128]{1,0:T(1,128)}', space=vmem, size = 0x12000, scoped, tag = 'internal scratch']
  %s0 = inlined_call_operand.vmem [shape: bf16[4,16,64], index: 0, kind: input, shape index: {}]
  %s1 = inlined_call_operand.vmem [shape: bf16[4,16,64], index: 1, kind: input, shape index: {}]
  %s2 = inlined_call_operand.vmem [shape: bf16[4,16,128], index: 2, kind: input, shape index: {}]
  %s3 = inlined_call_operand.vmem [shape: bf16[4,16,256], index: 3, kind: input, shape index: {}]
  %s4 = inlined_call_operand.vmem [shape: bf16[64,32], index: 4, kind: input, shape index: {}]
  %s5 = inlined_call_operand.vmem [shape: bf16[64,32], index: 5, kind: input, shape index: {}]
  %s6 = inlined_call_operand.vmem [shape: bf16[128,32], index: 6, kind: input, shape index: {}]
  %s7 = inlined_call_operand.vmem [shape: bf16[256,32], index: 7, kind: input, shape index: {}]
  %s8 = inlined_call_operand.vmem [shape: bf16[16,32], index: 8, kind: output, shape index: {}]
  %s9 = sld [smem:[#allocation0]]
  $region42: #{encoder_forward.15} parent=0
    _
  %s11 = ssub.s32 1, %s9
  %s12 = scalar_select 0, %s11, %s9
  // Predicated region
  $region2: #{encoder_forward.15} parent=0 // pred_check
    _
  $region3: #{encoder_forward.15} parent=0 // pred_check_branch
    %14 = sbr.rel (0) target = $region5
  $region4: #{encoder_forward.15} parent=0 // pred_region
    _
  $region5: #{encoder_forward.15} parent=0 // pred_fallthru
    _
  // Predicated region
  $region6: #{encoder_forward.15} parent=0 // pred_check
    _
  $region7: #{encoder_forward.15} parent=0 // pred_check_branch
    %16 = sbr.rel (0) target = $region9
  $region8: #{encoder_forward.15} parent=0 // pred_region
    _
  $region9: #{encoder_forward.15} parent=0 // pred_fallthru
    _
  // Predicated region
  $region10: #{encoder_forward.15} parent=0 // pred_check
    _
  $region11: #{encoder_forward.15} parent=0 // pred_check_branch
    %18 = sbr.rel (0) target = $region13
  $region12: #{encoder_forward.15} parent=0 // pred_region
    _
  $region13: #{encoder_forward.15} parent=0 // pred_fallthru
    _
  // Predicated region
  $region14: #{encoder_forward.15} parent=0 // pred_check
    _
  $region15: #{encoder_forward.15} parent=0 // pred_check_branch
    %20 = sbr.rel (0) target = $region17
  $region16: #{encoder_forward.15} parent=0 // pred_region
    _
  $region17: #{encoder_forward.15} parent=0 // pred_fallthru
    _
  // Predicated region
  $region18: #{encoder_forward.15} parent=0 // pred_check
    _
  $region19: #{encoder_forward.15} parent=0 // pred_check_branch
    %22 = sbr.rel (0) target = $region21
  $region20: #{encoder_forward.15} parent=0 // pred_region
    _
  $region21: #{encoder_forward.15} parent=0 // pred_fallthru
    _
  // Predicated region
  $region22: #{encoder_forward.15} parent=0 // pred_check
    _
  $region23: #{encoder_forward.15} parent=0 // pred_check_branch
    %24 = sbr.rel (0) target = $region25
  $region24: #{encoder_forward.15} parent=0 // pred_region
    _
  $region25: #{encoder_forward.15} parent=0 // pred_fallthru
    _
  // Predicated region
  $region26: #{encoder_forward.15} parent=0 // pred_check
    _
  $region27: #{encoder_forward.15} parent=0 // pred_check_branch
    %26 = sbr.rel (0) target = $region29
  $region28: #{encoder_forward.15} parent=0 // pred_region
    _
  $region29: #{encoder_forward.15} parent=0 // pred_fallthru
    _
  // Predicated region
  $region30: #{encoder_forward.15} parent=0 // pred_check
    _
  $region31: #{encoder_forward.15} parent=0 // pred_check_branch
    %28 = sbr.rel (0) target = $region33
  $region32: #{encoder_forward.15} parent=0 // pred_region
    _
  $region33: #{encoder_forward.15} parent=0 // pred_fallthru
    _
  %v30 = vld [vmem:[%s0] sm:$0xf]
  %v31 = vld [vmem:[%s0 + $0x4] sm:$0xf]
  %v32 = vld [vmem:[%s0 + $0x8] sm:$0xf]
  %v33 = vld [vmem:[%s0 + $0xc] sm:$0xf]
  %v34 = vld [vmem:[%s0 + $0x10] sm:$0xf]
  %v35 = vld [vmem:[%s0 + $0x14] sm:$0xf]
  %v36 = vld [vmem:[%s0 + $0x18] sm:$0xf]
  %v37 = vld [vmem:[%s0 + $0x1c] sm:$0xf]
  %v38 = vld [vmem:[%s4] sm:$0xf]
  %v39 = vld [vmem:[%s4 + $0x4] sm:$0xf]
  %v40 = vld [vmem:[%s4 + $0x8] sm:$0xf]
  %v41 = vld [vmem:[%s4 + $0xc] sm:$0xf]
  %v42 = vld [vmem:[%s4 + $0x10] sm:$0xf]
  %v43 = vld [vmem:[%s4 + $0x14] sm:$0xf]
  %v44 = vld [vmem:[%s4 + $0x18] sm:$0xf]
  %v45 = vld [vmem:[%s4 + $0x1c] sm:$0xf]
  %v46 = vld [vmem:[%s1] sm:$0xf]
  %v47 = vld [vmem:[%s1 + $0x4] sm:$0xf]
  %v48 = vld [vmem:[%s1 + $0x8] sm:$0xf]
  %v49 = vld [vmem:[%s1 + $0xc] sm:$0xf]
  %v50 = vld [vmem:[%s1 + $0x10] sm:$0xf]
  %v51 = vld [vmem:[%s1 + $0x14] sm:$0xf]
  %v52 = vld [vmem:[%s1 + $0x18] sm:$0xf]
  %v53 = vld [vmem:[%s1 + $0x1c] sm:$0xf]
  %v54 = vld [vmem:[%s5] sm:$0xf]
  %v55 = vld [vmem:[%s5 + $0x4] sm:$0xf]
  %v56 = vld [vmem:[%s5 + $0x8] sm:$0xf]
  %v57 = vld [vmem:[%s5 + $0xc] sm:$0xf]
  %v58 = vld [vmem:[%s5 + $0x10] sm:$0xf]
  %v59 = vld [vmem:[%s5 + $0x14] sm:$0xf]
  %v60 = vld [vmem:[%s5 + $0x18] sm:$0xf]
  %v61 = vld [vmem:[%s5 + $0x1c] sm:$0xf]
  %v70 = vunpack.c.l.b16 %v46
  %v71 = vunpack.c.l.b16 %v47
  %v72 = vunpack.c.l.b16 %v48
  %v73 = vunpack.c.l.b16 %v49
  %v74 = vunpack.c.l.b16 %v50
  %v75 = vunpack.c.l.b16 %v51
  %v76 = vunpack.c.l.b16 %v52
  %v77 = vunpack.c.l.b16 %v53
  %v78 = vpack.c.b16 %v71, %v70
  %v79 = vpack.c.b16 %v73, %v72
  %v80 = vpack.c.b16 %v75, %v74
  %v81 = vpack.c.b16 %v77, %v76
  %v90 = vunpack.c.l.b16 %v54
  %v91 = vunpack.c.l.b16 %v55
  %v92 = vunpack.c.l.b16 %v56
  %v93 = vunpack.c.l.b16 %v57
  %v94 = vunpack.c.l.b16 %v58
  %v95 = vunpack.c.l.b16 %v59
  %v96 = vunpack.c.l.b16 %v60
  %v97 = vunpack.c.l.b16 %v61
  %v98 = vpack.c.b16 %v91, %v90
  %v99 = vpack.c.b16 %v93, %v92
  %v100 = vpack.c.b16 %v95, %v94
  %v101 = vpack.c.b16 %v97, %v96
  %vm106 = vcmask 523264
  %v108 = vsel %vm106, %v78, 0
  %v111 = vsel %vm106, %v79, 0
  %v114 = vsel %vm106, %v80, 0
  %v117 = vsel %vm106, %v81, 0
  %119 = vmatprep.subr.bf16.mxu0 0
  %120 = vmatpush1.bf16.msra.mxu0 %v98
  %121 = vmatprep.subr.bf16.mxu0 0
  %122 = vmatpush1.bf16.msra.mxu0 %v99
  %123 = vmatprep.subr.bf16.mxu0 0
  %124 = vmatpush1.bf16.msra.mxu0 %v100
  %125 = vmatprep.subr.bf16.mxu0 0
  %126 = vmatpush1.bf16.msra.mxu0 %v101
  %127 = vmatprep.subr.bf16.mxu0 0
  %128 = vmatpush1.bf16.msra.mxu0 0
  %129 = vmatprep.subr.bf16.mxu0 0
  %130 = vmatpush1.bf16.msra.mxu0 0
  %131 = vmatprep.subr.bf16.mxu0 0
  %132 = vmatpush1.bf16.msra.mxu0 0
  %133 = vmatprep.subr.bf16.mxu0 0
  %134 = vmatpush1.bf16.msra.mxu0 0
  %135 = vmatprep.subr.bf16.mxu0 0
  %136 = vmatpush1.bf16.msra.mxu0 0
  %137 = vmatprep.subr.bf16.mxu0 0
  %138 = vmatpush1.bf16.msra.mxu0 0
  %139 = vmatprep.subr.bf16.mxu0 0
  %140 = vmatpush1.bf16.msra.mxu0 0
  %141 = vmatprep.subr.bf16.mxu0 0
  %142 = vmatpush1.bf16.msra.mxu0 0
  %143 = vmatprep.subr.bf16.mxu0 0
  %144 = vmatpush1.bf16.msra.mxu0 0
  %145 = vmatprep.subr.bf16.mxu0 0
  %146 = vmatpush1.bf16.msra.mxu0 0
  %147 = vmatprep.subr.bf16.mxu0 0
  %148 = vmatpush1.bf16.msra.mxu0 0
  %149 = vmatprep.subr.bf16.mxu0 0
  %150 = vmatpush1.bf16.msra.mxu0 0
  %151 = vmatprep.mubr.bf16.mxu0 0
  %152 = vmatmul.mubr.bf16.gmra.mrb[0].mxu0 %v108
  %v153 = vpop.f32.mrb[0].mxu0
  %v154 = vadd.f32 0.0, %v153
  %v155 = vpop.f32.mrb[0].mxu0
  %v156 = vpop.f32.mrb[0].mxu0
  %v157 = vadd.f32 0.0, %v156
  %v158 = vpop.f32.mrb[0].mxu0
  %159 = vmatprep.mubr.bf16.mxu0 0
  %160 = vmatmul.mubr.bf16.gmra.mrb[0].mxu0 %v111
  %v161 = vpop.f32.mrb[0].mxu0
  %v162 = vadd.f32 0.0, %v161
  %v163 = vpop.f32.mrb[0].mxu0
  %v164 = vpop.f32.mrb[0].mxu0
  %v165 = vadd.f32 0.0, %v164
  %v166 = vpop.f32.mrb[0].mxu0
  %167 = vmatprep.mubr.bf16.mxu0 0
  %168 = vmatmul.mubr.bf16.gmra.mrb[0].mxu0 %v114
  %v169 = vpop.f32.mrb[0].mxu0
  %v170 = vadd.f32 0.0, %v169
  %v171 = vpop.f32.mrb[0].mxu0
  %v172 = vpop.f32.mrb[0].mxu0
  %v173 = vadd.f32 0.0, %v172
  %v174 = vpop.f32.mrb[0].mxu0
  %175 = vmatprep.mubr.bf16.mxu0 0
  %176 = vmatmul.mubr.bf16.gmra.mrb[0].mxu0 %v117
  %v177 = vpop.f32.mrb[0].mxu0
  %v178 = vadd.f32 0.0, %v177
  %v179 = vpop.f32.mrb[0].mxu0
  %v180 = vpop.f32.mrb[0].mxu0
  %v181 = vadd.f32 0.0, %v180
  %v182 = vpop.f32.mrb[0].mxu0
  %183 = vdwg.mxu0
  %v192 = vunpack.c.l.b16 %v30
  %v193 = vunpack.c.l.b16 %v31
  %v194 = vunpack.c.l.b16 %v32
  %v195 = vunpack.c.l.b16 %v33
  %v196 = vunpack.c.l.b16 %v34
  %v197 = vunpack.c.l.b16 %v35
  %v198 = vunpack.c.l.b16 %v36
  %v199 = vunpack.c.l.b16 %v37
  %v200 = vpack.c.b16 %v193, %v192
  %v201 = vpack.c.b16 %v195, %v194
  %v202 = vpack.c.b16 %v197, %v196
  %v203 = vpack.c.b16 %v199, %v198
  %v212 = vunpack.c.l.b16 %v38
  %v213 = vunpack.c.l.b16 %v39
  %v214 = vunpack.c.l.b16 %v40
  %v215 = vunpack.c.l.b16 %v41
  %v216 = vunpack.c.l.b16 %v42
  %v217 = vunpack.c.l.b16 %v43
  %v218 = vunpack.c.l.b16 %v44
  %v219 = vunpack.c.l.b16 %v45
  %v220 = vpack.c.b16 %v213, %v212
  %v221 = vpack.c.b16 %v215, %v214
  %v222 = vpack.c.b16 %v217, %v216
  %v223 = vpack.c.b16 %v219, %v218
  %v229 = vsel %vm106, %v200, 0
  %v232 = vsel %vm106, %v201, 0
  %v235 = vsel %vm106, %v202, 0
  %v238 = vsel %vm106, %v203, 0
  %240 = vmatprep.subr.bf16.mxu0 0
  %241 = vmatpush1.bf16.msra.mxu0 %v220
  %242 = vmatprep.subr.bf16.mxu0 0
  %243 = vmatpush1.bf16.msra.mxu0 %v221
  %244 = vmatprep.subr.bf16.mxu0 0
  %245 = vmatpush1.bf16.msra.mxu0 %v222
  %246 = vmatprep.subr.bf16.mxu0 0
  %247 = vmatpush1.bf16.msra.mxu0 %v223
  %248 = vmatprep.subr.bf16.mxu0 0
  %249 = vmatpush1.bf16.msra.mxu0 0
  %250 = vmatprep.subr.bf16.mxu0 0
  %251 = vmatpush1.bf16.msra.mxu0 0
  %252 = vmatprep.subr.bf16.mxu0 0
  %253 = vmatpush1.bf16.msra.mxu0 0
  %254 = vmatprep.subr.bf16.mxu0 0
  %255 = vmatpush1.bf16.msra.mxu0 0
  %256 = vmatprep.subr.bf16.mxu0 0
  %257 = vmatpush1.bf16.msra.mxu0 0
  %258 = vmatprep.subr.bf16.mxu0 0
  %259 = vmatpush1.bf16.msra.mxu0 0
  %260 = vmatprep.subr.bf16.mxu0 0
  %261 = vmatpush1.bf16.msra.mxu0 0
  %262 = vmatprep.subr.bf16.mxu0 0
  %263 = vmatpush1.bf16.msra.mxu0 0
  %264 = vmatprep.subr.bf16.mxu0 0
  %265 = vmatpush1.bf16.msra.mxu0 0
  %266 = vmatprep.subr.bf16.mxu0 0
  %267 = vmatpush1.bf16.msra.mxu0 0
  %268 = vmatprep.subr.bf16.mxu0 0
  %269 = vmatpush1.bf16.msra.mxu0 0
  %270 = vmatprep.subr.bf16.mxu0 0
  %271 = vmatpush1.bf16.msra.mxu0 0
  %272 = vmatprep.mubr.bf16.mxu0 0
  %273 = vmatmul.mubr.bf16.gmra.mrb[0].mxu0 %v229
  %v274 = vpop.f32.mrb[0].mxu0
  %v275 = vadd.f32 %v154, %v274
  %v276 = vpop.f32.mrb[0].mxu0
  %v277 = vpop.f32.mrb[0].mxu0
  %v278 = vadd.f32 %v157, %v277
  %v279 = vpop.f32.mrb[0].mxu0
  %280 = vmatprep.mubr.bf16.mxu0 0
  %281 = vmatmul.mubr.bf16.gmra.mrb[0].mxu0 %v232
  %v282 = vpop.f32.mrb[0].mxu0
  %v283 = vadd.f32 %v162, %v282
  %v284 = vpop.f32.mrb[0].mxu0
  %v285 = vpop.f32.mrb[0].mxu0
  %v286 = vadd.f32 %v165, %v285
  %v287 = vpop.f32.mrb[0].mxu0
  %288 = vmatprep.mubr.bf16.mxu0 0
  %289 = vmatmul.mubr.bf16.gmra.mrb[0].mxu0 %v235
  %v290 = vpop.f32.mrb[0].mxu0
  %v291 = vadd.f32 %v170, %v290
  %v292 = vpop.f32.mrb[0].mxu0
  %v293 = vpop.f32.mrb[0].mxu0
  %v294 = vadd.f32 %v173, %v293
  %v295 = vpop.f32.mrb[0].mxu0
  %296 = vmatprep.mubr.bf16.mxu0 0
  %297 = vmatmul.mubr.bf16.gmra.mrb[0].mxu0 %v238
  %v298 = vpop.f32.mrb[0].mxu0
  %v299 = vadd.f32 %v178, %v298
  %v300 = vpop.f32.mrb[0].mxu0
  %v301 = vpop.f32.mrb[0].mxu0
  %v302 = vadd.f32 %v181, %v301
  %v303 = vpop.f32.mrb[0].mxu0
  %304 = vdwg.mxu0
  %v305 = vld [vmem:[%s2] sm:$0xf]
  %v306 = vld [vmem:[%s2 + $0x4] sm:$0xf]
  %v307 = vld [vmem:[%s2 + $0x8] sm:$0xf]
  %v308 = vld [vmem:[%s2 + $0xc] sm:$0xf]
  %v309 = vld [vmem:[%s2 + $0x10] sm:$0xf]
  %v310 = vld [vmem:[%s2 + $0x14] sm:$0xf]
  %v311 = vld [vmem:[%s2 + $0x18] sm:$0xf]
  %v312 = vld [vmem:[%s2 + $0x1c] sm:$0xf]
  %v313 = vld [vmem:[%s6] sm:$0xf]
  %v314 = vld [vmem:[%s6 + $0x4] sm:$0xf]
  %v315 = vld [vmem:[%s6 + $0x8] sm:$0xf]
  %v316 = vld [vmem:[%s6 + $0xc] sm:$0xf]
  %v317 = vld [vmem:[%s6 + $0x10] sm:$0xf]
  %v318 = vld [vmem:[%s6 + $0x14] sm:$0xf]
  %v319 = vld [vmem:[%s6 + $0x18] sm:$0xf]
  %v320 = vld [vmem:[%s6 + $0x1c] sm:$0xf]
  %v321 = vld [vmem:[%s6 + $0x20] sm:$0xf]
  %v322 = vld [vmem:[%s6 + $0x24] sm:$0xf]
  %v323 = vld [vmem:[%s6 + $0x28] sm:$0xf]
  %v324 = vld [vmem:[%s6 + $0x2c] sm:$0xf]
  %v325 = vld [vmem:[%s6 + $0x30] sm:$0xf]
  %v326 = vld [vmem:[%s6 + $0x34] sm:$0xf]
  %v327 = vld [vmem:[%s6 + $0x38] sm:$0xf]
  %v328 = vld [vmem:[%s6 + $0x3c] sm:$0xf]
  %v337 = vunpack.c.l.b16 %v305
  %v338 = vunpack.c.l.b16 %v306
  %v339 = vunpack.c.l.b16 %v307
  %v340 = vunpack.c.l.b16 %v308
  %v341 = vunpack.c.l.b16 %v309
  %v342 = vunpack.c.l.b16 %v310
  %v343 = vunpack.c.l.b16 %v311
  %v344 = vunpack.c.l.b16 %v312
  %v345 = vpack.c.b16 %v338, %v337
  %v346 = vpack.c.b16 %v340, %v339
  %v347 = vpack.c.b16 %v342, %v341
  %v348 = vpack.c.b16 %v344, %v343
  %v369 = vunpack.c.l.b16 %v313
  %v370 = vunpack.c.l.b16 %v314
  %v371 = vunpack.c.l.b16 %v315
  %v372 = vunpack.c.l.b16 %v316
  %v373 = vunpack.c.l.b16 %v317
  %v374 = vunpack.c.l.b16 %v318
  %v375 = vunpack.c.l.b16 %v319
  %v376 = vunpack.c.l.b16 %v320
  %v377 = vunpack.c.l.b16 %v321
  %v378 = vunpack.c.l.b16 %v322
  %v379 = vunpack.c.l.b16 %v323
  %v380 = vunpack.c.l.b16 %v324
  %v381 = vunpack.c.l.b16 %v325
  %v382 = vunpack.c.l.b16 %v326
  %v383 = vunpack.c.l.b16 %v327
  %v384 = vunpack.c.l.b16 %v328
  %v385 = vpack.c.b16 %v370, %v369
  %v386 = vpack.c.b16 %v372, %v371
  %v387 = vpack.c.b16 %v374, %v373
  %v388 = vpack.c.b16 %v376, %v375
  %v389 = vpack.c.b16 %v378, %v377
  %v390 = vpack.c.b16 %v380, %v379
  %v391 = vpack.c.b16 %v382, %v381
  %v392 = vpack.c.b16 %v384, %v383
  %401 = vmatprep.subr.bf16.mxu0 0
  %402 = vmatpush1.bf16.msra.mxu0 %v385
  %403 = vmatprep.subr.bf16.mxu0 0
  %404 = vmatpush1.bf16.msra.mxu0 %v386
  %405 = vmatprep.subr.bf16.mxu0 0
  %406 = vmatpush1.bf16.msra.mxu0 %v387
  %407 = vmatprep.subr.bf16.mxu0 0
  %408 = vmatpush1.bf16.msra.mxu0 %v388
  %409 = vmatprep.subr.bf16.mxu0 0
  %410 = vmatpush1.bf16.msra.mxu0 %v389
  %411 = vmatprep.subr.bf16.mxu0 0
  %412 = vmatpush1.bf16.msra.mxu0 %v390
  %413 = vmatprep.subr.bf16.mxu0 0
  %414 = vmatpush1.bf16.msra.mxu0 %v391
  %415 = vmatprep.subr.bf16.mxu0 0
  %416 = vmatpush1.bf16.msra.mxu0 %v392
  %417 = vmatprep.subr.bf16.mxu0 0
  %418 = vmatpush1.bf16.msra.mxu0 0
  %419 = vmatprep.subr.bf16.mxu0 0
  %420 = vmatpush1.bf16.msra.mxu0 0
  %421 = vmatprep.subr.bf16.mxu0 0
  %422 = vmatpush1.bf16.msra.mxu0 0
  %423 = vmatprep.subr.bf16.mxu0 0
  %424 = vmatpush1.bf16.msra.mxu0 0
  %425 = vmatprep.subr.bf16.mxu0 0
  %426 = vmatpush1.bf16.msra.mxu0 0
  %427 = vmatprep.subr.bf16.mxu0 0
  %428 = vmatpush1.bf16.msra.mxu0 0
  %429 = vmatprep.subr.bf16.mxu0 0
  %430 = vmatpush1.bf16.msra.mxu0 0
  %431 = vmatprep.subr.bf16.mxu0 0
  %432 = vmatpush1.bf16.msra.mxu0 0
  %433 = vmatprep.mubr.bf16.mxu0 0
  %434 = vmatmul.mubr.bf16.gmra.mrb[0].mxu0 %v345
  %v435 = vpop.f32.mrb[0].mxu0
  %v436 = vadd.f32 0.0, %v435
  %v437 = vpop.f32.mrb[0].mxu0
  %v438 = vpop.f32.mrb[0].mxu0
  %v439 = vadd.f32 0.0, %v438
  %v440 = vpop.f32.mrb[0].mxu0
  %441 = vmatprep.mubr.bf16.mxu0 0
  %442 = vmatmul.mubr.bf16.gmra.mrb[0].mxu0 %v346
  %v443 = vpop.f32.mrb[0].mxu0
  %v444 = vadd.f32 0.0, %v443
  %v445 = vpop.f32.mrb[0].mxu0
  %v446 = vpop.f32.mrb[0].mxu0
  %v447 = vadd.f32 0.0, %v446
  %v448 = vpop.f32.mrb[0].mxu0
  %449 = vmatprep.mubr.bf16.mxu0 0
  %450 = vmatmul.mubr.bf16.gmra.mrb[0].mxu0 %v347
  %v451 = vpop.f32.mrb[0].mxu0
  %v452 = vadd.f32 0.0, %v451
  %v453 = vpop.f32.mrb[0].mxu0
  %v454 = vpop.f32.mrb[0].mxu0
  %v455 = vadd.f32 0.0, %v454
  %v456 = vpop.f32.mrb[0].mxu0
  %457 = vmatprep.mubr.bf16.mxu0 0
  %458 = vmatmul.mubr.bf16.gmra.mrb[0].mxu0 %v348
  %v459 = vpop.f32.mrb[0].mxu0
  %v460 = vadd.f32 0.0, %v459
  %v461 = vpop.f32.mrb[0].mxu0
  %v462 = vpop.f32.mrb[0].mxu0
  %v463 = vadd.f32 0.0, %v462
  %v464 = vpop.f32.mrb[0].mxu0
  %465 = vdwg.mxu0
  %v466 = vadd.f32 %v275, %v436
  %v467 = vadd.f32 %v278, %v439
  %v468 = vadd.f32 %v283, %v444
  %v469 = vadd.f32 %v286, %v447
  %v470 = vadd.f32 %v291, %v452
  %v471 = vadd.f32 %v294, %v455
  %v472 = vadd.f32 %v299, %v460
  %v473 = vadd.f32 %v302, %v463
  %v474 = vld [vmem:[%s3] sm:$0xff]
  %v475 = vld [vmem:[%s3 + $0x8] sm:$0xff]
  %v476 = vld [vmem:[%s3 + $0x10] sm:$0xff]
  %v477 = vld [vmem:[%s3 + $0x18] sm:$0xff]
  %v478 = vld [vmem:[%s3 + $0x20] sm:$0xff]
  %v479 = vld [vmem:[%s3 + $0x28] sm:$0xff]
  %v480 = vld [vmem:[%s3 + $0x30] sm:$0xff]
  %v481 = vld [vmem:[%s3 + $0x38] sm:$0xff]
  %v482 = vld [vmem:[%s7] sm:$0xf]
  %v483 = vld [vmem:[%s7 + $0x4] sm:$0xf]
  %v484 = vld [vmem:[%s7 + $0x8] sm:$0xf]
  %v485 = vld [vmem:[%s7 + $0xc] sm:$0xf]
  %v486 = vld [vmem:[%s7 + $0x10] sm:$0xf]
  %v487 = vld [vmem:[%s7 + $0x14] sm:$0xf]
  %v488 = vld [vmem:[%s7 + $0x18] sm:$0xf]
  %v489 = vld [vmem:[%s7 + $0x1c] sm:$0xf]
  %v490 = vld [vmem:[%s7 + $0x20] sm:$0xf]
  %v491 = vld [vmem:[%s7 + $0x24] sm:$0xf]
  %v492 = vld [vmem:[%s7 + $0x28] sm:$0xf]
  %v493 = vld [vmem:[%s7 + $0x2c] sm:$0xf]
  %v494 = vld [vmem:[%s7 + $0x30] sm:$0xf]
  %v495 = vld [vmem:[%s7 + $0x34] sm:$0xf]
  %v496 = vld [vmem:[%s7 + $0x38] sm:$0xf]
  %v497 = vld [vmem:[%s7 + $0x3c] sm:$0xf]
  %v498 = vld [vmem:[%s7 + $0x40] sm:$0xf]
  %v499 = vld [vmem:[%s7 + $0x44] sm:$0xf]
  %v500 = vld [vmem:[%s7 + $0x48] sm:$0xf]
  %v501 = vld [vmem:[%s7 + $0x4c] sm:$0xf]
  %v502 = vld [vmem:[%s7 + $0x50] sm:$0xf]
  %v503 = vld [vmem:[%s7 + $0x54] sm:$0xf]
  %v504 = vld [vmem:[%s7 + $0x58] sm:$0xf]
  %v505 = vld [vmem:[%s7 + $0x5c] sm:$0xf]
  %v506 = vld [vmem:[%s7 + $0x60] sm:$0xf]
  %v507 = vld [vmem:[%s7 + $0x64] sm:$0xf]
  %v508 = vld [vmem:[%s7 + $0x68] sm:$0xf]
  %v509 = vld [vmem:[%s7 + $0x6c] sm:$0xf]
  %v510 = vld [vmem:[%s7 + $0x70] sm:$0xf]
  %v511 = vld [vmem:[%s7 + $0x74] sm:$0xf]
  %v512 = vld [vmem:[%s7 + $0x78] sm:$0xf]
  %v513 = vld [vmem:[%s7 + $0x7c] sm:$0xf]
  %v522 = vunpack.c.l.b16 %v474
  %v523 = vunpack.c.h.b16 %v474
  %v524 = vunpack.c.l.b16 %v475
  %v525 = vunpack.c.h.b16 %v475
  %v526 = vunpack.c.l.b16 %v476
  %v527 = vunpack.c.h.b16 %v476
  %v528 = vunpack.c.l.b16 %v477
  %v529 = vunpack.c.h.b16 %v477
  %v530 = vunpack.c.l.b16 %v478
  %v531 = vunpack.c.h.b16 %v478
  %v532 = vunpack.c.l.b16 %v479
  %v533 = vunpack.c.h.b16 %v479
  %v534 = vunpack.c.l.b16 %v480
  %v535 = vunpack.c.h.b16 %v480
  %v536 = vunpack.c.l.b16 %v481
  %v537 = vunpack.c.h.b16 %v481
  %v538 = vpack.c.b16 %v524, %v522
  %v539 = vpack.c.b16 %v525, %v523
  %v540 = vpack.c.b16 %v528, %v526
  %v541 = vpack.c.b16 %v529, %v527
  %v542 = vpack.c.b16 %v532, %v530
  %v543 = vpack.c.b16 %v533, %v531
  %v544 = vpack.c.b16 %v536, %v534
  %v545 = vpack.c.b16 %v537, %v535
  %v586 = vunpack.c.l.b16 %v482
  %v587 = vunpack.c.l.b16 %v483
  %v588 = vunpack.c.l.b16 %v484
  %v589 = vunpack.c.l.b16 %v485
  %v590 = vunpack.c.l.b16 %v486
  %v591 = vunpack.c.l.b16 %v487
  %v592 = vunpack.c.l.b16 %v488
  %v593 = vunpack.c.l.b16 %v489
  %v594 = vunpack.c.l.b16 %v490
  %v595 = vunpack.c.l.b16 %v491
  %v596 = vunpack.c.l.b16 %v492
  %v597 = vunpack.c.l.b16 %v493
  %v598 = vunpack.c.l.b16 %v494
  %v599 = vunpack.c.l.b16 %v495
  %v600 = vunpack.c.l.b16 %v496
  %v601 = vunpack.c.l.b16 %v497
  %v602 = vunpack.c.l.b16 %v498
  %v603 = vunpack.c.l.b16 %v499
  %v604 = vunpack.c.l.b16 %v500
  %v605 = vunpack.c.l.b16 %v501
  %v606 = vunpack.c.l.b16 %v502
  %v607 = vunpack.c.l.b16 %v503
  %v608 = vunpack.c.l.b16 %v504
  %v609 = vunpack.c.l.b16 %v505
  %v610 = vunpack.c.l.b16 %v506
  %v611 = vunpack.c.l.b16 %v507
  %v612 = vunpack.c.l.b16 %v508
  %v613 = vunpack.c.l.b16 %v509
  %v614 = vunpack.c.l.b16 %v510
  %v615 = vunpack.c.l.b16 %v511
  %v616 = vunpack.c.l.b16 %v512
  %v617 = vunpack.c.l.b16 %v513
  %v618 = vpack.c.b16 %v587, %v586
  %v619 = vpack.c.b16 %v589, %v588
  %v620 = vpack.c.b16 %v591, %v590
  %v621 = vpack.c.b16 %v593, %v592
  %v622 = vpack.c.b16 %v595, %v594
  %v623 = vpack.c.b16 %v597, %v596
  %v624 = vpack.c.b16 %v599, %v598
  %v625 = vpack.c.b16 %v601, %v600
  %v626 = vpack.c.b16 %v603, %v602
  %v627 = vpack.c.b16 %v605, %v604
  %v628 = vpack.c.b16 %v607, %v606
  %v629 = vpack.c.b16 %v609, %v608
  %v630 = vpack.c.b16 %v611, %v610
  %v631 = vpack.c.b16 %v613, %v612
  %v632 = vpack.c.b16 %v615, %v614
  %v633 = vpack.c.b16 %v617, %v616
  %650 = vmatprep.subr.bf16.mxu0 0
  %651 = vmatpush1.bf16.msra.mxu0 %v618
  %652 = vmatprep.subr.bf16.mxu0 0
  %653 = vmatpush1.bf16.msra.mxu0 %v619
  %654 = vmatprep.subr.bf16.mxu0 0
  %655 = vmatpush1.bf16.msra.mxu0 %v620
  %656 = vmatprep.subr.bf16.mxu0 0
  %657 = vmatpush1.bf16.msra.mxu0 %v621
  %658 = vmatprep.subr.bf16.mxu0 0
  %659 = vmatpush1.bf16.msra.mxu0 %v622
  %660 = vmatprep.subr.bf16.mxu0 0
  %661 = vmatpush1.bf16.msra.mxu0 %v623
  %662 = vmatprep.subr.bf16.mxu0 0
  %663 = vmatpush1.bf16.msra.mxu0 %v624
  %664 = vmatprep.subr.bf16.mxu0 0
  %665 = vmatpush1.bf16.msra.mxu0 %v625
  %666 = vmatprep.subr.bf16.mxu0 0
  %667 = vmatpush1.bf16.msra.mxu0 %v626
  %668 = vmatprep.subr.bf16.mxu0 0
  %669 = vmatpush1.bf16.msra.mxu0 %v627
  %670 = vmatprep.subr.bf16.mxu0 0
  %671 = vmatpush1.bf16.msra.mxu0 %v628
  %672 = vmatprep.subr.bf16.mxu0 0
  %673 = vmatpush1.bf16.msra.mxu0 %v629
  %674 = vmatprep.subr.bf16.mxu0 0
  %675 = vmatpush1.bf16.msra.mxu0 %v630
  %676 = vmatprep.subr.bf16.mxu0 0
  %677 = vmatpush1.bf16.msra.mxu0 %v631
  %678 = vmatprep.subr.bf16.mxu0 0
  %679 = vmatpush1.bf16.msra.mxu0 %v632
  %680 = vmatprep.subr.bf16.mxu0 0
  %681 = vmatpush1.bf16.msra.mxu0 %v633
  %682 = vmatprep.mubr.bf16.mxu0 %v539
  %683 = vmatmul.mubr.bf16.gmra.mrb[0].mxu0 %v538
  %v684 = vpop.f32.mrb[0].mxu0
  %v685 = vadd.f32 0.0, %v684
  %v686 = vpop.f32.mrb[0].mxu0
  %v687 = vpop.f32.mrb[0].mxu0
  %v688 = vadd.f32 0.0, %v687
  %v689 = vpop.f32.mrb[0].mxu0
  %690 = vmatprep.mubr.bf16.mxu0 %v541
  %691 = vmatmul.mubr.bf16.gmra.mrb[0].mxu0 %v540
  %v692 = vpop.f32.mrb[0].mxu0
  %v693 = vadd.f32 0.0, %v692
  %v694 = vpop.f32.mrb[0].mxu0
  %v695 = vpop.f32.mrb[0].mxu0
  %v696 = vadd.f32 0.0, %v695
  %v697 = vpop.f32.mrb[0].mxu0
  %698 = vmatprep.mubr.bf16.mxu0 %v543
  %699 = vmatmul.mubr.bf16.gmra.mrb[0].mxu0 %v542
  %v700 = vpop.f32.mrb[0].mxu0
  %v701 = vadd.f32 0.0, %v700
  %v702 = vpop.f32.mrb[0].mxu0
  %v703 = vpop.f32.mrb[0].mxu0
  %v704 = vadd.f32 0.0, %v703
  %v705 = vpop.f32.mrb[0].mxu0
  %706 = vmatprep.mubr.bf16.mxu0 %v545
  %707 = vmatmul.mubr.bf16.gmra.mrb[0].mxu0 %v544
  %v708 = vpop.f32.mrb[0].mxu0
  %v709 = vadd.f32 0.0, %v708
  %v710 = vpop.f32.mrb[0].mxu0
  %v711 = vpop.f32.mrb[0].mxu0
  %v712 = vadd.f32 0.0, %v711
  %v713 = vpop.f32.mrb[0].mxu0
  %714 = vdwg.mxu0
  %v715 = vadd.f32 %v466, %v685
  %v716 = vadd.f32 %v467, %v688
  %v717 = vadd.f32 %v468, %v693
  %v718 = vadd.f32 %v469, %v696
  %v719 = vadd.f32 %v470, %v701
  %v720 = vadd.f32 %v471, %v704
  %v721 = vadd.f32 %v472, %v709
  %v722 = vadd.f32 %v473, %v712
  %v723 = vmax.f32 %v715, %v717
  %v724 = vmax.f32 %v716, %v718
  %v725 = vmax.f32 %v723, %v719
  %v726 = vmax.f32 %v724, %v720
  %v727 = vmax.f32 %v725, %v721
  %v728 = vmax.f32 %v726, %v722
  %v729 = vtanh.pop %v727
  %v730 = vtanh.pop %v728
  %v731 = vpack.c.bf16 %v730, %v729
  %v733 = vunpack.c.l.b16 %v731
  %v734 = vunpack.c.h.b16 %v731
  %v735 = vpack.c.b16 %v733, %v733
  %v736 = vpack.c.b16 %v734, %v734
  %vm739 = vcmask 257024
  %740 = vst.msk [vmem:[%s8] sm:$0xf] %vm739, %v735
  %741 = vst.msk [vmem:[%s8 + $0x4] sm:$0xf] %vm739, %v736
  // Predicated region
  $region34: #{encoder_forward.15} parent=0 // pred_check
    _
  $region35: #{encoder_forward.15} parent=0 // pred_check_branch
    %743 = sbr.rel (0) target = $region37
  $region36: #{encoder_forward.15} parent=0 // pred_region
    _
  $region37: #{encoder_forward.15} parent=0 // pred_fallthru
    _
  // Predicated region
  $region38: #{encoder_forward.15} parent=0 // pred_check
    _
  $region39: #{encoder_forward.15} parent=0 // pred_check_branch
    %745 = sbr.rel (0) target = $region41
  $region40: #{encoder_forward.15} parent=0 // pred_region
    _
  $region41: #{encoder_forward.15} parent=0 // pred_fallthru
    _

</llo_original>
